<compile_context>
chip_gen: v7x
topology: tpu7x:2x2x1
jax: 0.10.0
libtpu: 0.0.40
codegen_flags: <defaults>
</compile_context>

<pallas_src>
import jax
import jax.numpy as jnp
from jax.experimental import pallas as pl
from jax.experimental.pallas import tpu as pltpu


HEAD_PAD = 128        # lane-dense padding for the 1-wide critic head output
MAX_TILE_ROWS = 2048  # cap on rows per grid step (keeps scratch << VMEM limit)
SUBLANE = 16          # batch padding granularity (bf16 sublane packing)


# ----------------------------------------------------------------------------
# Synthetic "open chain" (external dependency of the PyTorch module).
# ----------------------------------------------------------------------------
class SyntheticOpenChain:
    def __init__(self, dof, key):
        self._dof = dof
        self._jac = 0.1 * jax.random.normal(key, (dof, 6), dtype=jnp.float32)

    def dof(self):
        return self._dof

    def compute_pose_and_error_pose(self, thetas, target_pose):
        pose = thetas @ self._jac                     # (B, 6)
        error_pose = target_pose - pose               # (B, 6)
        return pose, error_pose


def compute_manifold_error(open_chain, thetas, target_pose):
    """JAX glue mirroring the PyTorch compute_manifold_error."""
    pose, error_pose = open_chain.compute_pose_and_error_pose(thetas, target_pose)
    return jnp.concatenate(
        [
            pose[:, :3],
            jnp.cos(pose[:, 3:]),
            jnp.sin(pose[:, 3:]),
            error_pose[:, :3],
            jnp.cos(error_pose[:, 3:]),
            jnp.sin(error_pose[:, 3:]),
            jnp.cos(thetas),
            jnp.sin(thetas),
        ],
        axis=1,
    )  # (B, 18 + 2*dof)


# ----------------------------------------------------------------------------
# Hardware-adaptive choices (all safe fallbacks).
# ----------------------------------------------------------------------------
def _device_kind():
    try:
        return jax.devices()[0].device_kind.lower()
    except Exception:
        return ""


def _num_tensorcores():
    """Grid steps per chip: 2 TCs on v7x, otherwise 1 (v5e/v6e single TC)."""
    kind = _device_kind()
    try:
        n = getattr(jax.devices()[0], "num_cores", None)
        if n:
            return max(1, min(int(n), 4))
    except Exception:
        pass
    return 2 if "v7" in kind else 1


def _pick_tanh_dtype():
    """bf16 tanh where the EUP supports it (v6e/v7x); f32 elsewhere (v5e)."""
    kind = _device_kind()
    if "v6" in kind or "v7" in kind:
        return jnp.bfloat16
    return jnp.float32


# ----------------------------------------------------------------------------
# Pallas kernel: fc1..fc6 (tanh + skip-concat via split weights, biases folded)
# + critic head.
# ----------------------------------------------------------------------------
def make_critic_kernel(tanh_dtype):
    def critic_kernel(me_ref, w1_ref, wm_ref,
                      w2h_ref, w3h_ref, w4h_ref, w5h_ref, w6h_ref, wch_ref,
                      out_ref, me_proj_ref):
        W = w1_ref.shape[1]
        me = me_ref[...].astype(jnp.bfloat16)                   # (TB, M+1)

        # All loop-invariant manifold_error projections (layers 2..6 + critic
        # head, biases folded into the last contraction row) collapsed into
        # ONE matmul off the serial layer chain, materialized into explicit
        # VMEM scratch so the (TB, 5*W+128) f32 slab never sits in vregs
        # across the tanh chain.
        me_proj_ref[...] = jnp.dot(me, wm_ref[...],
                                   preferred_element_type=jnp.float32)

        # fc1 (b1 folded as last row of w1 via the constant-1 column of me).
        h = jnp.tanh(
            jnp.dot(me, w1_ref[...],
                    preferred_element_type=jnp.float32).astype(tanh_dtype))

        # fc2..fc6: cat([h, me]) @ W == h @ W_h + me @ [W_m; b]  (hoisted).
        for k, wh_ref in enumerate((w2h_ref, w3h_ref, w4h_ref, w5h_ref, w6h_ref)):
            pre = (jnp.dot(h.astype(jnp.bfloat16), wh_ref[...],
                           preferred_element_type=jnp.float32)
                   + me_proj_ref[:, k * W:(k + 1) * W])
            h = jnp.tanh(pre.astype(tanh_dtype))

        # Critic head, padded to 128 lanes (only column 0 is real output):
        # quality = -relu(cat([h, me]) @ Wc + bc)
        logits = (jnp.dot(h.astype(jnp.bfloat16), wch_ref[...],
                          preferred_element_type=jnp.float32)
                  + me_proj_ref[:, 5 * W:5 * W + HEAD_PAD])      # (TB, 128)
        out_ref[...] = -jnp.maximum(logits, 0.0)

    return critic_kernel


# ----------------------------------------------------------------------------
# Parameter packing: bf16 weights, hoisted me-projection slab with folded
# biases, padded head.
# ----------------------------------------------------------------------------
def pack_params(p):
    M, W = p["w1"].shape
    bf = lambda x: x.astype(jnp.bfloat16)

    # fc1: fold b1 as an extra contraction row (hit by the constant-1 column).
    w1_aug = jnp.concatenate([p["w1"], p["b1"]], axis=0)          # (M+1, W)

    # Hoisted me-projections for fc2..fc6 + critic head; each layer's bias is
    # the last row of its slab.  Head slab (cols 5W..5W+127): only column 5W
    # is populated (wcm / bc); columns 5W+1.. stay exactly zero.
    wm_all = jnp.zeros((M + 1, 5 * W + HEAD_PAD), jnp.float32)
    for k in range(5):
        wm_all = wm_all.at[:M, k * W:(k + 1) * W].set(p[f"w{k + 2}m"])
        wm_all = wm_all.at[M:, k * W:(k + 1) * W].set(p[f"b{k + 2}"])
    wm_all = wm_all.at[:M, 5 * W:5 * W + 1].set(p["wcm"])
    wm_all = wm_all.at[M:, 5 * W:5 * W + 1].set(p["bc"])

    wch_pad = jnp.zeros((W, HEAD_PAD), jnp.float32).at[:, 0:1].set(p["wch"])

    return dict(
        w1=bf(w1_aug), wm_all=bf(wm_all),
        w2h=bf(p["w2h"]), w3h=bf(p["w3h"]), w4h=bf(p["w4h"]),
        w5h=bf(p["w5h"]), w6h=bf(p["w6h"]),
        wch=bf(wch_pad),
    )


def critic_forward_pallas(manifold_error, packed, *, num_tiles=1,
                          tanh_dtype=jnp.float32,
                          max_tile_rows=MAX_TILE_ROWS):
    B, M = manifold_error.shape
    Maug, W = packed["w1"].shape           # (M+1, 128)
    assert Maug == M + 1

    # Adaptive batch tiling: one maximal tile per TensorCore, capped at
    # max_tile_rows; pad the batch only to the nearest sublane-aligned
    # multiple of the step count (no fixed-256 over-padding).
    steps = max(num_tiles, pl.cdiv(B, max_tile_rows))
    steps = pl.cdiv(steps, num_tiles) * num_tiles
    align = steps * SUBLANE
    B_pad = pl.cdiv(B, align) * align
    TB = B_pad // steps

    # Append the constant-1 bias column (M -> M+1), then pad the batch.
    me_aug = jnp.concatenate(
        [manifold_error, jnp.ones((B, 1), manifold_error.dtype)], axis=1)
    if B_pad != B:
        me_aug = jnp.pad(me_aug, ((0, B_pad - B), (0, 0)))

    args = [
        me_aug,
        packed["w1"], packed["wm_all"],
        packed["w2h"], packed["w3h"], packed["w4h"], packed["w5h"],
        packed["w6h"], packed["wch"],
    ]

    def resident(x):
        # Constant block index -> Pallas keeps the array resident in VMEM
        # across the batch grid (no re-DMA of weights).
        return pl.BlockSpec(x.shape, lambda i: (0,) * x.ndim)

    in_specs = ([pl.BlockSpec((TB, Maug), lambda i: (i, 0))]
                + [resident(a) for a in args[1:]])

    flops = 2 * B_pad * (Maug * W + Maug * (5 * W + HEAD_PAD)
                         + 5 * W * W + W * HEAD_PAD)
    transcendentals = 6 * B_pad * W
    weight_bytes = sum(int(a.size) * a.dtype.itemsize for a in args[1:])
    bytes_accessed = weight_bytes + B_pad * (Maug + HEAD_PAD) * 4

    out = pl.pallas_call(
        make_critic_kernel(tanh_dtype),
        out_shape=jax.ShapeDtypeStruct((B_pad, HEAD_PAD), jnp.float32),
        grid=(steps,),
        in_specs=in_specs,
        out_specs=pl.BlockSpec((TB, HEAD_PAD), lambda i: (i, 0)),
        scratch_shapes=[pltpu.VMEM((TB, 5 * W + HEAD_PAD), jnp.float32)],
        compiler_params=pltpu.CompilerParams(
            dimension_semantics=("parallel",)),
        cost_estimate=pl.CostEstimate(
            flops=flops, transcendentals=transcendentals,
            bytes_accessed=bytes_accessed),
    )(*args)
    return out[:B, :1]


# ----------------------------------------------------------------------------
# Pure-JAX reference (identical bf16-weight / bf16-bias / f32-accum math, same
# tanh dtype as the kernel).
# ----------------------------------------------------------------------------
def critic_forward_ref(me, p, tanh_dtype=jnp.float32):
    bf = lambda x: x.astype(jnp.bfloat16)
    qb = lambda b: b.astype(jnp.bfloat16).astype(jnp.float32)  # folded bias quant
    me_bf = bf(me)
    h = jnp.tanh((jnp.dot(me_bf, bf(p["w1"]),
                          preferred_element_type=jnp.float32)
                  + qb(p["b1"])).astype(tanh_dtype))
    for k in (2, 3, 4, 5, 6):
        h = jnp.tanh(
            (jnp.dot(bf(h), bf(p[f"w{k}h"]), preferred_element_type=jnp.float32)
             + jnp.dot(me_bf, bf(p[f"w{k}m"]), preferred_element_type=jnp.float32)
             + qb(p[f"b{k}"])).astype(tanh_dtype))
    logits = (jnp.dot(bf(h), bf(p["wch"]), preferred_element_type=jnp.float32)
              + jnp.dot(me_bf, bf(p["wcm"]), preferred_element_type=jnp.float32)
              + qb(p["bc"]))
    return -jnp.maximum(logits, 0.0)


# ----------------------------------------------------------------------------
# Deterministic parameter construction.
# NOTE: the PyTorch fc_init uses uniform(-1e-10, 1e-10) weights / zero bias,
# which is numerically degenerate; we keep the exact layer shapes but use a
# small deterministic uniform scale (weights AND biases) so the kernel
# exercises real math, including the bias-folding path.
# ----------------------------------------------------------------------------
def init_params(key, on_manifold_count, weights):
    M, W = on_manifold_count, weights
    scale = 0.05

    def u(k, shape):
        return jax.random.uniform(k, shape, jnp.float32, -scale, scale)

    keys = jax.random.split(key, 20)
    p = {
        "w1": u(keys[0], (M, W)), "b1": u(keys[1], (1, W)),
        "wch": u(keys[2], (W, 1)), "wcm": u(keys[3], (M, 1)),
        "bc": u(keys[4], (1, 1)),
    }
    ki = 5
    for k in (2, 3, 4, 5, 6):
        p[f"w{k}h"] = u(keys[ki], (W, W)); ki += 1
        p[f"w{k}m"] = u(keys[ki], (M, W)); ki += 1
        p[f"b{k}"] = u(keys[ki], (1, W)); ki += 1
    return p


if __name__ == "__main__":
    B = 300        # batch (exercises adaptive, non-power-of-2 tile + padding)
    DOF = 6        # open-chain degrees of freedom
    WEIGHTS = 128  # hidden width (module default)

    key = jax.random.PRNGKey(0)
    k_jac, k_th, k_tp, k_p = jax.random.split(key, 4)

    open_chain = SyntheticOpenChain(DOF, k_jac)
    on_manifold_count = 18 + 2 * open_chain.dof()  # 30

    thetas = jax.random.normal(k_th, (B, DOF), dtype=jnp.float32)
    target_pose = jax.random.normal(k_tp, (B, 6), dtype=jnp.float32)

    params = init_params(k_p, on_manifold_count, WEIGHTS)
    packed = pack_params(params)

    num_tiles = _num_tensorcores()   # 1 on v5e/v6e (grid=1), 2 on v7x (parallel)
    tanh_dtype = _pick_tanh_dtype()  # bf16 on v6e/v7x, f32 on v5e/others

    # Fuse the manifold-error prep and the Pallas call into one jit.
    @jax.jit
    def forward(thetas, target_pose):
        me = compute_manifold_error(open_chain, thetas, target_pose)
        return critic_forward_pallas(me, packed, num_tiles=num_tiles,
                                     tanh_dtype=tanh_dtype)

    quality = jax.block_until_ready(forward(thetas, target_pose))

    me = compute_manifold_error(open_chain, thetas, target_pose)
    quality_ref = critic_forward_ref(me, params, tanh_dtype)

    assert quality.shape == (B, 1)
    tol = 1e-4 if tanh_dtype == jnp.float32 else 5e-2
    max_err = float(jnp.max(jnp.abs(quality - quality_ref)))
    assert jnp.allclose(quality, quality_ref, atol=tol, rtol=tol), max_err

    print("KERNEL_OK")
</pallas_src>

<mosaic_0001>
module attributes {stable_mosaic.version = 11 : i64} {
  func.func @critic_kernel(%arg0: i32, %arg1: memref<304x31xf32, #tpu.memory_space<vmem>>, %arg2: memref<31x128xbf16, #tpu.memory_space<vmem>>, %arg3: memref<31x768xbf16, #tpu.memory_space<vmem>>, %arg4: memref<128x128xbf16, #tpu.memory_space<vmem>>, %arg5: memref<128x128xbf16, #tpu.memory_space<vmem>>, %arg6: memref<128x128xbf16, #tpu.memory_space<vmem>>, %arg7: memref<128x128xbf16, #tpu.memory_space<vmem>>, %arg8: memref<128x128xbf16, #tpu.memory_space<vmem>>, %arg9: memref<128x128xbf16, #tpu.memory_space<vmem>>, %arg10: memref<304x128xf32, #tpu.memory_space<vmem>>, %arg11: memref<304x768xf32, #tpu.memory_space<vmem>>) attributes {dimension_semantics = [#tpu.dimension_semantics<parallel>], iteration_bounds = array<i64: 1>, scalar_prefetch = 0 : i64, scratch_operands = 1 : i64, tpu.core_type = #tpu.core_type<tc>, window_params = [{transform_indices = @transform_0, window_bounds = array<i64: 304, 31>}, {pipeline_mode = #tpu.pipeline_mode<synchronous>, transform_indices = @transform_1, window_bounds = array<i64: 31, 128>}, {pipeline_mode = #tpu.pipeline_mode<synchronous>, transform_indices = @transform_2, window_bounds = array<i64: 31, 768>}, {pipeline_mode = #tpu.pipeline_mode<synchronous>, transform_indices = @transform_3, window_bounds = array<i64: 128, 128>}, {pipeline_mode = #tpu.pipeline_mode<synchronous>, transform_indices = @transform_4, window_bounds = array<i64: 128, 128>}, {pipeline_mode = #tpu.pipeline_mode<synchronous>, transform_indices = @transform_5, window_bounds = array<i64: 128, 128>}, {pipeline_mode = #tpu.pipeline_mode<synchronous>, transform_indices = @transform_6, window_bounds = array<i64: 128, 128>}, {pipeline_mode = #tpu.pipeline_mode<synchronous>, transform_indices = @transform_7, window_bounds = array<i64: 128, 128>}, {pipeline_mode = #tpu.pipeline_mode<synchronous>, transform_indices = @transform_8, window_bounds = array<i64: 128, 128>}, {transform_indices = @transform_9, window_bounds = array<i64: 304, 128>}]} {
    %c0 = arith.constant 0 : index
    %c0_0 = arith.constant 0 : index
    %0 = vector.load %arg1[%c0, %c0_0] : memref<304x31xf32, #tpu.memory_space<vmem>>, vector<304x31xf32>
    %1 = arith.truncf %0 : vector<304x31xf32> to vector<304x31xbf16>
    %c0_1 = arith.constant 0 : index
    %c0_2 = arith.constant 0 : index
    %2 = vector.load %arg3[%c0_1, %c0_2] : memref<31x768xbf16, #tpu.memory_space<vmem>>, vector<31x768xbf16>
    %cst = arith.constant dense<0.000000e+00> : vector<304x768xf32>
    %3 = tpu.matmul %1, %2, %cst {dimension_numbers = #tpu.dot_dimension_numbers<[1], [0], [0], [1], [0, 0, 1, 1], [], []>} : vector<304x31xbf16>, vector<31x768xbf16>, vector<304x768xf32> -> vector<304x768xf32>
    %c0_3 = arith.constant 0 : index
    %c0_4 = arith.constant 0 : index
    %4 = vector.load %arg11[%c0_3, %c0_4] : memref<304x768xf32, #tpu.memory_space<vmem>>, vector<304x768xf32>
    tpu.vector_store %arg11[%c0_3, %c0_4], %3 {strides = array<i32>} : memref<304x768xf32, #tpu.memory_space<vmem>>, vector<304x768xf32>,
    %c0_5 = arith.constant 0 : index
    %c0_6 = arith.constant 0 : index
    %5 = vector.load %arg2[%c0_5, %c0_6] : memref<31x128xbf16, #tpu.memory_space<vmem>>, vector<31x128xbf16>
    %cst_7 = arith.constant dense<0.000000e+00> : vector<304x128xf32>
    %6 = tpu.matmul %1, %5, %cst_7 {dimension_numbers = #tpu.dot_dimension_numbers<[1], [0], [0], [1], [0, 0, 1, 1], [], []>} : vector<304x31xbf16>, vector<31x128xbf16>, vector<304x128xf32> -> vector<304x128xf32>
    %7 = math.tanh %6 : vector<304x128xf32>
    %8 = arith.truncf %7 : vector<304x128xf32> to vector<304x128xbf16>
    %c0_8 = arith.constant 0 : index
    %c0_9 = arith.constant 0 : index
    %9 = vector.load %arg4[%c0_8, %c0_9] : memref<128x128xbf16, #tpu.memory_space<vmem>>, vector<128x128xbf16>
    %cst_10 = arith.constant dense<0.000000e+00> : vector<304x128xf32>
    %10 = tpu.matmul %8, %9, %cst_10 {dimension_numbers = #tpu.dot_dimension_numbers<[1], [0], [0], [1], [0, 0, 1, 1], [], []>} : vector<304x128xbf16>, vector<128x128xbf16>, vector<304x128xf32> -> vector<304x128xf32>
    %c0_11 = arith.constant 0 : index
    %c0_12 = arith.constant 0 : index
    %11 = vector.load %arg11[%c0_11, %c0_12] : memref<304x768xf32, #tpu.memory_space<vmem>>, vector<304x128xf32>
    %12 = arith.addf %10, %11 : vector<304x128xf32>
    %13 = math.tanh %12 : vector<304x128xf32>
    %14 = arith.truncf %13 : vector<304x128xf32> to vector<304x128xbf16>
    %c0_13 = arith.constant 0 : index
    %c0_14 = arith.constant 0 : index
    %15 = vector.load %arg5[%c0_13, %c0_14] : memref<128x128xbf16, #tpu.memory_space<vmem>>, vector<128x128xbf16>
    %cst_15 = arith.constant dense<0.000000e+00> : vector<304x128xf32>
    %16 = tpu.matmul %14, %15, %cst_15 {dimension_numbers = #tpu.dot_dimension_numbers<[1], [0], [0], [1], [0, 0, 1, 1], [], []>} : vector<304x128xbf16>, vector<128x128xbf16>, vector<304x128xf32> -> vector<304x128xf32>
    %c0_16 = arith.constant 0 : index
    %c128 = arith.constant 128 : index
    %17 = vector.load %arg11[%c0_16, %c128] : memref<304x768xf32, #tpu.memory_space<vmem>>, vector<304x128xf32>
    %18 = arith.addf %16, %17 : vector<304x128xf32>
    %19 = math.tanh %18 : vector<304x128xf32>
    %20 = arith.truncf %19 : vector<304x128xf32> to vector<304x128xbf16>
    %c0_17 = arith.constant 0 : index
    %c0_18 = arith.constant 0 : index
    %21 = vector.load %arg6[%c0_17, %c0_18] : memref<128x128xbf16, #tpu.memory_space<vmem>>, vector<128x128xbf16>
    %cst_19 = arith.constant dense<0.000000e+00> : vector<304x128xf32>
    %22 = tpu.matmul %20, %21, %cst_19 {dimension_numbers = #tpu.dot_dimension_numbers<[1], [0], [0], [1], [0, 0, 1, 1], [], []>} : vector<304x128xbf16>, vector<128x128xbf16>, vector<304x128xf32> -> vector<304x128xf32>
    %c0_20 = arith.constant 0 : index
    %c256 = arith.constant 256 : index
    %23 = vector.load %arg11[%c0_20, %c256] : memref<304x768xf32, #tpu.memory_space<vmem>>, vector<304x128xf32>
    %24 = arith.addf %22, %23 : vector<304x128xf32>
    %25 = math.tanh %24 : vector<304x128xf32>
    %26 = arith.truncf %25 : vector<304x128xf32> to vector<304x128xbf16>
    %c0_21 = arith.constant 0 : index
    %c0_22 = arith.constant 0 : index
    %27 = vector.load %arg7[%c0_21, %c0_22] : memref<128x128xbf16, #tpu.memory_space<vmem>>, vector<128x128xbf16>
    %cst_23 = arith.constant dense<0.000000e+00> : vector<304x128xf32>
    %28 = tpu.matmul %26, %27, %cst_23 {dimension_numbers = #tpu.dot_dimension_numbers<[1], [0], [0], [1], [0, 0, 1, 1], [], []>} : vector<304x128xbf16>, vector<128x128xbf16>, vector<304x128xf32> -> vector<304x128xf32>
    %c0_24 = arith.constant 0 : index
    %c384 = arith.constant 384 : index
    %29 = vector.load %arg11[%c0_24, %c384] : memref<304x768xf32, #tpu.memory_space<vmem>>, vector<304x128xf32>
    %30 = arith.addf %28, %29 : vector<304x128xf32>
    %31 = math.tanh %30 : vector<304x128xf32>
    %32 = arith.truncf %31 : vector<304x128xf32> to vector<304x128xbf16>
    %c0_25 = arith.constant 0 : index
    %c0_26 = arith.constant 0 : index
    %33 = vector.load %arg8[%c0_25, %c0_26] : memref<128x128xbf16, #tpu.memory_space<vmem>>, vector<128x128xbf16>
    %cst_27 = arith.constant dense<0.000000e+00> : vector<304x128xf32>
    %34 = tpu.matmul %32, %33, %cst_27 {dimension_numbers = #tpu.dot_dimension_numbers<[1], [0], [0], [1], [0, 0, 1, 1], [], []>} : vector<304x128xbf16>, vector<128x128xbf16>, vector<304x128xf32> -> vector<304x128xf32>
    %c0_28 = arith.constant 0 : index
    %c512 = arith.constant 512 : index
    %35 = vector.load %arg11[%c0_28, %c512] : memref<304x768xf32, #tpu.memory_space<vmem>>, vector<304x128xf32>
    %36 = arith.addf %34, %35 : vector<304x128xf32>
    %37 = math.tanh %36 : vector<304x128xf32>
    %38 = arith.truncf %37 : vector<304x128xf32> to vector<304x128xbf16>
    %c0_29 = arith.constant 0 : index
    %c0_30 = arith.constant 0 : index
    %39 = vector.load %arg9[%c0_29, %c0_30] : memref<128x128xbf16, #tpu.memory_space<vmem>>, vector<128x128xbf16>
    %cst_31 = arith.constant dense<0.000000e+00> : vector<304x128xf32>
    %40 = tpu.matmul %38, %39, %cst_31 {dimension_numbers = #tpu.dot_dimension_numbers<[1], [0], [0], [1], [0, 0, 1, 1], [], []>} : vector<304x128xbf16>, vector<128x128xbf16>, vector<304x128xf32> -> vector<304x128xf32>
    %c0_32 = arith.constant 0 : index
    %c640 = arith.constant 640 : index
    %41 = vector.load %arg11[%c0_32, %c640] : memref<304x768xf32, #tpu.memory_space<vmem>>, vector<304x128xf32>
    %42 = arith.addf %40, %41 : vector<304x128xf32>
    %cst_33 = arith.constant 0.000000e+00 : f32
    %43 = vector.broadcast %cst_33 : f32 to vector<304x128xf32>
    %44 = arith.maximumf %42, %43 : vector<304x128xf32>
    %cst_34 = arith.constant 0.000000e+00 : f32
    %45 = vector.broadcast %cst_34 : f32 to vector<304x128xf32>
    %46 = arith.subf %45, %44 : vector<304x128xf32>
    %c0_35 = arith.constant 0 : index
    %c0_36 = arith.constant 0 : index
    %47 = vector.load %arg10[%c0_35, %c0_36] : memref<304x128xf32, #tpu.memory_space<vmem>>, vector<304x128xf32>
    tpu.vector_store %arg10[%c0_35, %c0_36], %46 {strides = array<i32>} : memref<304x128xf32, #tpu.memory_space<vmem>>, vector<304x128xf32>,
    return
  }
  func.func @transform_0(%arg0: i32) -> (i32, i32) {
    %c0_i32 = arith.constant 0 : i32
    %c0_i32_0 = arith.constant 0 : i32
    return %arg0, %c0_i32 : i32, i32
  }
  func.func @transform_1(%arg0: i32) -> (i32, i32) {
    %c0_i32 = arith.constant 0 : i32
    %c0_i32_0 = arith.constant 0 : i32
    %c0_i32_1 = arith.constant 0 : i32
    return %c0_i32, %c0_i32_0 : i32, i32
  }
  func.func @transform_2(%arg0: i32) -> (i32, i32) {
    %c0_i32 = arith.constant 0 : i32
    %c0_i32_0 = arith.constant 0 : i32
    %c0_i32_1 = arith.constant 0 : i32
    return %c0_i32, %c0_i32_0 : i32, i32
  }
  func.func @transform_3(%arg0: i32) -> (i32, i32) {
    %c0_i32 = arith.constant 0 : i32
    %c0_i32_0 = arith.constant 0 : i32
    %c0_i32_1 = arith.constant 0 : i32
    return %c0_i32, %c0_i32_0 : i32, i32
  }
  func.func @transform_4(%arg0: i32) -> (i32, i32) {
    %c0_i32 = arith.constant 0 : i32
    %c0_i32_0 = arith.constant 0 : i32
    %c0_i32_1 = arith.constant 0 : i32
    return %c0_i32, %c0_i32_0 : i32, i32
  }
  func.func @transform_5(%arg0: i32) -> (i32, i32) {
    %c0_i32 = arith.constant 0 : i32
    %c0_i32_0 = arith.constant 0 : i32
    %c0_i32_1 = arith.constant 0 : i32
    return %c0_i32, %c0_i32_0 : i32, i32
  }
  func.func @transform_6(%arg0: i32) -> (i32, i32) {
    %c0_i32 = arith.constant 0 : i32
    %c0_i32_0 = arith.constant 0 : i32
    %c0_i32_1 = arith.constant 0 : i32
    return %c0_i32, %c0_i32_0 : i32, i32
  }
  func.func @transform_7(%arg0: i32) -> (i32, i32) {
    %c0_i32 = arith.constant 0 : i32
    %c0_i32_0 = arith.constant 0 : i32
    %c0_i32_1 = arith.constant 0 : i32
    return %c0_i32, %c0_i32_0 : i32, i32
  }
  func.func @transform_8(%arg0: i32) -> (i32, i32) {
    %c0_i32 = arith.constant 0 : i32
    %c0_i32_0 = arith.constant 0 : i32
    %c0_i32_1 = arith.constant 0 : i32
    return %c0_i32, %c0_i32_0 : i32, i32
  }
  func.func @transform_9(%arg0: i32) -> (i32, i32) {
    %c0_i32 = arith.constant 0 : i32
    %c0_i32_0 = arith.constant 0 : i32
    return %arg0, %c0_i32 : i32, i32
  }
}

</mosaic_0001>

<llo_original>
// kernel: forward.1
$region0: #{forward.1}
  #allocation0 [shape = 'u32[]', space=smem, size = 0x4, offset = 0x4, fixed_abs, tag = 'smem constant byte address 0x4 - core index']
  #allocation1 [shape = 'u32[144,128]{1,0:T(1,128)}', space=vmem, size = 0x12000, scoped, tag = 'internal scratch']
  #allocation2 [shape = 'f32[304,768]{1,0:T(8,128)}', space=vmem, size = 0xe4000, scoped, tag = 'scratch operand']
  %s0 = inlined_call_operand.vmem [shape: f32[304,31], index: 0, kind: input, shape index: {}]
  %s1 = inlined_call_operand.vmem [shape: bf16[31,128], index: 1, kind: input, shape index: {}]
  %s2 = inlined_call_operand.vmem [shape: bf16[31,768], index: 2, kind: input, shape index: {}]
  %s3 = inlined_call_operand.vmem [shape: bf16[128,128], index: 3, kind: input, shape index: {}]
  %s4 = inlined_call_operand.vmem [shape: bf16[128,128], index: 4, kind: input, shape index: {}]
  %s5 = inlined_call_operand.vmem [shape: bf16[128,128], index: 5, kind: input, shape index: {}]
  %s6 = inlined_call_operand.vmem [shape: bf16[128,128], index: 6, kind: input, shape index: {}]
  %s7 = inlined_call_operand.vmem [shape: bf16[128,128], index: 7, kind: input, shape index: {}]
  %s8 = inlined_call_operand.vmem [shape: bf16[128,128], index: 8, kind: input, shape index: {}]
  %s9 = inlined_call_operand.vmem [shape: f32[304,128], index: 9, kind: output, shape index: {}]
  %s10 = sld [smem:[#allocation0]]
  $region46: #{forward.1} parent=0
    _
  %s12 = ssub.s32 1, %s10
  %s13 = scalar_select 0, %s12, %s10
  // Predicated region
  $region2: #{forward.1} parent=0 // pred_check
    _
  $region3: #{forward.1} parent=0 // pred_check_branch
    %15 = sbr.rel (0) target = $region5
  $region4: #{forward.1} parent=0 // pred_region
    _
  $region5: #{forward.1} parent=0 // pred_fallthru
    _
  // Predicated region
  $region6: #{forward.1} parent=0 // pred_check
    _
  $region7: #{forward.1} parent=0 // pred_check_branch
    %17 = sbr.rel (0) target = $region9
  $region8: #{forward.1} parent=0 // pred_region
    _
  $region9: #{forward.1} parent=0 // pred_fallthru
    _
  // Predicated region
  $region10: #{forward.1} parent=0 // pred_check
    _
  $region11: #{forward.1} parent=0 // pred_check_branch
    %19 = sbr.rel (0) target = $region13
  $region12: #{forward.1} parent=0 // pred_region
    _
  $region13: #{forward.1} parent=0 // pred_fallthru
    _
  // Predicated region
  $region14: #{forward.1} parent=0 // pred_check
    _
  $region15: #{forward.1} parent=0 // pred_check_branch
    %21 = sbr.rel (0) target = $region17
  $region16: #{forward.1} parent=0 // pred_region
    _
  $region17: #{forward.1} parent=0 // pred_fallthru
    _
  // Predicated region
  $region18: #{forward.1} parent=0 // pred_check
    _
  $region19: #{forward.1} parent=0 // pred_check_branch
    %23 = sbr.rel (0) target = $region21
  $region20: #{forward.1} parent=0 // pred_region
    _
  $region21: #{forward.1} parent=0 // pred_fallthru
    _
  // Predicated region
  $region22: #{forward.1} parent=0 // pred_check
    _
  $region23: #{forward.1} parent=0 // pred_check_branch
    %25 = sbr.rel (0) target = $region25
  $region24: #{forward.1} parent=0 // pred_region
    _
  $region25: #{forward.1} parent=0 // pred_fallthru
    _
  // Predicated region
  $region26: #{forward.1} parent=0 // pred_check
    _
  $region27: #{forward.1} parent=0 // pred_check_branch
    %27 = sbr.rel (0) target = $region29
  $region28: #{forward.1} parent=0 // pred_region
    _
  $region29: #{forward.1} parent=0 // pred_fallthru
    _
  // Predicated region
  $region30: #{forward.1} parent=0 // pred_check
    _
  $region31: #{forward.1} parent=0 // pred_check_branch
    %29 = sbr.rel (0) target = $region33
  $region32: #{forward.1} parent=0 // pred_region
    _
  $region33: #{forward.1} parent=0 // pred_fallthru
    _
  // Predicated region
  $region34: #{forward.1} parent=0 // pred_check
    _
  $region35: #{forward.1} parent=0 // pred_check_branch
    %31 = sbr.rel (0) target = $region37
  $region36: #{forward.1} parent=0 // pred_region
    _
  $region37: #{forward.1} parent=0 // pred_fallthru
    _
  %v33 = vld [vmem:[%s0] sm:$0xff]
  %v34 = vld [vmem:[%s0 + $0x8] sm:$0xff]
  %v35 = vld [vmem:[%s0 + $0x10] sm:$0xff]
  %v36 = vld [vmem:[%s0 + $0x18] sm:$0xff]
  %v37 = vld [vmem:[%s0 + $0x20] sm:$0xff]
  %v38 = vld [vmem:[%s0 + $0x28] sm:$0xff]
  %v39 = vld [vmem:[%s0 + $0x30] sm:$0xff]
  %v40 = vld [vmem:[%s0 + $0x38] sm:$0xff]
  %v41 = vld [vmem:[%s0 + $0x40] sm:$0xff]
  %v42 = vld [vmem:[%s0 + $0x48] sm:$0xff]
  %v43 = vld [vmem:[%s0 + $0x50] sm:$0xff]
  %v44 = vld [vmem:[%s0 + $0x58] sm:$0xff]
  %v45 = vld [vmem:[%s0 + $0x60] sm:$0xff]
  %v46 = vld [vmem:[%s0 + $0x68] sm:$0xff]
  %v47 = vld [vmem:[%s0 + $0x70] sm:$0xff]
  %v48 = vld [vmem:[%s0 + $0x78] sm:$0xff]
  %v49 = vld [vmem:[%s0 + $0x80] sm:$0xff]
  %v50 = vld [vmem:[%s0 + $0x88] sm:$0xff]
  %v51 = vld [vmem:[%s0 + $0x90] sm:$0xff]
  %v52 = vld [vmem:[%s0 + $0x98] sm:$0xff]
  %v53 = vld [vmem:[%s0 + $0xa0] sm:$0xff]
  %v54 = vld [vmem:[%s0 + $0xa8] sm:$0xff]
  %v55 = vld [vmem:[%s0 + $0xb0] sm:$0xff]
  %v56 = vld [vmem:[%s0 + $0xb8] sm:$0xff]
  %v57 = vld [vmem:[%s0 + $0xc0] sm:$0xff]
  %v58 = vld [vmem:[%s0 + $0xc8] sm:$0xff]
  %v59 = vld [vmem:[%s0 + $0xd0] sm:$0xff]
  %v60 = vld [vmem:[%s0 + $0xd8] sm:$0xff]
  %v61 = vld [vmem:[%s0 + $0xe0] sm:$0xff]
  %v62 = vld [vmem:[%s0 + $0xe8] sm:$0xff]
  %v63 = vld [vmem:[%s0 + $0xf0] sm:$0xff]
  %v64 = vld [vmem:[%s0 + $0xf8] sm:$0xff]
  %v65 = vld [vmem:[%s0 + $0x100] sm:$0xff]
  %v66 = vld [vmem:[%s0 + $0x108] sm:$0xff]
  %v67 = vld [vmem:[%s0 + $0x110] sm:$0xff]
  %v68 = vld [vmem:[%s0 + $0x118] sm:$0xff]
  %v69 = vld [vmem:[%s0 + $0x120] sm:$0xff]
  %v70 = vld [vmem:[%s0 + $0x128] sm:$0xff]
  %v71 = vpack.c.bf16 %v34, %v33
  %v72 = vpack.c.bf16 %v36, %v35
  %v73 = vpack.c.bf16 %v38, %v37
  %v74 = vpack.c.bf16 %v40, %v39
  %v75 = vpack.c.bf16 %v42, %v41
  %v76 = vpack.c.bf16 %v44, %v43
  %v77 = vpack.c.bf16 %v46, %v45
  %v78 = vpack.c.bf16 %v48, %v47
  %v79 = vpack.c.bf16 %v50, %v49
  %v80 = vpack.c.bf16 %v52, %v51
  %v81 = vpack.c.bf16 %v54, %v53
  %v82 = vpack.c.bf16 %v56, %v55
  %v83 = vpack.c.bf16 %v58, %v57
  %v84 = vpack.c.bf16 %v60, %v59
  %v85 = vpack.c.bf16 %v62, %v61
  %v86 = vpack.c.bf16 %v64, %v63
  %v87 = vpack.c.bf16 %v66, %v65
  %v88 = vpack.c.bf16 %v68, %v67
  %v89 = vpack.c.bf16 %v70, %v69
  %v90 = vld [vmem:[%s2] sm:$0xff]
  %v91 = vld [vmem:[%s2 + $0x8] sm:$0xff]
  %v92 = vld [vmem:[%s2 + $0x10] sm:$0xff]
  %v93 = vld [vmem:[%s2 + $0x18] sm:$0xff]
  %v94 = vld [vmem:[%s2 + $0x20] sm:$0xff]
  %v95 = vld [vmem:[%s2 + $0x28] sm:$0xff]
  %v96 = vld [vmem:[%s2 + $0x30] sm:$0xff]
  %v97 = vld [vmem:[%s2 + $0x38] sm:$0xff]
  %v98 = vld [vmem:[%s2 + $0x40] sm:$0xff]
  %v99 = vld [vmem:[%s2 + $0x48] sm:$0xff]
  %v100 = vld [vmem:[%s2 + $0x50] sm:$0xff]
  %v101 = vld [vmem:[%s2 + $0x58] sm:$0xff]
  %v114 = vunpack.c.l.b16 %v90
  %v115 = vunpack.c.h.b16 %v90
  %v116 = vunpack.c.l.b16 %v91
  %v117 = vunpack.c.h.b16 %v91
  %v118 = vunpack.c.l.b16 %v92
  %v119 = vunpack.c.h.b16 %v92
  %v120 = vunpack.c.l.b16 %v93
  %v121 = vunpack.c.h.b16 %v93
  %v122 = vunpack.c.l.b16 %v94
  %v123 = vunpack.c.h.b16 %v94
  %v124 = vunpack.c.l.b16 %v95
  %v125 = vunpack.c.h.b16 %v95
  %v126 = vunpack.c.l.b16 %v96
  %v127 = vunpack.c.h.b16 %v96
  %v128 = vunpack.c.l.b16 %v97
  %v129 = vunpack.c.h.b16 %v97
  %v130 = vunpack.c.l.b16 %v98
  %v131 = vunpack.c.h.b16 %v98
  %v132 = vunpack.c.l.b16 %v99
  %v133 = vunpack.c.h.b16 %v99
  %v134 = vunpack.c.l.b16 %v100
  %v135 = vunpack.c.h.b16 %v100
  %v136 = vunpack.c.l.b16 %v101
  %v137 = vunpack.c.h.b16 %v101
  %v138 = vpack.c.b16 %v120, %v114
  %v139 = vpack.c.b16 %v121, %v115
  %v140 = vpack.c.b16 %v122, %v116
  %v141 = vpack.c.b16 %v123, %v117
  %v142 = vpack.c.b16 %v124, %v118
  %v143 = vpack.c.b16 %v125, %v119
  %v144 = vpack.c.b16 %v132, %v126
  %v145 = vpack.c.b16 %v133, %v127
  %v146 = vpack.c.b16 %v134, %v128
  %v147 = vpack.c.b16 %v135, %v129
  %v148 = vpack.c.b16 %v136, %v130
  %v149 = vpack.c.b16 %v137, %v131
  %vm156 = vcmask 252928
  %v158 = vsel %vm156, %v71, 0
  %v161 = vsel %vm156, %v72, 0
  %v164 = vsel %vm156, %v73, 0
  %v167 = vsel %vm156, %v74, 0
  %v170 = vsel %vm156, %v75, 0
  %v173 = vsel %vm156, %v76, 0
  %v176 = vsel %vm156, %v77, 0
  %v179 = vsel %vm156, %v78, 0
  %v182 = vsel %vm156, %v79, 0
  %v185 = vsel %vm156, %v80, 0
  %v188 = vsel %vm156, %v81, 0
  %v191 = vsel %vm156, %v82, 0
  %v194 = vsel %vm156, %v83, 0
  %v197 = vsel %vm156, %v84, 0
  %v200 = vsel %vm156, %v85, 0
  %v203 = vsel %vm156, %v86, 0
  %v206 = vsel %vm156, %v87, 0
  %v209 = vsel %vm156, %v88, 0
  %v212 = vsel %vm156, %v89, 0
  %vm214 = vcmask 1046528
  %vm215 = vcmask 1047552
  %v216 = vsel %vm214, 4294967295, 65535
  %v217 = vsel %vm215, %v216, 0
  %v219 = vand.u32 %v144, %v217
  %v222 = vand.u32 %v145, %v217
  %v225 = vand.u32 %v146, %v217
  %v228 = vand.u32 %v147, %v217
  %v231 = vand.u32 %v148, %v217
  %v234 = vand.u32 %v149, %v217
  %236 = vmatprep.subr.bf16.mxu0 %v139
  %237 = vmatpush1.bf16.msra.mxu0 %v138
  %238 = vmatprep.subr.bf16.mxu0 %v222
  %239 = vmatpush1.bf16.msra.mxu0 %v219
  %240 = vmatprep.subr.bf16.mxu0 0
  %241 = vmatpush1.bf16.msra.mxu0 0
  %242 = vmatprep.subr.bf16.mxu0 0
  %243 = vmatpush1.bf16.msra.mxu0 0
  %244 = vmatprep.subr.bf16.mxu0 0
  %245 = vmatpush1.bf16.msra.mxu0 0
  %246 = vmatprep.subr.bf16.mxu0 0
  %247 = vmatpush1.bf16.msra.mxu0 0
  %248 = vmatprep.subr.bf16.mxu0 0
  %249 = vmatpush1.bf16.msra.mxu0 0
  %250 = vmatprep.subr.bf16.mxu0 0
  %251 = vmatpush1.bf16.msra.mxu0 0
  %252 = vmatprep.subr.bf16.mxu0 0
  %253 = vmatpush1.bf16.msra.mxu0 0
  %254 = vmatprep.subr.bf16.mxu0 0
  %255 = vmatpush1.bf16.msra.mxu0 0
  %256 = vmatprep.subr.bf16.mxu0 0
  %257 = vmatpush1.bf16.msra.mxu0 0
  %258 = vmatprep.subr.bf16.mxu0 0
  %259 = vmatpush1.bf16.msra.mxu0 0
  %260 = vmatprep.subr.bf16.mxu0 0
  %261 = vmatpush1.bf16.msra.mxu0 0
  %262 = vmatprep.subr.bf16.mxu0 0
  %263 = vmatpush1.bf16.msra.mxu0 0
  %264 = vmatprep.subr.bf16.mxu0 0
  %265 = vmatpush1.bf16.msra.mxu0 0
  %266 = vmatprep.subr.bf16.mxu0 0
  %267 = vmatpush1.bf16.msra.mxu0 0
  %268 = vmatprep.mubr.bf16.mxu0 0
  %269 = vmatmul.mubr.bf16.gmra.mrb[0].mxu0 %v158
  %v270 = vpop.f32.mrb[0].mxu0
  %v271 = vadd.f32 0.0, %v270
  %v272 = vpop.f32.mrb[0].mxu0
  %v273 = vadd.f32 0.0, %v272
  %v274 = vpop.f32.mrb[0].mxu0
  %v275 = vadd.f32 0.0, %v274
  %v276 = vpop.f32.mrb[0].mxu0
  %v277 = vadd.f32 0.0, %v276
  %278 = vmatprep.mubr.bf16.mxu0 0
  %279 = vmatmul.mubr.bf16.gmra.mrb[0].mxu0 %v161
  %v280 = vpop.f32.mrb[0].mxu0
  %v281 = vadd.f32 0.0, %v280
  %v282 = vpop.f32.mrb[0].mxu0
  %v283 = vadd.f32 0.0, %v282
  %v284 = vpop.f32.mrb[0].mxu0
  %v285 = vadd.f32 0.0, %v284
  %v286 = vpop.f32.mrb[0].mxu0
  %v287 = vadd.f32 0.0, %v286
  %288 = vmatprep.mubr.bf16.mxu0 0
  %289 = vmatmul.mubr.bf16.gmra.mrb[0].mxu0 %v164
  %v290 = vpop.f32.mrb[0].mxu0
  %v291 = vadd.f32 0.0, %v290
  %v292 = vpop.f32.mrb[0].mxu0
  %v293 = vadd.f32 0.0, %v292
  %v294 = vpop.f32.mrb[0].mxu0
  %v295 = vadd.f32 0.0, %v294
  %v296 = vpop.f32.mrb[0].mxu0
  %v297 = vadd.f32 0.0, %v296
  %298 = vmatprep.mubr.bf16.mxu0 0
  %299 = vmatmul.mubr.bf16.gmra.mrb[0].mxu0 %v167
  %v300 = vpop.f32.mrb[0].mxu0
  %v301 = vadd.f32 0.0, %v300
  %v302 = vpop.f32.mrb[0].mxu0
  %v303 = vadd.f32 0.0, %v302
  %v304 = vpop.f32.mrb[0].mxu0
  %v305 = vadd.f32 0.0, %v304
  %v306 = vpop.f32.mrb[0].mxu0
  %v307 = vadd.f32 0.0, %v306
  %308 = vmatprep.mubr.bf16.mxu0 0
  %309 = vmatmul.mubr.bf16.gmra.mrb[0].mxu0 %v170
  %v310 = vpop.f32.mrb[0].mxu0
  %v311 = vadd.f32 0.0, %v310
  %v312 = vpop.f32.mrb[0].mxu0
  %v313 = vadd.f32 0.0, %v312
  %v314 = vpop.f32.mrb[0].mxu0
  %v315 = vadd.f32 0.0, %v314
  %v316 = vpop.f32.mrb[0].mxu0
  %v317 = vadd.f32 0.0, %v316
  %318 = vmatprep.mubr.bf16.mxu0 0
  %319 = vmatmul.mubr.bf16.gmra.mrb[0].mxu0 %v173
  %v320 = vpop.f32.mrb[0].mxu0
  %v321 = vadd.f32 0.0, %v320
  %v322 = vpop.f32.mrb[0].mxu0
  %v323 = vadd.f32 0.0, %v322
  %v324 = vpop.f32.mrb[0].mxu0
  %v325 = vadd.f32 0.0, %v324
  %v326 = vpop.f32.mrb[0].mxu0
  %v327 = vadd.f32 0.0, %v326
  %328 = vmatprep.mubr.bf16.mxu0 0
  %329 = vmatmul.mubr.bf16.gmra.mrb[0].mxu0 %v176
  %v330 = vpop.f32.mrb[0].mxu0
  %v331 = vadd.f32 0.0, %v330
  %v332 = vpop.f32.mrb[0].mxu0
  %v333 = vadd.f32 0.0, %v332
  %v334 = vpop.f32.mrb[0].mxu0
  %v335 = vadd.f32 0.0, %v334
  %v336 = vpop.f32.mrb[0].mxu0
  %v337 = vadd.f32 0.0, %v336
  %338 = vmatprep.mubr.bf16.mxu0 0
  %339 = vmatmul.mubr.bf16.gmra.mrb[0].mxu0 %v179
  %v340 = vpop.f32.mrb[0].mxu0
  %v341 = vadd.f32 0.0, %v340
  %v342 = vpop.f32.mrb[0].mxu0
  %v343 = vadd.f32 0.0, %v342
  %v344 = vpop.f32.mrb[0].mxu0
  %v345 = vadd.f32 0.0, %v344
  %v346 = vpop.f32.mrb[0].mxu0
  %v347 = vadd.f32 0.0, %v346
  %348 = vmatprep.mubr.bf16.mxu0 0
  %349 = vmatmul.mubr.bf16.gmra.mrb[0].mxu0 %v182
  %v350 = vpop.f32.mrb[0].mxu0
  %v351 = vadd.f32 0.0, %v350
  %v352 = vpop.f32.mrb[0].mxu0
  %v353 = vadd.f32 0.0, %v352
  %v354 = vpop.f32.mrb[0].mxu0
  %v355 = vadd.f32 0.0, %v354
  %v356 = vpop.f32.mrb[0].mxu0
  %v357 = vadd.f32 0.0, %v356
  %358 = vmatprep.mubr.bf16.mxu0 0
  %359 = vmatmul.mubr.bf16.gmra.mrb[0].mxu0 %v185
  %v360 = vpop.f32.mrb[0].mxu0
  %v361 = vadd.f32 0.0, %v360
  %v362 = vpop.f32.mrb[0].mxu0
  %v363 = vadd.f32 0.0, %v362
  %v364 = vpop.f32.mrb[0].mxu0
  %v365 = vadd.f32 0.0, %v364
  %v366 = vpop.f32.mrb[0].mxu0
  %v367 = vadd.f32 0.0, %v366
  %368 = vmatprep.mubr.bf16.mxu0 0
  %369 = vmatmul.mubr.bf16.gmra.mrb[0].mxu0 %v188
  %v370 = vpop.f32.mrb[0].mxu0
  %v371 = vadd.f32 0.0, %v370
  %v372 = vpop.f32.mrb[0].mxu0
  %v373 = vadd.f32 0.0, %v372
  %v374 = vpop.f32.mrb[0].mxu0
  %v375 = vadd.f32 0.0, %v374
  %v376 = vpop.f32.mrb[0].mxu0
  %v377 = vadd.f32 0.0, %v376
  %378 = vmatprep.mubr.bf16.mxu0 0
  %379 = vmatmul.mubr.bf16.gmra.mrb[0].mxu0 %v191
  %v380 = vpop.f32.mrb[0].mxu0
  %v381 = vadd.f32 0.0, %v380
  %v382 = vpop.f32.mrb[0].mxu0
  %v383 = vadd.f32 0.0, %v382
  %v384 = vpop.f32.mrb[0].mxu0
  %v385 = vadd.f32 0.0, %v384
  %v386 = vpop.f32.mrb[0].mxu0
  %v387 = vadd.f32 0.0, %v386
  %388 = vmatprep.mubr.bf16.mxu0 0
  %389 = vmatmul.mubr.bf16.gmra.mrb[0].mxu0 %v194
  %v390 = vpop.f32.mrb[0].mxu0
  %v391 = vadd.f32 0.0, %v390
  %v392 = vpop.f32.mrb[0].mxu0
  %v393 = vadd.f32 0.0, %v392
  %v394 = vpop.f32.mrb[0].mxu0
  %v395 = vadd.f32 0.0, %v394
  %v396 = vpop.f32.mrb[0].mxu0
  %v397 = vadd.f32 0.0, %v396
  %398 = vmatprep.mubr.bf16.mxu0 0
  %399 = vmatmul.mubr.bf16.gmra.mrb[0].mxu0 %v197
  %v400 = vpop.f32.mrb[0].mxu0
  %v401 = vadd.f32 0.0, %v400
  %v402 = vpop.f32.mrb[0].mxu0
  %v403 = vadd.f32 0.0, %v402
  %v404 = vpop.f32.mrb[0].mxu0
  %v405 = vadd.f32 0.0, %v404
  %v406 = vpop.f32.mrb[0].mxu0
  %v407 = vadd.f32 0.0, %v406
  %408 = vmatprep.mubr.bf16.mxu0 0
  %409 = vmatmul.mubr.bf16.gmra.mrb[0].mxu0 %v200
  %v410 = vpop.f32.mrb[0].mxu0
  %v411 = vadd.f32 0.0, %v410
  %v412 = vpop.f32.mrb[0].mxu0
  %v413 = vadd.f32 0.0, %v412
  %v414 = vpop.f32.mrb[0].mxu0
  %v415 = vadd.f32 0.0, %v414
  %v416 = vpop.f32.mrb[0].mxu0
  %v417 = vadd.f32 0.0, %v416
  %418 = vmatprep.mubr.bf16.mxu0 0
  %419 = vmatmul.mubr.bf16.gmra.mrb[0].mxu0 %v203
  %v420 = vpop.f32.mrb[0].mxu0
  %v421 = vadd.f32 0.0, %v420
  %v422 = vpop.f32.mrb[0].mxu0
  %v423 = vadd.f32 0.0, %v422
  %v424 = vpop.f32.mrb[0].mxu0
  %v425 = vadd.f32 0.0, %v424
  %v426 = vpop.f32.mrb[0].mxu0
  %v427 = vadd.f32 0.0, %v426
  %428 = vmatprep.mubr.bf16.mxu0 0
  %429 = vmatmul.mubr.bf16.gmra.mrb[0].mxu0 %v206
  %v430 = vpop.f32.mrb[0].mxu0
  %v431 = vadd.f32 0.0, %v430
  %v432 = vpop.f32.mrb[0].mxu0
  %v433 = vadd.f32 0.0, %v432
  %v434 = vpop.f32.mrb[0].mxu0
  %v435 = vadd.f32 0.0, %v434
  %v436 = vpop.f32.mrb[0].mxu0
  %v437 = vadd.f32 0.0, %v436
  %438 = vmatprep.mubr.bf16.mxu0 0
  %439 = vmatmul.mubr.bf16.gmra.mrb[0].mxu0 %v209
  %v440 = vpop.f32.mrb[0].mxu0
  %v441 = vadd.f32 0.0, %v440
  %v442 = vpop.f32.mrb[0].mxu0
  %v443 = vadd.f32 0.0, %v442
  %v444 = vpop.f32.mrb[0].mxu0
  %v445 = vadd.f32 0.0, %v444
  %v446 = vpop.f32.mrb[0].mxu0
  %v447 = vadd.f32 0.0, %v446
  %448 = vmatprep.mubr.bf16.mxu0 0
  %449 = vmatmul.mubr.bf16.gmra.mrb[0].mxu0 %v212
  %v450 = vpop.f32.mrb[0].mxu0
  %v451 = vadd.f32 0.0, %v450
  %v452 = vpop.f32.mrb[0].mxu0
  %v453 = vadd.f32 0.0, %v452
  %v454 = vpop.f32.mrb[0].mxu0
  %v455 = vadd.f32 0.0, %v454
  %v456 = vpop.f32.mrb[0].mxu0
  %v457 = vadd.f32 0.0, %v456
  %458 = vdwg.mxu0
  %459 = vmatprep.subr.bf16.mxu0 %v141
  %460 = vmatpush1.bf16.msra.mxu0 %v140
  %461 = vmatprep.subr.bf16.mxu0 %v228
  %462 = vmatpush1.bf16.msra.mxu0 %v225
  %463 = vmatprep.subr.bf16.mxu0 0
  %464 = vmatpush1.bf16.msra.mxu0 0
  %465 = vmatprep.subr.bf16.mxu0 0
  %466 = vmatpush1.bf16.msra.mxu0 0
  %467 = vmatprep.subr.bf16.mxu0 0
  %468 = vmatpush1.bf16.msra.mxu0 0
  %469 = vmatprep.subr.bf16.mxu0 0
  %470 = vmatpush1.bf16.msra.mxu0 0
  %471 = vmatprep.subr.bf16.mxu0 0
  %472 = vmatpush1.bf16.msra.mxu0 0
  %473 = vmatprep.subr.bf16.mxu0 0
  %474 = vmatpush1.bf16.msra.mxu0 0
  %475 = vmatprep.subr.bf16.mxu0 0
  %476 = vmatpush1.bf16.msra.mxu0 0
  %477 = vmatprep.subr.bf16.mxu0 0
  %478 = vmatpush1.bf16.msra.mxu0 0
  %479 = vmatprep.subr.bf16.mxu0 0
  %480 = vmatpush1.bf16.msra.mxu0 0
  %481 = vmatprep.subr.bf16.mxu0 0
  %482 = vmatpush1.bf16.msra.mxu0 0
  %483 = vmatprep.subr.bf16.mxu0 0
  %484 = vmatpush1.bf16.msra.mxu0 0
  %485 = vmatprep.subr.bf16.mxu0 0
  %486 = vmatpush1.bf16.msra.mxu0 0
  %487 = vmatprep.subr.bf16.mxu0 0
  %488 = vmatpush1.bf16.msra.mxu0 0
  %489 = vmatprep.subr.bf16.mxu0 0
  %490 = vmatpush1.bf16.msra.mxu0 0
  %491 = vmatprep.mubr.bf16.mxu0 0
  %492 = vmatmul.mubr.bf16.gmra.mrb[0].mxu0 %v158
  %v493 = vpop.f32.mrb[0].mxu0
  %v494 = vadd.f32 0.0, %v493
  %v495 = vpop.f32.mrb[0].mxu0
  %v496 = vadd.f32 0.0, %v495
  %v497 = vpop.f32.mrb[0].mxu0
  %v498 = vadd.f32 0.0, %v497
  %v499 = vpop.f32.mrb[0].mxu0
  %v500 = vadd.f32 0.0, %v499
  %501 = vmatprep.mubr.bf16.mxu0 0
  %502 = vmatmul.mubr.bf16.gmra.mrb[0].mxu0 %v161
  %v503 = vpop.f32.mrb[0].mxu0
  %v504 = vadd.f32 0.0, %v503
  %v505 = vpop.f32.mrb[0].mxu0
  %v506 = vadd.f32 0.0, %v505
  %v507 = vpop.f32.mrb[0].mxu0
  %v508 = vadd.f32 0.0, %v507
  %v509 = vpop.f32.mrb[0].mxu0
  %v510 = vadd.f32 0.0, %v509
  %511 = vmatprep.mubr.bf16.mxu0 0
  %512 = vmatmul.mubr.bf16.gmra.mrb[0].mxu0 %v164
  %v513 = vpop.f32.mrb[0].mxu0
  %v514 = vadd.f32 0.0, %v513
  %v515 = vpop.f32.mrb[0].mxu0
  %v516 = vadd.f32 0.0, %v515
  %v517 = vpop.f32.mrb[0].mxu0
  %v518 = vadd.f32 0.0, %v517
  %v519 = vpop.f32.mrb[0].mxu0
  %v520 = vadd.f32 0.0, %v519
  %521 = vmatprep.mubr.bf16.mxu0 0
  %522 = vmatmul.mubr.bf16.gmra.mrb[0].mxu0 %v167
  %v523 = vpop.f32.mrb[0].mxu0
  %v524 = vadd.f32 0.0, %v523
  %v525 = vpop.f32.mrb[0].mxu0
  %v526 = vadd.f32 0.0, %v525
  %v527 = vpop.f32.mrb[0].mxu0
  %v528 = vadd.f32 0.0, %v527
  %v529 = vpop.f32.mrb[0].mxu0
  %v530 = vadd.f32 0.0, %v529
  %531 = vmatprep.mubr.bf16.mxu0 0
  %532 = vmatmul.mubr.bf16.gmra.mrb[0].mxu0 %v170
  %v533 = vpop.f32.mrb[0].mxu0
  %v534 = vadd.f32 0.0, %v533
  %v535 = vpop.f32.mrb[0].mxu0
  %v536 = vadd.f32 0.0, %v535
  %v537 = vpop.f32.mrb[0].mxu0
  %v538 = vadd.f32 0.0, %v537
  %v539 = vpop.f32.mrb[0].mxu0
  %v540 = vadd.f32 0.0, %v539
  %541 = vmatprep.mubr.bf16.mxu0 0
  %542 = vmatmul.mubr.bf16.gmra.mrb[0].mxu0 %v173
  %v543 = vpop.f32.mrb[0].mxu0
  %v544 = vadd.f32 0.0, %v543
  %v545 = vpop.f32.mrb[0].mxu0
  %v546 = vadd.f32 0.0, %v545
  %v547 = vpop.f32.mrb[0].mxu0
  %v548 = vadd.f32 0.0, %v547
  %v549 = vpop.f32.mrb[0].mxu0
  %v550 = vadd.f32 0.0, %v549
  %551 = vmatprep.mubr.bf16.mxu0 0
  %552 = vmatmul.mubr.bf16.gmra.mrb[0].mxu0 %v176
  %v553 = vpop.f32.mrb[0].mxu0
  %v554 = vadd.f32 0.0, %v553
  %v555 = vpop.f32.mrb[0].mxu0
  %v556 = vadd.f32 0.0, %v555
  %v557 = vpop.f32.mrb[0].mxu0
  %v558 = vadd.f32 0.0, %v557
  %v559 = vpop.f32.mrb[0].mxu0
  %v560 = vadd.f32 0.0, %v559
  %561 = vmatprep.mubr.bf16.mxu0 0
  %562 = vmatmul.mubr.bf16.gmra.mrb[0].mxu0 %v179
  %v563 = vpop.f32.mrb[0].mxu0
  %v564 = vadd.f32 0.0, %v563
  %v565 = vpop.f32.mrb[0].mxu0
  %v566 = vadd.f32 0.0, %v565
  %v567 = vpop.f32.mrb[0].mxu0
  %v568 = vadd.f32 0.0, %v567
  %v569 = vpop.f32.mrb[0].mxu0
  %v570 = vadd.f32 0.0, %v569
  %571 = vmatprep.mubr.bf16.mxu0 0
  %572 = vmatmul.mubr.bf16.gmra.mrb[0].mxu0 %v182
  %v573 = vpop.f32.mrb[0].mxu0
  %v574 = vadd.f32 0.0, %v573
  %v575 = vpop.f32.mrb[0].mxu0
  %v576 = vadd.f32 0.0, %v575
  %v577 = vpop.f32.mrb[0].mxu0
  %v578 = vadd.f32 0.0, %v577
  %v579 = vpop.f32.mrb[0].mxu0
  %v580 = vadd.f32 0.0, %v579
  %581 = vmatprep.mubr.bf16.mxu0 0
  %582 = vmatmul.mubr.bf16.gmra.mrb[0].mxu0 %v185
  %v583 = vpop.f32.mrb[0].mxu0
  %v584 = vadd.f32 0.0, %v583
  %v585 = vpop.f32.mrb[0].mxu0
  %v586 = vadd.f32 0.0, %v585
  %v587 = vpop.f32.mrb[0].mxu0
  %v588 = vadd.f32 0.0, %v587
  %v589 = vpop.f32.mrb[0].mxu0
  %v590 = vadd.f32 0.0, %v589
  %591 = vmatprep.mubr.bf16.mxu0 0
  %592 = vmatmul.mubr.bf16.gmra.mrb[0].mxu0 %v188
  %v593 = vpop.f32.mrb[0].mxu0
  %v594 = vadd.f32 0.0, %v593
  %v595 = vpop.f32.mrb[0].mxu0
  %v596 = vadd.f32 0.0, %v595
  %v597 = vpop.f32.mrb[0].mxu0
  %v598 = vadd.f32 0.0, %v597
  %v599 = vpop.f32.mrb[0].mxu0
  %v600 = vadd.f32 0.0, %v599
  %601 = vmatprep.mubr.bf16.mxu0 0
  %602 = vmatmul.mubr.bf16.gmra.mrb[0].mxu0 %v191
  %v603 = vpop.f32.mrb[0].mxu0
  %v604 = vadd.f32 0.0, %v603
  %v605 = vpop.f32.mrb[0].mxu0
  %v606 = vadd.f32 0.0, %v605
  %v607 = vpop.f32.mrb[0].mxu0
  %v608 = vadd.f32 0.0, %v607
  %v609 = vpop.f32.mrb[0].mxu0
  %v610 = vadd.f32 0.0, %v609
  %611 = vmatprep.mubr.bf16.mxu0 0
  %612 = vmatmul.mubr.bf16.gmra.mrb[0].mxu0 %v194
  %v613 = vpop.f32.mrb[0].mxu0
  %v614 = vadd.f32 0.0, %v613
  %v615 = vpop.f32.mrb[0].mxu0
  %v616 = vadd.f32 0.0, %v615
  %v617 = vpop.f32.mrb[0].mxu0
  %v618 = vadd.f32 0.0, %v617
  %v619 = vpop.f32.mrb[0].mxu0
  %v620 = vadd.f32 0.0, %v619
  %621 = vmatprep.mubr.bf16.mxu0 0
  %622 = vmatmul.mubr.bf16.gmra.mrb[0].mxu0 %v197
  %v623 = vpop.f32.mrb[0].mxu0
  %v624 = vadd.f32 0.0, %v623
  %v625 = vpop.f32.mrb[0].mxu0
  %v626 = vadd.f32 0.0, %v625
  %v627 = vpop.f32.mrb[0].mxu0
  %v628 = vadd.f32 0.0, %v627
  %v629 = vpop.f32.mrb[0].mxu0
  %v630 = vadd.f32 0.0, %v629
  %631 = vmatprep.mubr.bf16.mxu0 0
  %632 = vmatmul.mubr.bf16.gmra.mrb[0].mxu0 %v200
  %v633 = vpop.f32.mrb[0].mxu0
  %v634 = vadd.f32 0.0, %v633
  %v635 = vpop.f32.mrb[0].mxu0
  %v636 = vadd.f32 0.0, %v635
  %v637 = vpop.f32.mrb[0].mxu0
  %v638 = vadd.f32 0.0, %v637
  %v639 = vpop.f32.mrb[0].mxu0
  %v640 = vadd.f32 0.0, %v639
  %641 = vmatprep.mubr.bf16.mxu0 0
  %642 = vmatmul.mubr.bf16.gmra.mrb[0].mxu0 %v203
  %v643 = vpop.f32.mrb[0].mxu0
  %v644 = vadd.f32 0.0, %v643
  %v645 = vpop.f32.mrb[0].mxu0
  %v646 = vadd.f32 0.0, %v645
  %v647 = vpop.f32.mrb[0].mxu0
  %v648 = vadd.f32 0.0, %v647
  %v649 = vpop.f32.mrb[0].mxu0
  %v650 = vadd.f32 0.0, %v649
  %651 = vmatprep.mubr.bf16.mxu0 0
  %652 = vmatmul.mubr.bf16.gmra.mrb[0].mxu0 %v206
  %v653 = vpop.f32.mrb[0].mxu0
  %v654 = vadd.f32 0.0, %v653
  %v655 = vpop.f32.mrb[0].mxu0
  %v656 = vadd.f32 0.0, %v655
  %v657 = vpop.f32.mrb[0].mxu0
  %v658 = vadd.f32 0.0, %v657
  %v659 = vpop.f32.mrb[0].mxu0
  %v660 = vadd.f32 0.0, %v659
  %661 = vmatprep.mubr.bf16.mxu0 0
  %662 = vmatmul.mubr.bf16.gmra.mrb[0].mxu0 %v209
  %v663 = vpop.f32.mrb[0].mxu0
  %v664 = vadd.f32 0.0, %v663
  %v665 = vpop.f32.mrb[0].mxu0
  %v666 = vadd.f32 0.0, %v665
  %v667 = vpop.f32.mrb[0].mxu0
  %v668 = vadd.f32 0.0, %v667
  %v669 = vpop.f32.mrb[0].mxu0
  %v670 = vadd.f32 0.0, %v669
  %671 = vmatprep.mubr.bf16.mxu0 0
  %672 = vmatmul.mubr.bf16.gmra.mrb[0].mxu0 %v212
  %v673 = vpop.f32.mrb[0].mxu0
  %v674 = vadd.f32 0.0, %v673
  %v675 = vpop.f32.mrb[0].mxu0
  %v676 = vadd.f32 0.0, %v675
  %v677 = vpop.f32.mrb[0].mxu0
  %v678 = vadd.f32 0.0, %v677
  %v679 = vpop.f32.mrb[0].mxu0
  %v680 = vadd.f32 0.0, %v679
  %681 = vdwg.mxu0
  %682 = vmatprep.subr.bf16.mxu0 %v143
  %683 = vmatpush1.bf16.msra.mxu0 %v142
  %684 = vmatprep.subr.bf16.mxu0 %v234
  %685 = vmatpush1.bf16.msra.mxu0 %v231
  %686 = vmatprep.subr.bf16.mxu0 0
  %687 = vmatpush1.bf16.msra.mxu0 0
  %688 = vmatprep.subr.bf16.mxu0 0
  %689 = vmatpush1.bf16.msra.mxu0 0
  %690 = vmatprep.subr.bf16.mxu0 0
  %691 = vmatpush1.bf16.msra.mxu0 0
  %692 = vmatprep.subr.bf16.mxu0 0
  %693 = vmatpush1.bf16.msra.mxu0 0
  %694 = vmatprep.subr.bf16.mxu0 0
  %695 = vmatpush1.bf16.msra.mxu0 0
  %696 = vmatprep.subr.bf16.mxu0 0
  %697 = vmatpush1.bf16.msra.mxu0 0
  %698 = vmatprep.subr.bf16.mxu0 0
  %699 = vmatpush1.bf16.msra.mxu0 0
  %700 = vmatprep.subr.bf16.mxu0 0
  %701 = vmatpush1.bf16.msra.mxu0 0
  %702 = vmatprep.subr.bf16.mxu0 0
  %703 = vmatpush1.bf16.msra.mxu0 0
  %704 = vmatprep.subr.bf16.mxu0 0
  %705 = vmatpush1.bf16.msra.mxu0 0
  %706 = vmatprep.subr.bf16.mxu0 0
  %707 = vmatpush1.bf16.msra.mxu0 0
  %708 = vmatprep.subr.bf16.mxu0 0
  %709 = vmatpush1.bf16.msra.mxu0 0
  %710 = vmatprep.subr.bf16.mxu0 0
  %711 = vmatpush1.bf16.msra.mxu0 0
  %712 = vmatprep.subr.bf16.mxu0 0
  %713 = vmatpush1.bf16.msra.mxu0 0
  %714 = vmatprep.mubr.bf16.mxu0 0
  %715 = vmatmul.mubr.bf16.gmra.mrb[0].mxu0 %v158
  %v716 = vpop.f32.mrb[0].mxu0
  %v717 = vadd.f32 0.0, %v716
  %v718 = vpop.f32.mrb[0].mxu0
  %v719 = vadd.f32 0.0, %v718
  %v720 = vpop.f32.mrb[0].mxu0
  %v721 = vadd.f32 0.0, %v720
  %v722 = vpop.f32.mrb[0].mxu0
  %v723 = vadd.f32 0.0, %v722
  %724 = vmatprep.mubr.bf16.mxu0 0
  %725 = vmatmul.mubr.bf16.gmra.mrb[0].mxu0 %v161
  %v726 = vpop.f32.mrb[0].mxu0
  %v727 = vadd.f32 0.0, %v726
  %v728 = vpop.f32.mrb[0].mxu0
  %v729 = vadd.f32 0.0, %v728
  %v730 = vpop.f32.mrb[0].mxu0
  %v731 = vadd.f32 0.0, %v730
  %v732 = vpop.f32.mrb[0].mxu0
  %v733 = vadd.f32 0.0, %v732
  %734 = vmatprep.mubr.bf16.mxu0 0
  %735 = vmatmul.mubr.bf16.gmra.mrb[0].mxu0 %v164
  %v736 = vpop.f32.mrb[0].mxu0
  %v737 = vadd.f32 0.0, %v736
  %v738 = vpop.f32.mrb[0].mxu0
  %v739 = vadd.f32 0.0, %v738
  %v740 = vpop.f32.mrb[0].mxu0
  %v741 = vadd.f32 0.0, %v740
  %v742 = vpop.f32.mrb[0].mxu0
  %v743 = vadd.f32 0.0, %v742
  %744 = vmatprep.mubr.bf16.mxu0 0
  %745 = vmatmul.mubr.bf16.gmra.mrb[0].mxu0 %v167
  %v746 = vpop.f32.mrb[0].mxu0
  %v747 = vadd.f32 0.0, %v746
  %v748 = vpop.f32.mrb[0].mxu0
  %v749 = vadd.f32 0.0, %v748
  %v750 = vpop.f32.mrb[0].mxu0
  %v751 = vadd.f32 0.0, %v750
  %v752 = vpop.f32.mrb[0].mxu0
  %v753 = vadd.f32 0.0, %v752
  %754 = vmatprep.mubr.bf16.mxu0 0
  %755 = vmatmul.mubr.bf16.gmra.mrb[0].mxu0 %v170
  %v756 = vpop.f32.mrb[0].mxu0
  %v757 = vadd.f32 0.0, %v756
  %v758 = vpop.f32.mrb[0].mxu0
  %v759 = vadd.f32 0.0, %v758
  %v760 = vpop.f32.mrb[0].mxu0
  %v761 = vadd.f32 0.0, %v760
  %v762 = vpop.f32.mrb[0].mxu0
  %v763 = vadd.f32 0.0, %v762
  %764 = vmatprep.mubr.bf16.mxu0 0
  %765 = vmatmul.mubr.bf16.gmra.mrb[0].mxu0 %v173
  %v766 = vpop.f32.mrb[0].mxu0
  %v767 = vadd.f32 0.0, %v766
  %v768 = vpop.f32.mrb[0].mxu0
  %v769 = vadd.f32 0.0, %v768
  %v770 = vpop.f32.mrb[0].mxu0
  %v771 = vadd.f32 0.0, %v770
  %v772 = vpop.f32.mrb[0].mxu0
  %v773 = vadd.f32 0.0, %v772
  %774 = vmatprep.mubr.bf16.mxu0 0
  %775 = vmatmul.mubr.bf16.gmra.mrb[0].mxu0 %v176
  %v776 = vpop.f32.mrb[0].mxu0
  %v777 = vadd.f32 0.0, %v776
  %v778 = vpop.f32.mrb[0].mxu0
  %v779 = vadd.f32 0.0, %v778
  %v780 = vpop.f32.mrb[0].mxu0
  %v781 = vadd.f32 0.0, %v780
  %v782 = vpop.f32.mrb[0].mxu0
  %v783 = vadd.f32 0.0, %v782
  %784 = vmatprep.mubr.bf16.mxu0 0
  %785 = vmatmul.mubr.bf16.gmra.mrb[0].mxu0 %v179
  %v786 = vpop.f32.mrb[0].mxu0
  %v787 = vadd.f32 0.0, %v786
  %v788 = vpop.f32.mrb[0].mxu0
  %v789 = vadd.f32 0.0, %v788
  %v790 = vpop.f32.mrb[0].mxu0
  %v791 = vadd.f32 0.0, %v790
  %v792 = vpop.f32.mrb[0].mxu0
  %v793 = vadd.f32 0.0, %v792
  %794 = vmatprep.mubr.bf16.mxu0 0
  %795 = vmatmul.mubr.bf16.gmra.mrb[0].mxu0 %v182
  %v796 = vpop.f32.mrb[0].mxu0
  %v797 = vadd.f32 0.0, %v796
  %v798 = vpop.f32.mrb[0].mxu0
  %v799 = vadd.f32 0.0, %v798
  %v800 = vpop.f32.mrb[0].mxu0
  %v801 = vadd.f32 0.0, %v800
  %v802 = vpop.f32.mrb[0].mxu0
  %v803 = vadd.f32 0.0, %v802
  %804 = vmatprep.mubr.bf16.mxu0 0
  %805 = vmatmul.mubr.bf16.gmra.mrb[0].mxu0 %v185
  %v806 = vpop.f32.mrb[0].mxu0
  %v807 = vadd.f32 0.0, %v806
  %v808 = vpop.f32.mrb[0].mxu0
  %v809 = vadd.f32 0.0, %v808
  %v810 = vpop.f32.mrb[0].mxu0
  %v811 = vadd.f32 0.0, %v810
  %v812 = vpop.f32.mrb[0].mxu0
  %v813 = vadd.f32 0.0, %v812
  %814 = vmatprep.mubr.bf16.mxu0 0
  %815 = vmatmul.mubr.bf16.gmra.mrb[0].mxu0 %v188
  %v816 = vpop.f32.mrb[0].mxu0
  %v817 = vadd.f32 0.0, %v816
  %v818 = vpop.f32.mrb[0].mxu0
  %v819 = vadd.f32 0.0, %v818
  %v820 = vpop.f32.mrb[0].mxu0
  %v821 = vadd.f32 0.0, %v820
  %v822 = vpop.f32.mrb[0].mxu0
  %v823 = vadd.f32 0.0, %v822
  %824 = vmatprep.mubr.bf16.mxu0 0
  %825 = vmatmul.mubr.bf16.gmra.mrb[0].mxu0 %v191
  %v826 = vpop.f32.mrb[0].mxu0
  %v827 = vadd.f32 0.0, %v826
  %v828 = vpop.f32.mrb[0].mxu0
  %v829 = vadd.f32 0.0, %v828
  %v830 = vpop.f32.mrb[0].mxu0
  %v831 = vadd.f32 0.0, %v830
  %v832 = vpop.f32.mrb[0].mxu0
  %v833 = vadd.f32 0.0, %v832
  %834 = vmatprep.mubr.bf16.mxu0 0
  %835 = vmatmul.mubr.bf16.gmra.mrb[0].mxu0 %v194
  %v836 = vpop.f32.mrb[0].mxu0
  %v837 = vadd.f32 0.0, %v836
  %v838 = vpop.f32.mrb[0].mxu0
  %v839 = vadd.f32 0.0, %v838
  %v840 = vpop.f32.mrb[0].mxu0
  %v841 = vadd.f32 0.0, %v840
  %v842 = vpop.f32.mrb[0].mxu0
  %v843 = vadd.f32 0.0, %v842
  %844 = vmatprep.mubr.bf16.mxu0 0
  %845 = vmatmul.mubr.bf16.gmra.mrb[0].mxu0 %v197
  %v846 = vpop.f32.mrb[0].mxu0
  %v847 = vadd.f32 0.0, %v846
  %v848 = vpop.f32.mrb[0].mxu0
  %v849 = vadd.f32 0.0, %v848
  %v850 = vpop.f32.mrb[0].mxu0
  %v851 = vadd.f32 0.0, %v850
  %v852 = vpop.f32.mrb[0].mxu0
  %v853 = vadd.f32 0.0, %v852
  %854 = vmatprep.mubr.bf16.mxu0 0
  %855 = vmatmul.mubr.bf16.gmra.mrb[0].mxu0 %v200
  %v856 = vpop.f32.mrb[0].mxu0
  %v857 = vadd.f32 0.0, %v856
  %v858 = vpop.f32.mrb[0].mxu0
  %v859 = vadd.f32 0.0, %v858
  %v860 = vpop.f32.mrb[0].mxu0
  %v861 = vadd.f32 0.0, %v860
  %v862 = vpop.f32.mrb[0].mxu0
  %v863 = vadd.f32 0.0, %v862
  %864 = vmatprep.mubr.bf16.mxu0 0
  %865 = vmatmul.mubr.bf16.gmra.mrb[0].mxu0 %v203
  %v866 = vpop.f32.mrb[0].mxu0
  %v867 = vadd.f32 0.0, %v866
  %v868 = vpop.f32.mrb[0].mxu0
  %v869 = vadd.f32 0.0, %v868
  %v870 = vpop.f32.mrb[0].mxu0
  %v871 = vadd.f32 0.0, %v870
  %v872 = vpop.f32.mrb[0].mxu0
  %v873 = vadd.f32 0.0, %v872
  %874 = vmatprep.mubr.bf16.mxu0 0
  %875 = vmatmul.mubr.bf16.gmra.mrb[0].mxu0 %v206
  %v876 = vpop.f32.mrb[0].mxu0
  %v877 = vadd.f32 0.0, %v876
  %v878 = vpop.f32.mrb[0].mxu0
  %v879 = vadd.f32 0.0, %v878
  %v880 = vpop.f32.mrb[0].mxu0
  %v881 = vadd.f32 0.0, %v880
  %v882 = vpop.f32.mrb[0].mxu0
  %v883 = vadd.f32 0.0, %v882
  %884 = vmatprep.mubr.bf16.mxu0 0
  %885 = vmatmul.mubr.bf16.gmra.mrb[0].mxu0 %v209
  %v886 = vpop.f32.mrb[0].mxu0
  %v887 = vadd.f32 0.0, %v886
  %v888 = vpop.f32.mrb[0].mxu0
  %v889 = vadd.f32 0.0, %v888
  %v890 = vpop.f32.mrb[0].mxu0
  %v891 = vadd.f32 0.0, %v890
  %v892 = vpop.f32.mrb[0].mxu0
  %v893 = vadd.f32 0.0, %v892
  %894 = vmatprep.mubr.bf16.mxu0 0
  %895 = vmatmul.mubr.bf16.gmra.mrb[0].mxu0 %v212
  %v896 = vpop.f32.mrb[0].mxu0
  %v897 = vadd.f32 0.0, %v896
  %v898 = vpop.f32.mrb[0].mxu0
  %v899 = vadd.f32 0.0, %v898
  %v900 = vpop.f32.mrb[0].mxu0
  %v901 = vadd.f32 0.0, %v900
  %v902 = vpop.f32.mrb[0].mxu0
  %v903 = vadd.f32 0.0, %v902
  %904 = vdwg.mxu0
  %905 = vst [vmem:[#allocation2] sm:$0xff] %v271
  %906 = vst [vmem:[#allocation2 + $0x8] sm:$0xff] %v273
  %907 = vst [vmem:[#allocation2 + $0x10] sm:$0xff] %v494
  %908 = vst [vmem:[#allocation2 + $0x18] sm:$0xff] %v496
  %909 = vst [vmem:[#allocation2 + $0x20] sm:$0xff] %v717
  %910 = vst [vmem:[#allocation2 + $0x28] sm:$0xff] %v719
  %911 = vst [vmem:[#allocation2 + $0x30] sm:$0xff] %v275
  %912 = vst [vmem:[#allocation2 + $0x38] sm:$0xff] %v277
  %913 = vst [vmem:[#allocation2 + $0x40] sm:$0xff] %v498
  %914 = vst [vmem:[#allocation2 + $0x48] sm:$0xff] %v500
  %915 = vst [vmem:[#allocation2 + $0x50] sm:$0xff] %v721
  %916 = vst [vmem:[#allocation2 + $0x58] sm:$0xff] %v723
  %917 = vst [vmem:[#allocation2 + $0x60] sm:$0xff] %v281
  %918 = vst [vmem:[#allocation2 + $0x68] sm:$0xff] %v283
  %919 = vst [vmem:[#allocation2 + $0x70] sm:$0xff] %v504
  %920 = vst [vmem:[#allocation2 + $0x78] sm:$0xff] %v506
  %921 = vst [vmem:[#allocation2 + $0x80] sm:$0xff] %v727
  %922 = vst [vmem:[#allocation2 + $0x88] sm:$0xff] %v729
  %923 = vst [vmem:[#allocation2 + $0x90] sm:$0xff] %v285
  %924 = vst [vmem:[#allocation2 + $0x98] sm:$0xff] %v287
  %925 = vst [vmem:[#allocation2 + $0xa0] sm:$0xff] %v508
  %926 = vst [vmem:[#allocation2 + $0xa8] sm:$0xff] %v510
  %927 = vst [vmem:[#allocation2 + $0xb0] sm:$0xff] %v731
  %928 = vst [vmem:[#allocation2 + $0xb8] sm:$0xff] %v733
  %929 = vst [vmem:[#allocation2 + $0xc0] sm:$0xff] %v291
  %930 = vst [vmem:[#allocation2 + $0xc8] sm:$0xff] %v293
  %931 = vst [vmem:[#allocation2 + $0xd0] sm:$0xff] %v514
  %932 = vst [vmem:[#allocation2 + $0xd8] sm:$0xff] %v516
  %933 = vst [vmem:[#allocation2 + $0xe0] sm:$0xff] %v737
  %934 = vst [vmem:[#allocation2 + $0xe8] sm:$0xff] %v739
  %935 = vst [vmem:[#allocation2 + $0xf0] sm:$0xff] %v295
  %936 = vst [vmem:[#allocation2 + $0xf8] sm:$0xff] %v297
  %937 = vst [vmem:[#allocation2 + $0x100] sm:$0xff] %v518
  %938 = vst [vmem:[#allocation2 + $0x108] sm:$0xff] %v520
  %939 = vst [vmem:[#allocation2 + $0x110] sm:$0xff] %v741
  %940 = vst [vmem:[#allocation2 + $0x118] sm:$0xff] %v743
  %941 = vst [vmem:[#allocation2 + $0x120] sm:$0xff] %v301
  %942 = vst [vmem:[#allocation2 + $0x128] sm:$0xff] %v303
  %943 = vst [vmem:[#allocation2 + $0x130] sm:$0xff] %v524
  %944 = vst [vmem:[#allocation2 + $0x138] sm:$0xff] %v526
  %945 = vst [vmem:[#allocation2 + $0x140] sm:$0xff] %v747
  %946 = vst [vmem:[#allocation2 + $0x148] sm:$0xff] %v749
  %947 = vst [vmem:[#allocation2 + $0x150] sm:$0xff] %v305
  %948 = vst [vmem:[#allocation2 + $0x158] sm:$0xff] %v307
  %949 = vst [vmem:[#allocation2 + $0x160] sm:$0xff] %v528
  %950 = vst [vmem:[#allocation2 + $0x168] sm:$0xff] %v530
  %951 = vst [vmem:[#allocation2 + $0x170] sm:$0xff] %v751
  %952 = vst [vmem:[#allocation2 + $0x178] sm:$0xff] %v753
  %953 = vst [vmem:[#allocation2 + $0x180] sm:$0xff] %v311
  %954 = vst [vmem:[#allocation2 + $0x188] sm:$0xff] %v313
  %955 = vst [vmem:[#allocation2 + $0x190] sm:$0xff] %v534
  %956 = vst [vmem:[#allocation2 + $0x198] sm:$0xff] %v536
  %957 = vst [vmem:[#allocation2 + $0x1a0] sm:$0xff] %v757
  %958 = vst [vmem:[#allocation2 + $0x1a8] sm:$0xff] %v759
  %959 = vst [vmem:[#allocation2 + $0x1b0] sm:$0xff] %v315
  %960 = vst [vmem:[#allocation2 + $0x1b8] sm:$0xff] %v317
  %961 = vst [vmem:[#allocation2 + $0x1c0] sm:$0xff] %v538
  %962 = vst [vmem:[#allocation2 + $0x1c8] sm:$0xff] %v540
  %963 = vst [vmem:[#allocation2 + $0x1d0] sm:$0xff] %v761
  %964 = vst [vmem:[#allocation2 + $0x1d8] sm:$0xff] %v763
  %965 = vst [vmem:[#allocation2 + $0x1e0] sm:$0xff] %v321
  %966 = vst [vmem:[#allocation2 + $0x1e8] sm:$0xff] %v323
  %967 = vst [vmem:[#allocation2 + $0x1f0] sm:$0xff] %v544
  %968 = vst [vmem:[#allocation2 + $0x1f8] sm:$0xff] %v546
  %969 = vst [vmem:[#allocation2 + $0x200] sm:$0xff] %v767
  %970 = vst [vmem:[#allocation2 + $0x208] sm:$0xff] %v769
  %971 = vst [vmem:[#allocation2 + $0x210] sm:$0xff] %v325
  %972 = vst [vmem:[#allocation2 + $0x218] sm:$0xff] %v327
  %973 = vst [vmem:[#allocation2 + $0x220] sm:$0xff] %v548
  %974 = vst [vmem:[#allocation2 + $0x228] sm:$0xff] %v550
  %975 = vst [vmem:[#allocation2 + $0x230] sm:$0xff] %v771
  %976 = vst [vmem:[#allocation2 + $0x238] sm:$0xff] %v773
  %977 = vst [vmem:[#allocation2 + $0x240] sm:$0xff] %v331
  %978 = vst [vmem:[#allocation2 + $0x248] sm:$0xff] %v333
  %979 = vst [vmem:[#allocation2 + $0x250] sm:$0xff] %v554
  %980 = vst [vmem:[#allocation2 + $0x258] sm:$0xff] %v556
  %981 = vst [vmem:[#allocation2 + $0x260] sm:$0xff] %v777
  %982 = vst [vmem:[#allocation2 + $0x268] sm:$0xff] %v779
  %983 = vst [vmem:[#allocation2 + $0x270] sm:$0xff] %v335
  %984 = vst [vmem:[#allocation2 + $0x278] sm:$0xff] %v337
  %985 = vst [vmem:[#allocation2 + $0x280] sm:$0xff] %v558
  %986 = vst [vmem:[#allocation2 + $0x288] sm:$0xff] %v560
  %987 = vst [vmem:[#allocation2 + $0x290] sm:$0xff] %v781
  %988 = vst [vmem:[#allocation2 + $0x298] sm:$0xff] %v783
  %989 = vst [vmem:[#allocation2 + $0x2a0] sm:$0xff] %v341
  %990 = vst [vmem:[#allocation2 + $0x2a8] sm:$0xff] %v343
  %991 = vst [vmem:[#allocation2 + $0x2b0] sm:$0xff] %v564
  %992 = vst [vmem:[#allocation2 + $0x2b8] sm:$0xff] %v566
  %993 = vst [vmem:[#allocation2 + $0x2c0] sm:$0xff] %v787
  %994 = vst [vmem:[#allocation2 + $0x2c8] sm:$0xff] %v789
  %995 = vst [vmem:[#allocation2 + $0x2d0] sm:$0xff] %v345
  %996 = vst [vmem:[#allocation2 + $0x2d8] sm:$0xff] %v347
  %997 = vst [vmem:[#allocation2 + $0x2e0] sm:$0xff] %v568
  %998 = vst [vmem:[#allocation2 + $0x2e8] sm:$0xff] %v570
  %999 = vst [vmem:[#allocation2 + $0x2f0] sm:$0xff] %v791
  %1000 = vst [vmem:[#allocation2 + $0x2f8] sm:$0xff] %v793
  %1001 = vst [vmem:[#allocation2 + $0x300] sm:$0xff] %v351
  %1002 = vst [vmem:[#allocation2 + $0x308] sm:$0xff] %v353
  %1003 = vst [vmem:[#allocation2 + $0x310] sm:$0xff] %v574
  %1004 = vst [vmem:[#allocation2 + $0x318] sm:$0xff] %v576
  %1005 = vst [vmem:[#allocation2 + $0x320] sm:$0xff] %v797
  %1006 = vst [vmem:[#allocation2 + $0x328] sm:$0xff] %v799
  %1007 = vst [vmem:[#allocation2 + $0x330] sm:$0xff] %v355
  %1008 = vst [vmem:[#allocation2 + $0x338] sm:$0xff] %v357
  %1009 = vst [vmem:[#allocation2 + $0x340] sm:$0xff] %v578
  %1010 = vst [vmem:[#allocation2 + $0x348] sm:$0xff] %v580
  %1011 = vst [vmem:[#allocation2 + $0x350] sm:$0xff] %v801
  %1012 = vst [vmem:[#allocation2 + $0x358] sm:$0xff] %v803
  %1013 = vst [vmem:[#allocation2 + $0x360] sm:$0xff] %v361
  %1014 = vst [vmem:[#allocation2 + $0x368] sm:$0xff] %v363
  %1015 = vst [vmem:[#allocation2 + $0x370] sm:$0xff] %v584
  %1016 = vst [vmem:[#allocation2 + $0x378] sm:$0xff] %v586
  %1017 = vst [vmem:[#allocation2 + $0x380] sm:$0xff] %v807
  %1018 = vst [vmem:[#allocation2 + $0x388] sm:$0xff] %v809
  %1019 = vst [vmem:[#allocation2 + $0x390] sm:$0xff] %v365
  %1020 = vst [vmem:[#allocation2 + $0x398] sm:$0xff] %v367
  %1021 = vst [vmem:[#allocation2 + $0x3a0] sm:$0xff] %v588
  %1022 = vst [vmem:[#allocation2 + $0x3a8] sm:$0xff] %v590
  %1023 = vst [vmem:[#allocation2 + $0x3b0] sm:$0xff] %v811
  %1024 = vst [vmem:[#allocation2 + $0x3b8] sm:$0xff] %v813
  %1025 = vst [vmem:[#allocation2 + $0x3c0] sm:$0xff] %v371
  %1026 = vst [vmem:[#allocation2 + $0x3c8] sm:$0xff] %v373
  %1027 = vst [vmem:[#allocation2 + $0x3d0] sm:$0xff] %v594
  %1028 = vst [vmem:[#allocation2 + $0x3d8] sm:$0xff] %v596
  %1029 = vst [vmem:[#allocation2 + $0x3e0] sm:$0xff] %v817
  %1030 = vst [vmem:[#allocation2 + $0x3e8] sm:$0xff] %v819
  %1031 = vst [vmem:[#allocation2 + $0x3f0] sm:$0xff] %v375
  %1032 = vst [vmem:[#allocation2 + $0x3f8] sm:$0xff] %v377
  %1033 = vst [vmem:[#allocation2 + $0x400] sm:$0xff] %v598
  %1034 = vst [vmem:[#allocation2 + $0x408] sm:$0xff] %v600
  %1035 = vst [vmem:[#allocation2 + $0x410] sm:$0xff] %v821
  %1036 = vst [vmem:[#allocation2 + $0x418] sm:$0xff] %v823
  %1037 = vst [vmem:[#allocation2 + $0x420] sm:$0xff] %v381
  %1038 = vst [vmem:[#allocation2 + $0x428] sm:$0xff] %v383
  %1039 = vst [vmem:[#allocation2 + $0x430] sm:$0xff] %v604
  %1040 = vst [vmem:[#allocation2 + $0x438] sm:$0xff] %v606
  %1041 = vst [vmem:[#allocation2 + $0x440] sm:$0xff] %v827
  %1042 = vst [vmem:[#allocation2 + $0x448] sm:$0xff] %v829
  %1043 = vst [vmem:[#allocation2 + $0x450] sm:$0xff] %v385
  %1044 = vst [vmem:[#allocation2 + $0x458] sm:$0xff] %v387
  %1045 = vst [vmem:[#allocation2 + $0x460] sm:$0xff] %v608
  %1046 = vst [vmem:[#allocation2 + $0x468] sm:$0xff] %v610
  %1047 = vst [vmem:[#allocation2 + $0x470] sm:$0xff] %v831
  %1048 = vst [vmem:[#allocation2 + $0x478] sm:$0xff] %v833
  %1049 = vst [vmem:[#allocation2 + $0x480] sm:$0xff] %v391
  %1050 = vst [vmem:[#allocation2 + $0x488] sm:$0xff] %v393
  %1051 = vst [vmem:[#allocation2 + $0x490] sm:$0xff] %v614
  %1052 = vst [vmem:[#allocation2 + $0x498] sm:$0xff] %v616
  %1053 = vst [vmem:[#allocation2 + $0x4a0] sm:$0xff] %v837
  %1054 = vst [vmem:[#allocation2 + $0x4a8] sm:$0xff] %v839
  %1055 = vst [vmem:[#allocation2 + $0x4b0] sm:$0xff] %v395
  %1056 = vst [vmem:[#allocation2 + $0x4b8] sm:$0xff] %v397
  %1057 = vst [vmem:[#allocation2 + $0x4c0] sm:$0xff] %v618
  %1058 = vst [vmem:[#allocation2 + $0x4c8] sm:$0xff] %v620
  %1059 = vst [vmem:[#allocation2 + $0x4d0] sm:$0xff] %v841
  %1060 = vst [vmem:[#allocation2 + $0x4d8] sm:$0xff] %v843
  %1061 = vst [vmem:[#allocation2 + $0x4e0] sm:$0xff] %v401
  %1062 = vst [vmem:[#allocation2 + $0x4e8] sm:$0xff] %v403
  %1063 = vst [vmem:[#allocation2 + $0x4f0] sm:$0xff] %v624
  %1064 = vst [vmem:[#allocation2 + $0x4f8] sm:$0xff] %v626
  %1065 = vst [vmem:[#allocation2 + $0x500] sm:$0xff] %v847
  %1066 = vst [vmem:[#allocation2 + $0x508] sm:$0xff] %v849
  %1067 = vst [vmem:[#allocation2 + $0x510] sm:$0xff] %v405
  %1068 = vst [vmem:[#allocation2 + $0x518] sm:$0xff] %v407
  %1069 = vst [vmem:[#allocation2 + $0x520] sm:$0xff] %v628
  %1070 = vst [vmem:[#allocation2 + $0x528] sm:$0xff] %v630
  %1071 = vst [vmem:[#allocation2 + $0x530] sm:$0xff] %v851
  %1072 = vst [vmem:[#allocation2 + $0x538] sm:$0xff] %v853
  %1073 = vst [vmem:[#allocation2 + $0x540] sm:$0xff] %v411
  %1074 = vst [vmem:[#allocation2 + $0x548] sm:$0xff] %v413
  %1075 = vst [vmem:[#allocation2 + $0x550] sm:$0xff] %v634
  %1076 = vst [vmem:[#allocation2 + $0x558] sm:$0xff] %v636
  %1077 = vst [vmem:[#allocation2 + $0x560] sm:$0xff] %v857
  %1078 = vst [vmem:[#allocation2 + $0x568] sm:$0xff] %v859
  %1079 = vst [vmem:[#allocation2 + $0x570] sm:$0xff] %v415
  %1080 = vst [vmem:[#allocation2 + $0x578] sm:$0xff] %v417
  %1081 = vst [vmem:[#allocation2 + $0x580] sm:$0xff] %v638
  %1082 = vst [vmem:[#allocation2 + $0x588] sm:$0xff] %v640
  %1083 = vst [vmem:[#allocation2 + $0x590] sm:$0xff] %v861
  %1084 = vst [vmem:[#allocation2 + $0x598] sm:$0xff] %v863
  %1085 = vst [vmem:[#allocation2 + $0x5a0] sm:$0xff] %v421
  %1086 = vst [vmem:[#allocation2 + $0x5a8] sm:$0xff] %v423
  %1087 = vst [vmem:[#allocation2 + $0x5b0] sm:$0xff] %v644
  %1088 = vst [vmem:[#allocation2 + $0x5b8] sm:$0xff] %v646
  %1089 = vst [vmem:[#allocation2 + $0x5c0] sm:$0xff] %v867
  %1090 = vst [vmem:[#allocation2 + $0x5c8] sm:$0xff] %v869
  %1091 = vst [vmem:[#allocation2 + $0x5d0] sm:$0xff] %v425
  %1092 = vst [vmem:[#allocation2 + $0x5d8] sm:$0xff] %v427
  %1093 = vst [vmem:[#allocation2 + $0x5e0] sm:$0xff] %v648
  %1094 = vst [vmem:[#allocation2 + $0x5e8] sm:$0xff] %v650
  %1095 = vst [vmem:[#allocation2 + $0x5f0] sm:$0xff] %v871
  %1096 = vst [vmem:[#allocation2 + $0x5f8] sm:$0xff] %v873
  %1097 = vst [vmem:[#allocation2 + $0x600] sm:$0xff] %v431
  %1098 = vst [vmem:[#allocation2 + $0x608] sm:$0xff] %v433
  %1099 = vst [vmem:[#allocation2 + $0x610] sm:$0xff] %v654
  %1100 = vst [vmem:[#allocation2 + $0x618] sm:$0xff] %v656
  %1101 = vst [vmem:[#allocation2 + $0x620] sm:$0xff] %v877
  %1102 = vst [vmem:[#allocation2 + $0x628] sm:$0xff] %v879
  %1103 = vst [vmem:[#allocation2 + $0x630] sm:$0xff] %v435
  %1104 = vst [vmem:[#allocation2 + $0x638] sm:$0xff] %v437
  %1105 = vst [vmem:[#allocation2 + $0x640] sm:$0xff] %v658
  %1106 = vst [vmem:[#allocation2 + $0x648] sm:$0xff] %v660
  %1107 = vst [vmem:[#allocation2 + $0x650] sm:$0xff] %v881
  %1108 = vst [vmem:[#allocation2 + $0x658] sm:$0xff] %v883
  %1109 = vst [vmem:[#allocation2 + $0x660] sm:$0xff] %v441
  %1110 = vst [vmem:[#allocation2 + $0x668] sm:$0xff] %v443
  %1111 = vst [vmem:[#allocation2 + $0x670] sm:$0xff] %v664
  %1112 = vst [vmem:[#allocation2 + $0x678] sm:$0xff] %v666
  %1113 = vst [vmem:[#allocation2 + $0x680] sm:$0xff] %v887
  %1114 = vst [vmem:[#allocation2 + $0x688] sm:$0xff] %v889
  %1115 = vst [vmem:[#allocation2 + $0x690] sm:$0xff] %v445
  %1116 = vst [vmem:[#allocation2 + $0x698] sm:$0xff] %v447
  %1117 = vst [vmem:[#allocation2 + $0x6a0] sm:$0xff] %v668
  %1118 = vst [vmem:[#allocation2 + $0x6a8] sm:$0xff] %v670
  %1119 = vst [vmem:[#allocation2 + $0x6b0] sm:$0xff] %v891
  %1120 = vst [vmem:[#allocation2 + $0x6b8] sm:$0xff] %v893
  %1121 = vst [vmem:[#allocation2 + $0x6c0] sm:$0xff] %v451
  %1122 = vst [vmem:[#allocation2 + $0x6c8] sm:$0xff] %v453
  %1123 = vst [vmem:[#allocation2 + $0x6d0] sm:$0xff] %v674
  %1124 = vst [vmem:[#allocation2 + $0x6d8] sm:$0xff] %v676
  %1125 = vst [vmem:[#allocation2 + $0x6e0] sm:$0xff] %v897
  %1126 = vst [vmem:[#allocation2 + $0x6e8] sm:$0xff] %v899
  %1127 = vst [vmem:[#allocation2 + $0x6f0] sm:$0xff] %v455
  %1128 = vst [vmem:[#allocation2 + $0x6f8] sm:$0xff] %v457
  %1129 = vst [vmem:[#allocation2 + $0x700] sm:$0xff] %v678
  %1130 = vst [vmem:[#allocation2 + $0x708] sm:$0xff] %v680
  %1131 = vst [vmem:[#allocation2 + $0x710] sm:$0xff] %v901
  %1132 = vst [vmem:[#allocation2 + $0x718] sm:$0xff] %v903
  %v1133 = vld [vmem:[%s1] sm:$0xf]
  %v1134 = vld [vmem:[%s1 + $0x4] sm:$0xf]
  %v1135 = vld [vmem:[%s1 + $0x8] sm:$0xf]
  %v1136 = vld [vmem:[%s1 + $0xc] sm:$0xf]
  %v1141 = vunpack.c.l.b16 %v1133
  %v1142 = vunpack.c.l.b16 %v1134
  %v1143 = vunpack.c.l.b16 %v1135
  %v1144 = vunpack.c.l.b16 %v1136
  %v1145 = vpack.c.b16 %v1142, %v1141
  %v1146 = vpack.c.b16 %v1144, %v1143
  %v1149 = vand.u32 %v1146, %v217
  %1151 = vmatprep.subr.bf16.mxu0 0
  %1152 = vmatpush1.bf16.msra.mxu0 %v1145
  %1153 = vmatprep.subr.bf16.mxu0 0
  %1154 = vmatpush1.bf16.msra.mxu0 %v1149
  %1155 = vmatprep.subr.bf16.mxu0 0
  %1156 = vmatpush1.bf16.msra.mxu0 0
  %1157 = vmatprep.subr.bf16.mxu0 0
  %1158 = vmatpush1.bf16.msra.mxu0 0
  %1159 = vmatprep.subr.bf16.mxu0 0
  %1160 = vmatpush1.bf16.msra.mxu0 0
  %1161 = vmatprep.subr.bf16.mxu0 0
  %1162 = vmatpush1.bf16.msra.mxu0 0
  %1163 = vmatprep.subr.bf16.mxu0 0
  %1164 = vmatpush1.bf16.msra.mxu0 0
  %1165 = vmatprep.subr.bf16.mxu0 0
  %1166 = vmatpush1.bf16.msra.mxu0 0
  %1167 = vmatprep.subr.bf16.mxu0 0
  %1168 = vmatpush1.bf16.msra.mxu0 0
  %1169 = vmatprep.subr.bf16.mxu0 0
  %1170 = vmatpush1.bf16.msra.mxu0 0
  %1171 = vmatprep.subr.bf16.mxu0 0
  %1172 = vmatpush1.bf16.msra.mxu0 0
  %1173 = vmatprep.subr.bf16.mxu0 0
  %1174 = vmatpush1.bf16.msra.mxu0 0
  %1175 = vmatprep.subr.bf16.mxu0 0
  %1176 = vmatpush1.bf16.msra.mxu0 0
  %1177 = vmatprep.subr.bf16.mxu0 0
  %1178 = vmatpush1.bf16.msra.mxu0 0
  %1179 = vmatprep.subr.bf16.mxu0 0
  %1180 = vmatpush1.bf16.msra.mxu0 0
  %1181 = vmatprep.subr.bf16.mxu0 0
  %1182 = vmatpush1.bf16.msra.mxu0 0
  %1183 = vmatprep.mubr.bf16.mxu0 0
  %1184 = vmatmul.mubr.bf16.gmra.mrb[0].mxu0 %v158
  %v1185 = vpop.f32.mrb[0].mxu0
  %v1186 = vadd.f32 0.0, %v1185
  %v1187 = vpop.f32.mrb[0].mxu0
  %v1188 = vpop.f32.mrb[0].mxu0
  %v1189 = vadd.f32 0.0, %v1188
  %v1190 = vpop.f32.mrb[0].mxu0
  %1191 = vmatprep.mubr.bf16.mxu0 0
  %1192 = vmatmul.mubr.bf16.gmra.mrb[0].mxu0 %v161
  %v1193 = vpop.f32.mrb[0].mxu0
  %v1194 = vadd.f32 0.0, %v1193
  %v1195 = vpop.f32.mrb[0].mxu0
  %v1196 = vpop.f32.mrb[0].mxu0
  %v1197 = vadd.f32 0.0, %v1196
  %v1198 = vpop.f32.mrb[0].mxu0
  %1199 = vmatprep.mubr.bf16.mxu0 0
  %1200 = vmatmul.mubr.bf16.gmra.mrb[0].mxu0 %v164
  %v1201 = vpop.f32.mrb[0].mxu0
  %v1202 = vadd.f32 0.0, %v1201
  %v1203 = vpop.f32.mrb[0].mxu0
  %v1204 = vpop.f32.mrb[0].mxu0
  %v1205 = vadd.f32 0.0, %v1204
  %v1206 = vpop.f32.mrb[0].mxu0
  %1207 = vmatprep.mubr.bf16.mxu0 0
  %1208 = vmatmul.mubr.bf16.gmra.mrb[0].mxu0 %v167
  %v1209 = vpop.f32.mrb[0].mxu0
  %v1210 = vadd.f32 0.0, %v1209
  %v1211 = vpop.f32.mrb[0].mxu0
  %v1212 = vpop.f32.mrb[0].mxu0
  %v1213 = vadd.f32 0.0, %v1212
  %v1214 = vpop.f32.mrb[0].mxu0
  %1215 = vmatprep.mubr.bf16.mxu0 0
  %1216 = vmatmul.mubr.bf16.gmra.mrb[0].mxu0 %v170
  %v1217 = vpop.f32.mrb[0].mxu0
  %v1218 = vadd.f32 0.0, %v1217
  %v1219 = vpop.f32.mrb[0].mxu0
  %v1220 = vpop.f32.mrb[0].mxu0
  %v1221 = vadd.f32 0.0, %v1220
  %v1222 = vpop.f32.mrb[0].mxu0
  %1223 = vmatprep.mubr.bf16.mxu0 0
  %1224 = vmatmul.mubr.bf16.gmra.mrb[0].mxu0 %v173
  %v1225 = vpop.f32.mrb[0].mxu0
  %v1226 = vadd.f32 0.0, %v1225
  %v1227 = vpop.f32.mrb[0].mxu0
  %v1228 = vpop.f32.mrb[0].mxu0
  %v1229 = vadd.f32 0.0, %v1228
  %v1230 = vpop.f32.mrb[0].mxu0
  %1231 = vmatprep.mubr.bf16.mxu0 0
  %1232 = vmatmul.mubr.bf16.gmra.mrb[0].mxu0 %v176
  %v1233 = vpop.f32.mrb[0].mxu0
  %v1234 = vadd.f32 0.0, %v1233
  %v1235 = vpop.f32.mrb[0].mxu0
  %v1236 = vpop.f32.mrb[0].mxu0
  %v1237 = vadd.f32 0.0, %v1236
  %v1238 = vpop.f32.mrb[0].mxu0
  %1239 = vmatprep.mubr.bf16.mxu0 0
  %1240 = vmatmul.mubr.bf16.gmra.mrb[0].mxu0 %v179
  %v1241 = vpop.f32.mrb[0].mxu0
  %v1242 = vadd.f32 0.0, %v1241
  %v1243 = vpop.f32.mrb[0].mxu0
  %v1244 = vpop.f32.mrb[0].mxu0
  %v1245 = vadd.f32 0.0, %v1244
  %v1246 = vpop.f32.mrb[0].mxu0
  %1247 = vmatprep.mubr.bf16.mxu0 0
  %1248 = vmatmul.mubr.bf16.gmra.mrb[0].mxu0 %v182
  %v1249 = vpop.f32.mrb[0].mxu0
  %v1250 = vadd.f32 0.0, %v1249
  %v1251 = vpop.f32.mrb[0].mxu0
  %v1252 = vpop.f32.mrb[0].mxu0
  %v1253 = vadd.f32 0.0, %v1252
  %v1254 = vpop.f32.mrb[0].mxu0
  %1255 = vmatprep.mubr.bf16.mxu0 0
  %1256 = vmatmul.mubr.bf16.gmra.mrb[0].mxu0 %v185
  %v1257 = vpop.f32.mrb[0].mxu0
  %v1258 = vadd.f32 0.0, %v1257
  %v1259 = vpop.f32.mrb[0].mxu0
  %v1260 = vpop.f32.mrb[0].mxu0
  %v1261 = vadd.f32 0.0, %v1260
  %v1262 = vpop.f32.mrb[0].mxu0
  %1263 = vmatprep.mubr.bf16.mxu0 0
  %1264 = vmatmul.mubr.bf16.gmra.mrb[0].mxu0 %v188
  %v1265 = vpop.f32.mrb[0].mxu0
  %v1266 = vadd.f32 0.0, %v1265
  %v1267 = vpop.f32.mrb[0].mxu0
  %v1268 = vpop.f32.mrb[0].mxu0
  %v1269 = vadd.f32 0.0, %v1268
  %v1270 = vpop.f32.mrb[0].mxu0
  %1271 = vmatprep.mubr.bf16.mxu0 0
  %1272 = vmatmul.mubr.bf16.gmra.mrb[0].mxu0 %v191
  %v1273 = vpop.f32.mrb[0].mxu0
  %v1274 = vadd.f32 0.0, %v1273
  %v1275 = vpop.f32.mrb[0].mxu0
  %v1276 = vpop.f32.mrb[0].mxu0
  %v1277 = vadd.f32 0.0, %v1276
  %v1278 = vpop.f32.mrb[0].mxu0
  %1279 = vmatprep.mubr.bf16.mxu0 0
  %1280 = vmatmul.mubr.bf16.gmra.mrb[0].mxu0 %v194
  %v1281 = vpop.f32.mrb[0].mxu0
  %v1282 = vadd.f32 0.0, %v1281
  %v1283 = vpop.f32.mrb[0].mxu0
  %v1284 = vpop.f32.mrb[0].mxu0
  %v1285 = vadd.f32 0.0, %v1284
  %v1286 = vpop.f32.mrb[0].mxu0
  %1287 = vmatprep.mubr.bf16.mxu0 0
  %1288 = vmatmul.mubr.bf16.gmra.mrb[0].mxu0 %v197
  %v1289 = vpop.f32.mrb[0].mxu0
  %v1290 = vadd.f32 0.0, %v1289
  %v1291 = vpop.f32.mrb[0].mxu0
  %v1292 = vpop.f32.mrb[0].mxu0
  %v1293 = vadd.f32 0.0, %v1292
  %v1294 = vpop.f32.mrb[0].mxu0
  %1295 = vmatprep.mubr.bf16.mxu0 0
  %1296 = vmatmul.mubr.bf16.gmra.mrb[0].mxu0 %v200
  %v1297 = vpop.f32.mrb[0].mxu0
  %v1298 = vadd.f32 0.0, %v1297
  %v1299 = vpop.f32.mrb[0].mxu0
  %v1300 = vpop.f32.mrb[0].mxu0
  %v1301 = vadd.f32 0.0, %v1300
  %v1302 = vpop.f32.mrb[0].mxu0
  %1303 = vmatprep.mubr.bf16.mxu0 0
  %1304 = vmatmul.mubr.bf16.gmra.mrb[0].mxu0 %v203
  %v1305 = vpop.f32.mrb[0].mxu0
  %v1306 = vadd.f32 0.0, %v1305
  %v1307 = vpop.f32.mrb[0].mxu0
  %v1308 = vpop.f32.mrb[0].mxu0
  %v1309 = vadd.f32 0.0, %v1308
  %v1310 = vpop.f32.mrb[0].mxu0
  %1311 = vmatprep.mubr.bf16.mxu0 0
  %1312 = vmatmul.mubr.bf16.gmra.mrb[0].mxu0 %v206
  %v1313 = vpop.f32.mrb[0].mxu0
  %v1314 = vadd.f32 0.0, %v1313
  %v1315 = vpop.f32.mrb[0].mxu0
  %v1316 = vpop.f32.mrb[0].mxu0
  %v1317 = vadd.f32 0.0, %v1316
  %v1318 = vpop.f32.mrb[0].mxu0
  %1319 = vmatprep.mubr.bf16.mxu0 0
  %1320 = vmatmul.mubr.bf16.gmra.mrb[0].mxu0 %v209
  %v1321 = vpop.f32.mrb[0].mxu0
  %v1322 = vadd.f32 0.0, %v1321
  %v1323 = vpop.f32.mrb[0].mxu0
  %v1324 = vpop.f32.mrb[0].mxu0
  %v1325 = vadd.f32 0.0, %v1324
  %v1326 = vpop.f32.mrb[0].mxu0
  %1327 = vmatprep.mubr.bf16.mxu0 0
  %1328 = vmatmul.mubr.bf16.gmra.mrb[0].mxu0 %v212
  %v1329 = vpop.f32.mrb[0].mxu0
  %v1330 = vadd.f32 0.0, %v1329
  %v1331 = vpop.f32.mrb[0].mxu0
  %v1332 = vpop.f32.mrb[0].mxu0
  %v1333 = vadd.f32 0.0, %v1332
  %v1334 = vpop.f32.mrb[0].mxu0
  %1335 = vdwg.mxu0
  %v1336 = vtanh.pop %v1186
  %v1337 = vtanh.pop %v1189
  %v1338 = vtanh.pop %v1194
  %v1339 = vtanh.pop %v1197
  %v1340 = vtanh.pop %v1202
  %v1341 = vtanh.pop %v1205
  %v1342 = vtanh.pop %v1210
  %v1343 = vtanh.pop %v1213
  %v1344 = vtanh.pop %v1218
  %v1345 = vtanh.pop %v1221
  %v1346 = vtanh.pop %v1226
  %v1347 = vtanh.pop %v1229
  %v1348 = vtanh.pop %v1234
  %v1349 = vtanh.pop %v1237
  %v1350 = vtanh.pop %v1242
  %v1351 = vtanh.pop %v1245
  %v1352 = vtanh.pop %v1250
  %v1353 = vtanh.pop %v1253
  %v1354 = vtanh.pop %v1258
  %v1355 = vtanh.pop %v1261
  %v1356 = vtanh.pop %v1266
  %v1357 = vtanh.pop %v1269
  %v1358 = vtanh.pop %v1274
  %v1359 = vtanh.pop %v1277
  %v1360 = vtanh.pop %v1282
  %v1361 = vtanh.pop %v1285
  %v1362 = vtanh.pop %v1290
  %v1363 = vtanh.pop %v1293
  %v1364 = vtanh.pop %v1298
  %v1365 = vtanh.pop %v1301
  %v1366 = vtanh.pop %v1306
  %v1367 = vtanh.pop %v1309
  %v1368 = vtanh.pop %v1314
  %v1369 = vtanh.pop %v1317
  %v1370 = vtanh.pop %v1322
  %v1371 = vtanh.pop %v1325
  %v1372 = vtanh.pop %v1330
  %v1373 = vtanh.pop %v1333
  %v1374 = vpack.c.bf16 %v1337, %v1336
  %v1375 = vpack.c.bf16 %v1339, %v1338
  %v1376 = vpack.c.bf16 %v1341, %v1340
  %v1377 = vpack.c.bf16 %v1343, %v1342
  %v1378 = vpack.c.bf16 %v1345, %v1344
  %v1379 = vpack.c.bf16 %v1347, %v1346
  %v1380 = vpack.c.bf16 %v1349, %v1348
  %v1381 = vpack.c.bf16 %v1351, %v1350
  %v1382 = vpack.c.bf16 %v1353, %v1352
  %v1383 = vpack.c.bf16 %v1355, %v1354
  %v1384 = vpack.c.bf16 %v1357, %v1356
  %v1385 = vpack.c.bf16 %v1359, %v1358
  %v1386 = vpack.c.bf16 %v1361, %v1360
  %v1387 = vpack.c.bf16 %v1363, %v1362
  %v1388 = vpack.c.bf16 %v1365, %v1364
  %v1389 = vpack.c.bf16 %v1367, %v1366
  %v1390 = vpack.c.bf16 %v1369, %v1368
  %v1391 = vpack.c.bf16 %v1371, %v1370
  %v1392 = vpack.c.bf16 %v1373, %v1372
  %v1393 = vld [vmem:[%s3] sm:$0xf]
  %v1394 = vld [vmem:[%s3 + $0x4] sm:$0xf]
  %v1395 = vld [vmem:[%s3 + $0x8] sm:$0xf]
  %v1396 = vld [vmem:[%s3 + $0xc] sm:$0xf]
  %v1397 = vld [vmem:[%s3 + $0x10] sm:$0xf]
  %v1398 = vld [vmem:[%s3 + $0x14] sm:$0xf]
  %v1399 = vld [vmem:[%s3 + $0x18] sm:$0xf]
  %v1400 = vld [vmem:[%s3 + $0x1c] sm:$0xf]
  %v1401 = vld [vmem:[%s3 + $0x20] sm:$0xf]
  %v1402 = vld [vmem:[%s3 + $0x24] sm:$0xf]
  %v1403 = vld [vmem:[%s3 + $0x28] sm:$0xf]
  %v1404 = vld [vmem:[%s3 + $0x2c] sm:$0xf]
  %v1405 = vld [vmem:[%s3 + $0x30] sm:$0xf]
  %v1406 = vld [vmem:[%s3 + $0x34] sm:$0xf]
  %v1407 = vld [vmem:[%s3 + $0x38] sm:$0xf]
  %v1408 = vld [vmem:[%s3 + $0x3c] sm:$0xf]
  %v1409 = vld [vmem:[#allocation2] sm:$0xff]
  %v1410 = vld [vmem:[#allocation2 + $0x30] sm:$0xff]
  %v1411 = vld [vmem:[#allocation2 + $0x60] sm:$0xff]
  %v1412 = vld [vmem:[#allocation2 + $0x90] sm:$0xff]
  %v1413 = vld [vmem:[#allocation2 + $0xc0] sm:$0xff]
  %v1414 = vld [vmem:[#allocation2 + $0xf0] sm:$0xff]
  %v1415 = vld [vmem:[#allocation2 + $0x120] sm:$0xff]
  %v1416 = vld [vmem:[#allocation2 + $0x150] sm:$0xff]
  %v1417 = vld [vmem:[#allocation2 + $0x180] sm:$0xff]
  %v1418 = vld [vmem:[#allocation2 + $0x1b0] sm:$0xff]
  %v1419 = vld [vmem:[#allocation2 + $0x1e0] sm:$0xff]
  %v1420 = vld [vmem:[#allocation2 + $0x210] sm:$0xff]
  %v1421 = vld [vmem:[#allocation2 + $0x240] sm:$0xff]
  %v1422 = vld [vmem:[#allocation2 + $0x270] sm:$0xff]
  %v1423 = vld [vmem:[#allocation2 + $0x2a0] sm:$0xff]
  %v1424 = vld [vmem:[#allocation2 + $0x2d0] sm:$0xff]
  %v1425 = vld [vmem:[#allocation2 + $0x300] sm:$0xff]
  %v1426 = vld [vmem:[#allocation2 + $0x330] sm:$0xff]
  %v1427 = vld [vmem:[#allocation2 + $0x360] sm:$0xff]
  %v1428 = vld [vmem:[#allocation2 + $0x390] sm:$0xff]
  %v1429 = vld [vmem:[#allocation2 + $0x3c0] sm:$0xff]
  %v1430 = vld [vmem:[#allocation2 + $0x3f0] sm:$0xff]
  %v1431 = vld [vmem:[#allocation2 + $0x420] sm:$0xff]
  %v1432 = vld [vmem:[#allocation2 + $0x450] sm:$0xff]
  %v1433 = vld [vmem:[#allocation2 + $0x480] sm:$0xff]
  %v1434 = vld [vmem:[#allocation2 + $0x4b0] sm:$0xff]
  %v1435 = vld [vmem:[#allocation2 + $0x4e0] sm:$0xff]
  %v1436 = vld [vmem:[#allocation2 + $0x510] sm:$0xff]
  %v1437 = vld [vmem:[#allocation2 + $0x540] sm:$0xff]
  %v1438 = vld [vmem:[#allocation2 + $0x570] sm:$0xff]
  %v1439 = vld [vmem:[#allocation2 + $0x5a0] sm:$0xff]
  %v1440 = vld [vmem:[#allocation2 + $0x5d0] sm:$0xff]
  %v1441 = vld [vmem:[#allocation2 + $0x600] sm:$0xff]
  %v1442 = vld [vmem:[#allocation2 + $0x630] sm:$0xff]
  %v1443 = vld [vmem:[#allocation2 + $0x660] sm:$0xff]
  %v1444 = vld [vmem:[#allocation2 + $0x690] sm:$0xff]
  %v1445 = vld [vmem:[#allocation2 + $0x6c0] sm:$0xff]
  %v1446 = vld [vmem:[#allocation2 + $0x6f0] sm:$0xff]
  %v1463 = vunpack.c.l.b16 %v1393
  %v1464 = vunpack.c.l.b16 %v1394
  %v1465 = vunpack.c.l.b16 %v1395
  %v1466 = vunpack.c.l.b16 %v1396
  %v1467 = vunpack.c.l.b16 %v1397
  %v1468 = vunpack.c.l.b16 %v1398
  %v1469 = vunpack.c.l.b16 %v1399
  %v1470 = vunpack.c.l.b16 %v1400
  %v1471 = vunpack.c.l.b16 %v1401
  %v1472 = vunpack.c.l.b16 %v1402
  %v1473 = vunpack.c.l.b16 %v1403
  %v1474 = vunpack.c.l.b16 %v1404
  %v1475 = vunpack.c.l.b16 %v1405
  %v1476 = vunpack.c.l.b16 %v1406
  %v1477 = vunpack.c.l.b16 %v1407
  %v1478 = vunpack.c.l.b16 %v1408
  %v1479 = vpack.c.b16 %v1464, %v1463
  %v1480 = vpack.c.b16 %v1466, %v1465
  %v1481 = vpack.c.b16 %v1468, %v1467
  %v1482 = vpack.c.b16 %v1470, %v1469
  %v1483 = vpack.c.b16 %v1472, %v1471
  %v1484 = vpack.c.b16 %v1474, %v1473
  %v1485 = vpack.c.b16 %v1476, %v1475
  %v1486 = vpack.c.b16 %v1478, %v1477
  %1495 = vmatprep.subr.bf16.mxu0 0
  %1496 = vmatpush1.bf16.msra.mxu0 %v1479
  %1497 = vmatprep.subr.bf16.mxu0 0
  %1498 = vmatpush1.bf16.msra.mxu0 %v1480
  %1499 = vmatprep.subr.bf16.mxu0 0
  %1500 = vmatpush1.bf16.msra.mxu0 %v1481
  %1501 = vmatprep.subr.bf16.mxu0 0
  %1502 = vmatpush1.bf16.msra.mxu0 %v1482
  %1503 = vmatprep.subr.bf16.mxu0 0
  %1504 = vmatpush1.bf16.msra.mxu0 %v1483
  %1505 = vmatprep.subr.bf16.mxu0 0
  %1506 = vmatpush1.bf16.msra.mxu0 %v1484
  %1507 = vmatprep.subr.bf16.mxu0 0
  %1508 = vmatpush1.bf16.msra.mxu0 %v1485
  %1509 = vmatprep.subr.bf16.mxu0 0
  %1510 = vmatpush1.bf16.msra.mxu0 %v1486
  %1511 = vmatprep.subr.bf16.mxu0 0
  %1512 = vmatpush1.bf16.msra.mxu0 0
  %1513 = vmatprep.subr.bf16.mxu0 0
  %1514 = vmatpush1.bf16.msra.mxu0 0
  %1515 = vmatprep.subr.bf16.mxu0 0
  %1516 = vmatpush1.bf16.msra.mxu0 0
  %1517 = vmatprep.subr.bf16.mxu0 0
  %1518 = vmatpush1.bf16.msra.mxu0 0
  %1519 = vmatprep.subr.bf16.mxu0 0
  %1520 = vmatpush1.bf16.msra.mxu0 0
  %1521 = vmatprep.subr.bf16.mxu0 0
  %1522 = vmatpush1.bf16.msra.mxu0 0
  %1523 = vmatprep.subr.bf16.mxu0 0
  %1524 = vmatpush1.bf16.msra.mxu0 0
  %1525 = vmatprep.subr.bf16.mxu0 0
  %1526 = vmatpush1.bf16.msra.mxu0 0
  %1527 = vmatprep.mubr.bf16.mxu0 0
  %1528 = vmatmul.mubr.bf16.gmra.mrb[0].mxu0 %v1374
  %v1529 = vpop.f32.mrb[0].mxu0
  %v1530 = vadd.f32 %v1409, %v1529
  %v1531 = vpop.f32.mrb[0].mxu0
  %v1532 = vpop.f32.mrb[0].mxu0
  %v1533 = vadd.f32 %v1410, %v1532
  %v1534 = vpop.f32.mrb[0].mxu0
  %1535 = vmatprep.mubr.bf16.mxu0 0
  %1536 = vmatmul.mubr.bf16.gmra.mrb[0].mxu0 %v1375
  %v1537 = vpop.f32.mrb[0].mxu0
  %v1538 = vadd.f32 %v1411, %v1537
  %v1539 = vpop.f32.mrb[0].mxu0
  %v1540 = vpop.f32.mrb[0].mxu0
  %v1541 = vadd.f32 %v1412, %v1540
  %v1542 = vpop.f32.mrb[0].mxu0
  %1543 = vmatprep.mubr.bf16.mxu0 0
  %1544 = vmatmul.mubr.bf16.gmra.mrb[0].mxu0 %v1376
  %v1545 = vpop.f32.mrb[0].mxu0
  %v1546 = vadd.f32 %v1413, %v1545
  %v1547 = vpop.f32.mrb[0].mxu0
  %v1548 = vpop.f32.mrb[0].mxu0
  %v1549 = vadd.f32 %v1414, %v1548
  %v1550 = vpop.f32.mrb[0].mxu0
  %1551 = vmatprep.mubr.bf16.mxu0 0
  %1552 = vmatmul.mubr.bf16.gmra.mrb[0].mxu0 %v1377
  %v1553 = vpop.f32.mrb[0].mxu0
  %v1554 = vadd.f32 %v1415, %v1553
  %v1555 = vpop.f32.mrb[0].mxu0
  %v1556 = vpop.f32.mrb[0].mxu0
  %v1557 = vadd.f32 %v1416, %v1556
  %v1558 = vpop.f32.mrb[0].mxu0
  %1559 = vmatprep.mubr.bf16.mxu0 0
  %1560 = vmatmul.mubr.bf16.gmra.mrb[0].mxu0 %v1378
  %v1561 = vpop.f32.mrb[0].mxu0
  %v1562 = vadd.f32 %v1417, %v1561
  %v1563 = vpop.f32.mrb[0].mxu0
  %v1564 = vpop.f32.mrb[0].mxu0
  %v1565 = vadd.f32 %v1418, %v1564
  %v1566 = vpop.f32.mrb[0].mxu0
  %1567 = vmatprep.mubr.bf16.mxu0 0
  %1568 = vmatmul.mubr.bf16.gmra.mrb[0].mxu0 %v1379
  %v1569 = vpop.f32.mrb[0].mxu0
  %v1570 = vadd.f32 %v1419, %v1569
  %v1571 = vpop.f32.mrb[0].mxu0
  %v1572 = vpop.f32.mrb[0].mxu0
  %v1573 = vadd.f32 %v1420, %v1572
  %v1574 = vpop.f32.mrb[0].mxu0
  %1575 = vmatprep.mubr.bf16.mxu0 0
  %1576 = vmatmul.mubr.bf16.gmra.mrb[0].mxu0 %v1380
  %v1577 = vpop.f32.mrb[0].mxu0
  %v1578 = vadd.f32 %v1421, %v1577
  %v1579 = vpop.f32.mrb[0].mxu0
  %v1580 = vpop.f32.mrb[0].mxu0
  %v1581 = vadd.f32 %v1422, %v1580
  %v1582 = vpop.f32.mrb[0].mxu0
  %1583 = vmatprep.mubr.bf16.mxu0 0
  %1584 = vmatmul.mubr.bf16.gmra.mrb[0].mxu0 %v1381
  %v1585 = vpop.f32.mrb[0].mxu0
  %v1586 = vadd.f32 %v1423, %v1585
  %v1587 = vpop.f32.mrb[0].mxu0
  %v1588 = vpop.f32.mrb[0].mxu0
  %v1589 = vadd.f32 %v1424, %v1588
  %v1590 = vpop.f32.mrb[0].mxu0
  %1591 = vmatprep.mubr.bf16.mxu0 0
  %1592 = vmatmul.mubr.bf16.gmra.mrb[0].mxu0 %v1382
  %v1593 = vpop.f32.mrb[0].mxu0
  %v1594 = vadd.f32 %v1425, %v1593
  %v1595 = vpop.f32.mrb[0].mxu0
  %v1596 = vpop.f32.mrb[0].mxu0
  %v1597 = vadd.f32 %v1426, %v1596
  %v1598 = vpop.f32.mrb[0].mxu0
  %1599 = vmatprep.mubr.bf16.mxu0 0
  %1600 = vmatmul.mubr.bf16.gmra.mrb[0].mxu0 %v1383
  %v1601 = vpop.f32.mrb[0].mxu0
  %v1602 = vadd.f32 %v1427, %v1601
  %v1603 = vpop.f32.mrb[0].mxu0
  %v1604 = vpop.f32.mrb[0].mxu0
  %v1605 = vadd.f32 %v1428, %v1604
  %v1606 = vpop.f32.mrb[0].mxu0
  %1607 = vmatprep.mubr.bf16.mxu0 0
  %1608 = vmatmul.mubr.bf16.gmra.mrb[0].mxu0 %v1384
  %v1609 = vpop.f32.mrb[0].mxu0
  %v1610 = vadd.f32 %v1429, %v1609
  %v1611 = vpop.f32.mrb[0].mxu0
  %v1612 = vpop.f32.mrb[0].mxu0
  %v1613 = vadd.f32 %v1430, %v1612
  %v1614 = vpop.f32.mrb[0].mxu0
  %1615 = vmatprep.mubr.bf16.mxu0 0
  %1616 = vmatmul.mubr.bf16.gmra.mrb[0].mxu0 %v1385
  %v1617 = vpop.f32.mrb[0].mxu0
  %v1618 = vadd.f32 %v1431, %v1617
  %v1619 = vpop.f32.mrb[0].mxu0
  %v1620 = vpop.f32.mrb[0].mxu0
  %v1621 = vadd.f32 %v1432, %v1620
  %v1622 = vpop.f32.mrb[0].mxu0
  %1623 = vmatprep.mubr.bf16.mxu0 0
  %1624 = vmatmul.mubr.bf16.gmra.mrb[0].mxu0 %v1386
  %v1625 = vpop.f32.mrb[0].mxu0
  %v1626 = vadd.f32 %v1433, %v1625
  %v1627 = vpop.f32.mrb[0].mxu0
  %v1628 = vpop.f32.mrb[0].mxu0
  %v1629 = vadd.f32 %v1434, %v1628
  %v1630 = vpop.f32.mrb[0].mxu0
  %1631 = vmatprep.mubr.bf16.mxu0 0
  %1632 = vmatmul.mubr.bf16.gmra.mrb[0].mxu0 %v1387
  %v1633 = vpop.f32.mrb[0].mxu0
  %v1634 = vadd.f32 %v1435, %v1633
  %v1635 = vpop.f32.mrb[0].mxu0
  %v1636 = vpop.f32.mrb[0].mxu0
  %v1637 = vadd.f32 %v1436, %v1636
  %v1638 = vpop.f32.mrb[0].mxu0
  %1639 = vmatprep.mubr.bf16.mxu0 0
  %1640 = vmatmul.mubr.bf16.gmra.mrb[0].mxu0 %v1388
  %v1641 = vpop.f32.mrb[0].mxu0
  %v1642 = vadd.f32 %v1437, %v1641
  %v1643 = vpop.f32.mrb[0].mxu0
  %v1644 = vpop.f32.mrb[0].mxu0
  %v1645 = vadd.f32 %v1438, %v1644
  %v1646 = vpop.f32.mrb[0].mxu0
  %1647 = vmatprep.mubr.bf16.mxu0 0
  %1648 = vmatmul.mubr.bf16.gmra.mrb[0].mxu0 %v1389
  %v1649 = vpop.f32.mrb[0].mxu0
  %v1650 = vadd.f32 %v1439, %v1649
  %v1651 = vpop.f32.mrb[0].mxu0
  %v1652 = vpop.f32.mrb[0].mxu0
  %v1653 = vadd.f32 %v1440, %v1652
  %v1654 = vpop.f32.mrb[0].mxu0
  %1655 = vmatprep.mubr.bf16.mxu0 0
  %1656 = vmatmul.mubr.bf16.gmra.mrb[0].mxu0 %v1390
  %v1657 = vpop.f32.mrb[0].mxu0
  %v1658 = vadd.f32 %v1441, %v1657
  %v1659 = vpop.f32.mrb[0].mxu0
  %v1660 = vpop.f32.mrb[0].mxu0
  %v1661 = vadd.f32 %v1442, %v1660
  %v1662 = vpop.f32.mrb[0].mxu0
  %1663 = vmatprep.mubr.bf16.mxu0 0
  %1664 = vmatmul.mubr.bf16.gmra.mrb[0].mxu0 %v1391
  %v1665 = vpop.f32.mrb[0].mxu0
  %v1666 = vadd.f32 %v1443, %v1665
  %v1667 = vpop.f32.mrb[0].mxu0
  %v1668 = vpop.f32.mrb[0].mxu0
  %v1669 = vadd.f32 %v1444, %v1668
  %v1670 = vpop.f32.mrb[0].mxu0
  %1671 = vmatprep.mubr.bf16.mxu0 0
  %1672 = vmatmul.mubr.bf16.gmra.mrb[0].mxu0 %v1392
  %v1673 = vpop.f32.mrb[0].mxu0
  %v1674 = vadd.f32 %v1445, %v1673
  %v1675 = vpop.f32.mrb[0].mxu0
  %v1676 = vpop.f32.mrb[0].mxu0
  %v1677 = vadd.f32 %v1446, %v1676
  %v1678 = vpop.f32.mrb[0].mxu0
  %1679 = vdwg.mxu0
  %v1680 = vtanh.pop %v1530
  %v1681 = vtanh.pop %v1533
  %v1682 = vtanh.pop %v1538
  %v1683 = vtanh.pop %v1541
  %v1684 = vtanh.pop %v1546
  %v1685 = vtanh.pop %v1549
  %v1686 = vtanh.pop %v1554
  %v1687 = vtanh.pop %v1557
  %v1688 = vtanh.pop %v1562
  %v1689 = vtanh.pop %v1565
  %v1690 = vtanh.pop %v1570
  %v1691 = vtanh.pop %v1573
  %v1692 = vtanh.pop %v1578
  %v1693 = vtanh.pop %v1581
  %v1694 = vtanh.pop %v1586
  %v1695 = vtanh.pop %v1589
  %v1696 = vtanh.pop %v1594
  %v1697 = vtanh.pop %v1597
  %v1698 = vtanh.pop %v1602
  %v1699 = vtanh.pop %v1605
  %v1700 = vtanh.pop %v1610
  %v1701 = vtanh.pop %v1613
  %v1702 = vtanh.pop %v1618
  %v1703 = vtanh.pop %v1621
  %v1704 = vtanh.pop %v1626
  %v1705 = vtanh.pop %v1629
  %v1706 = vtanh.pop %v1634
  %v1707 = vtanh.pop %v1637
  %v1708 = vtanh.pop %v1642
  %v1709 = vtanh.pop %v1645
  %v1710 = vtanh.pop %v1650
  %v1711 = vtanh.pop %v1653
  %v1712 = vtanh.pop %v1658
  %v1713 = vtanh.pop %v1661
  %v1714 = vtanh.pop %v1666
  %v1715 = vtanh.pop %v1669
  %v1716 = vtanh.pop %v1674
  %v1717 = vtanh.pop %v1677
  %v1718 = vpack.c.bf16 %v1681, %v1680
  %v1719 = vpack.c.bf16 %v1683, %v1682
  %v1720 = vpack.c.bf16 %v1685, %v1684
  %v1721 = vpack.c.bf16 %v1687, %v1686
  %v1722 = vpack.c.bf16 %v1689, %v1688
  %v1723 = vpack.c.bf16 %v1691, %v1690
  %v1724 = vpack.c.bf16 %v1693, %v1692
  %v1725 = vpack.c.bf16 %v1695, %v1694
  %v1726 = vpack.c.bf16 %v1697, %v1696
  %v1727 = vpack.c.bf16 %v1699, %v1698
  %v1728 = vpack.c.bf16 %v1701, %v1700
  %v1729 = vpack.c.bf16 %v1703, %v1702
  %v1730 = vpack.c.bf16 %v1705, %v1704
  %v1731 = vpack.c.bf16 %v1707, %v1706
  %v1732 = vpack.c.bf16 %v1709, %v1708
  %v1733 = vpack.c.bf16 %v1711, %v1710
  %v1734 = vpack.c.bf16 %v1713, %v1712
  %v1735 = vpack.c.bf16 %v1715, %v1714
  %v1736 = vpack.c.bf16 %v1717, %v1716
  %v1737 = vld [vmem:[%s4] sm:$0xf]
  %v1738 = vld [vmem:[%s4 + $0x4] sm:$0xf]
  %v1739 = vld [vmem:[%s4 + $0x8] sm:$0xf]
  %v1740 = vld [vmem:[%s4 + $0xc] sm:$0xf]
  %v1741 = vld [vmem:[%s4 + $0x10] sm:$0xf]
  %v1742 = vld [vmem:[%s4 + $0x14] sm:$0xf]
  %v1743 = vld [vmem:[%s4 + $0x18] sm:$0xf]
  %v1744 = vld [vmem:[%s4 + $0x1c] sm:$0xf]
  %v1745 = vld [vmem:[%s4 + $0x20] sm:$0xf]
  %v1746 = vld [vmem:[%s4 + $0x24] sm:$0xf]
  %v1747 = vld [vmem:[%s4 + $0x28] sm:$0xf]
  %v1748 = vld [vmem:[%s4 + $0x2c] sm:$0xf]
  %v1749 = vld [vmem:[%s4 + $0x30] sm:$0xf]
  %v1750 = vld [vmem:[%s4 + $0x34] sm:$0xf]
  %v1751 = vld [vmem:[%s4 + $0x38] sm:$0xf]
  %v1752 = vld [vmem:[%s4 + $0x3c] sm:$0xf]
  %v1753 = vld [vmem:[#allocation2 + $0x8] sm:$0xff]
  %v1754 = vld [vmem:[#allocation2 + $0x38] sm:$0xff]
  %v1755 = vld [vmem:[#allocation2 + $0x68] sm:$0xff]
  %v1756 = vld [vmem:[#allocation2 + $0x98] sm:$0xff]
  %v1757 = vld [vmem:[#allocation2 + $0xc8] sm:$0xff]
  %v1758 = vld [vmem:[#allocation2 + $0xf8] sm:$0xff]
  %v1759 = vld [vmem:[#allocation2 + $0x128] sm:$0xff]
  %v1760 = vld [vmem:[#allocation2 + $0x158] sm:$0xff]
  %v1761 = vld [vmem:[#allocation2 + $0x188] sm:$0xff]
  %v1762 = vld [vmem:[#allocation2 + $0x1b8] sm:$0xff]
  %v1763 = vld [vmem:[#allocation2 + $0x1e8] sm:$0xff]
  %v1764 = vld [vmem:[#allocation2 + $0x218] sm:$0xff]
  %v1765 = vld [vmem:[#allocation2 + $0x248] sm:$0xff]
  %v1766 = vld [vmem:[#allocation2 + $0x278] sm:$0xff]
  %v1767 = vld [vmem:[#allocation2 + $0x2a8] sm:$0xff]
  %v1768 = vld [vmem:[#allocation2 + $0x2d8] sm:$0xff]
  %v1769 = vld [vmem:[#allocation2 + $0x308] sm:$0xff]
  %v1770 = vld [vmem:[#allocation2 + $0x338] sm:$0xff]
  %v1771 = vld [vmem:[#allocation2 + $0x368] sm:$0xff]
  %v1772 = vld [vmem:[#allocation2 + $0x398] sm:$0xff]
  %v1773 = vld [vmem:[#allocation2 + $0x3c8] sm:$0xff]
  %v1774 = vld [vmem:[#allocation2 + $0x3f8] sm:$0xff]
  %v1775 = vld [vmem:[#allocation2 + $0x428] sm:$0xff]
  %v1776 = vld [vmem:[#allocation2 + $0x458] sm:$0xff]
  %v1777 = vld [vmem:[#allocation2 + $0x488] sm:$0xff]
  %v1778 = vld [vmem:[#allocation2 + $0x4b8] sm:$0xff]
  %v1779 = vld [vmem:[#allocation2 + $0x4e8] sm:$0xff]
  %v1780 = vld [vmem:[#allocation2 + $0x518] sm:$0xff]
  %v1781 = vld [vmem:[#allocation2 + $0x548] sm:$0xff]
  %v1782 = vld [vmem:[#allocation2 + $0x578] sm:$0xff]
  %v1783 = vld [vmem:[#allocation2 + $0x5a8] sm:$0xff]
  %v1784 = vld [vmem:[#allocation2 + $0x5d8] sm:$0xff]
  %v1785 = vld [vmem:[#allocation2 + $0x608] sm:$0xff]
  %v1786 = vld [vmem:[#allocation2 + $0x638] sm:$0xff]
  %v1787 = vld [vmem:[#allocation2 + $0x668] sm:$0xff]
  %v1788 = vld [vmem:[#allocation2 + $0x698] sm:$0xff]
  %v1789 = vld [vmem:[#allocation2 + $0x6c8] sm:$0xff]
  %v1790 = vld [vmem:[#allocation2 + $0x6f8] sm:$0xff]
  %v1807 = vunpack.c.l.b16 %v1737
  %v1808 = vunpack.c.l.b16 %v1738
  %v1809 = vunpack.c.l.b16 %v1739
  %v1810 = vunpack.c.l.b16 %v1740
  %v1811 = vunpack.c.l.b16 %v1741
  %v1812 = vunpack.c.l.b16 %v1742
  %v1813 = vunpack.c.l.b16 %v1743
  %v1814 = vunpack.c.l.b16 %v1744
  %v1815 = vunpack.c.l.b16 %v1745
  %v1816 = vunpack.c.l.b16 %v1746
  %v1817 = vunpack.c.l.b16 %v1747
  %v1818 = vunpack.c.l.b16 %v1748
  %v1819 = vunpack.c.l.b16 %v1749
  %v1820 = vunpack.c.l.b16 %v1750
  %v1821 = vunpack.c.l.b16 %v1751
  %v1822 = vunpack.c.l.b16 %v1752
  %v1823 = vpack.c.b16 %v1808, %v1807
  %v1824 = vpack.c.b16 %v1810, %v1809
  %v1825 = vpack.c.b16 %v1812, %v1811
  %v1826 = vpack.c.b16 %v1814, %v1813
  %v1827 = vpack.c.b16 %v1816, %v1815
  %v1828 = vpack.c.b16 %v1818, %v1817
  %v1829 = vpack.c.b16 %v1820, %v1819
  %v1830 = vpack.c.b16 %v1822, %v1821
  %1839 = vmatprep.subr.bf16.mxu0 0
  %1840 = vmatpush1.bf16.msra.mxu0 %v1823
  %1841 = vmatprep.subr.bf16.mxu0 0
  %1842 = vmatpush1.bf16.msra.mxu0 %v1824
  %1843 = vmatprep.subr.bf16.mxu0 0
  %1844 = vmatpush1.bf16.msra.mxu0 %v1825
  %1845 = vmatprep.subr.bf16.mxu0 0
  %1846 = vmatpush1.bf16.msra.mxu0 %v1826
  %1847 = vmatprep.subr.bf16.mxu0 0
  %1848 = vmatpush1.bf16.msra.mxu0 %v1827
  %1849 = vmatprep.subr.bf16.mxu0 0
  %1850 = vmatpush1.bf16.msra.mxu0 %v1828
  %1851 = vmatprep.subr.bf16.mxu0 0
  %1852 = vmatpush1.bf16.msra.mxu0 %v1829
  %1853 = vmatprep.subr.bf16.mxu0 0
  %1854 = vmatpush1.bf16.msra.mxu0 %v1830
  %1855 = vmatprep.subr.bf16.mxu0 0
  %1856 = vmatpush1.bf16.msra.mxu0 0
  %1857 = vmatprep.subr.bf16.mxu0 0
  %1858 = vmatpush1.bf16.msra.mxu0 0
  %1859 = vmatprep.subr.bf16.mxu0 0
  %1860 = vmatpush1.bf16.msra.mxu0 0
  %1861 = vmatprep.subr.bf16.mxu0 0
  %1862 = vmatpush1.bf16.msra.mxu0 0
  %1863 = vmatprep.subr.bf16.mxu0 0
  %1864 = vmatpush1.bf16.msra.mxu0 0
  %1865 = vmatprep.subr.bf16.mxu0 0
  %1866 = vmatpush1.bf16.msra.mxu0 0
  %1867 = vmatprep.subr.bf16.mxu0 0
  %1868 = vmatpush1.bf16.msra.mxu0 0
  %1869 = vmatprep.subr.bf16.mxu0 0
  %1870 = vmatpush1.bf16.msra.mxu0 0
  %1871 = vmatprep.mubr.bf16.mxu0 0
  %1872 = vmatmul.mubr.bf16.gmra.mrb[0].mxu0 %v1718
  %v1873 = vpop.f32.mrb[0].mxu0
  %v1874 = vadd.f32 %v1753, %v1873
  %v1875 = vpop.f32.mrb[0].mxu0
  %v1876 = vpop.f32.mrb[0].mxu0
  %v1877 = vadd.f32 %v1754, %v1876
  %v1878 = vpop.f32.mrb[0].mxu0
  %1879 = vmatprep.mubr.bf16.mxu0 0
  %1880 = vmatmul.mubr.bf16.gmra.mrb[0].mxu0 %v1719
  %v1881 = vpop.f32.mrb[0].mxu0
  %v1882 = vadd.f32 %v1755, %v1881
  %v1883 = vpop.f32.mrb[0].mxu0
  %v1884 = vpop.f32.mrb[0].mxu0
  %v1885 = vadd.f32 %v1756, %v1884
  %v1886 = vpop.f32.mrb[0].mxu0
  %1887 = vmatprep.mubr.bf16.mxu0 0
  %1888 = vmatmul.mubr.bf16.gmra.mrb[0].mxu0 %v1720
  %v1889 = vpop.f32.mrb[0].mxu0
  %v1890 = vadd.f32 %v1757, %v1889
  %v1891 = vpop.f32.mrb[0].mxu0
  %v1892 = vpop.f32.mrb[0].mxu0
  %v1893 = vadd.f32 %v1758, %v1892
  %v1894 = vpop.f32.mrb[0].mxu0
  %1895 = vmatprep.mubr.bf16.mxu0 0
  %1896 = vmatmul.mubr.bf16.gmra.mrb[0].mxu0 %v1721
  %v1897 = vpop.f32.mrb[0].mxu0
  %v1898 = vadd.f32 %v1759, %v1897
  %v1899 = vpop.f32.mrb[0].mxu0
  %v1900 = vpop.f32.mrb[0].mxu0
  %v1901 = vadd.f32 %v1760, %v1900
  %v1902 = vpop.f32.mrb[0].mxu0
  %1903 = vmatprep.mubr.bf16.mxu0 0
  %1904 = vmatmul.mubr.bf16.gmra.mrb[0].mxu0 %v1722
  %v1905 = vpop.f32.mrb[0].mxu0
  %v1906 = vadd.f32 %v1761, %v1905
  %v1907 = vpop.f32.mrb[0].mxu0
  %v1908 = vpop.f32.mrb[0].mxu0
  %v1909 = vadd.f32 %v1762, %v1908
  %v1910 = vpop.f32.mrb[0].mxu0
  %1911 = vmatprep.mubr.bf16.mxu0 0
  %1912 = vmatmul.mubr.bf16.gmra.mrb[0].mxu0 %v1723
  %v1913 = vpop.f32.mrb[0].mxu0
  %v1914 = vadd.f32 %v1763, %v1913
  %v1915 = vpop.f32.mrb[0].mxu0
  %v1916 = vpop.f32.mrb[0].mxu0
  %v1917 = vadd.f32 %v1764, %v1916
  %v1918 = vpop.f32.mrb[0].mxu0
  %1919 = vmatprep.mubr.bf16.mxu0 0
  %1920 = vmatmul.mubr.bf16.gmra.mrb[0].mxu0 %v1724
  %v1921 = vpop.f32.mrb[0].mxu0
  %v1922 = vadd.f32 %v1765, %v1921
  %v1923 = vpop.f32.mrb[0].mxu0
  %v1924 = vpop.f32.mrb[0].mxu0
  %v1925 = vadd.f32 %v1766, %v1924
  %v1926 = vpop.f32.mrb[0].mxu0
  %1927 = vmatprep.mubr.bf16.mxu0 0
  %1928 = vmatmul.mubr.bf16.gmra.mrb[0].mxu0 %v1725
  %v1929 = vpop.f32.mrb[0].mxu0
  %v1930 = vadd.f32 %v1767, %v1929
  %v1931 = vpop.f32.mrb[0].mxu0
  %v1932 = vpop.f32.mrb[0].mxu0
  %v1933 = vadd.f32 %v1768, %v1932
  %v1934 = vpop.f32.mrb[0].mxu0
  %1935 = vmatprep.mubr.bf16.mxu0 0
  %1936 = vmatmul.mubr.bf16.gmra.mrb[0].mxu0 %v1726
  %v1937 = vpop.f32.mrb[0].mxu0
  %v1938 = vadd.f32 %v1769, %v1937
  %v1939 = vpop.f32.mrb[0].mxu0
  %v1940 = vpop.f32.mrb[0].mxu0
  %v1941 = vadd.f32 %v1770, %v1940
  %v1942 = vpop.f32.mrb[0].mxu0
  %1943 = vmatprep.mubr.bf16.mxu0 0
  %1944 = vmatmul.mubr.bf16.gmra.mrb[0].mxu0 %v1727
  %v1945 = vpop.f32.mrb[0].mxu0
  %v1946 = vadd.f32 %v1771, %v1945
  %v1947 = vpop.f32.mrb[0].mxu0
  %v1948 = vpop.f32.mrb[0].mxu0
  %v1949 = vadd.f32 %v1772, %v1948
  %v1950 = vpop.f32.mrb[0].mxu0
  %1951 = vmatprep.mubr.bf16.mxu0 0
  %1952 = vmatmul.mubr.bf16.gmra.mrb[0].mxu0 %v1728
  %v1953 = vpop.f32.mrb[0].mxu0
  %v1954 = vadd.f32 %v1773, %v1953
  %v1955 = vpop.f32.mrb[0].mxu0
  %v1956 = vpop.f32.mrb[0].mxu0
  %v1957 = vadd.f32 %v1774, %v1956
  %v1958 = vpop.f32.mrb[0].mxu0
  %1959 = vmatprep.mubr.bf16.mxu0 0
  %1960 = vmatmul.mubr.bf16.gmra.mrb[0].mxu0 %v1729
  %v1961 = vpop.f32.mrb[0].mxu0
  %v1962 = vadd.f32 %v1775, %v1961
  %v1963 = vpop.f32.mrb[0].mxu0
  %v1964 = vpop.f32.mrb[0].mxu0
  %v1965 = vadd.f32 %v1776, %v1964
  %v1966 = vpop.f32.mrb[0].mxu0
  %1967 = vmatprep.mubr.bf16.mxu0 0
  %1968 = vmatmul.mubr.bf16.gmra.mrb[0].mxu0 %v1730
  %v1969 = vpop.f32.mrb[0].mxu0
  %v1970 = vadd.f32 %v1777, %v1969
  %v1971 = vpop.f32.mrb[0].mxu0
  %v1972 = vpop.f32.mrb[0].mxu0
  %v1973 = vadd.f32 %v1778, %v1972
  %v1974 = vpop.f32.mrb[0].mxu0
  %1975 = vmatprep.mubr.bf16.mxu0 0
  %1976 = vmatmul.mubr.bf16.gmra.mrb[0].mxu0 %v1731
  %v1977 = vpop.f32.mrb[0].mxu0
  %v1978 = vadd.f32 %v1779, %v1977
  %v1979 = vpop.f32.mrb[0].mxu0
  %v1980 = vpop.f32.mrb[0].mxu0
  %v1981 = vadd.f32 %v1780, %v1980
  %v1982 = vpop.f32.mrb[0].mxu0
  %1983 = vmatprep.mubr.bf16.mxu0 0
  %1984 = vmatmul.mubr.bf16.gmra.mrb[0].mxu0 %v1732
  %v1985 = vpop.f32.mrb[0].mxu0
  %v1986 = vadd.f32 %v1781, %v1985
  %v1987 = vpop.f32.mrb[0].mxu0
  %v1988 = vpop.f32.mrb[0].mxu0
  %v1989 = vadd.f32 %v1782, %v1988
  %v1990 = vpop.f32.mrb[0].mxu0
  %1991 = vmatprep.mubr.bf16.mxu0 0
  %1992 = vmatmul.mubr.bf16.gmra.mrb[0].mxu0 %v1733
  %v1993 = vpop.f32.mrb[0].mxu0
  %v1994 = vadd.f32 %v1783, %v1993
  %v1995 = vpop.f32.mrb[0].mxu0
  %v1996 = vpop.f32.mrb[0].mxu0
  %v1997 = vadd.f32 %v1784, %v1996
  %v1998 = vpop.f32.mrb[0].mxu0
  %1999 = vmatprep.mubr.bf16.mxu0 0
  %2000 = vmatmul.mubr.bf16.gmra.mrb[0].mxu0 %v1734
  %v2001 = vpop.f32.mrb[0].mxu0
  %v2002 = vadd.f32 %v1785, %v2001
  %v2003 = vpop.f32.mrb[0].mxu0
  %v2004 = vpop.f32.mrb[0].mxu0
  %v2005 = vadd.f32 %v1786, %v2004
  %v2006 = vpop.f32.mrb[0].mxu0
  %2007 = vmatprep.mubr.bf16.mxu0 0
  %2008 = vmatmul.mubr.bf16.gmra.mrb[0].mxu0 %v1735
  %v2009 = vpop.f32.mrb[0].mxu0
  %v2010 = vadd.f32 %v1787, %v2009
  %v2011 = vpop.f32.mrb[0].mxu0
  %v2012 = vpop.f32.mrb[0].mxu0
  %v2013 = vadd.f32 %v1788, %v2012
  %v2014 = vpop.f32.mrb[0].mxu0
  %2015 = vmatprep.mubr.bf16.mxu0 0
  %2016 = vmatmul.mubr.bf16.gmra.mrb[0].mxu0 %v1736
  %v2017 = vpop.f32.mrb[0].mxu0
  %v2018 = vadd.f32 %v1789, %v2017
  %v2019 = vpop.f32.mrb[0].mxu0
  %v2020 = vpop.f32.mrb[0].mxu0
  %v2021 = vadd.f32 %v1790, %v2020
  %v2022 = vpop.f32.mrb[0].mxu0
  %2023 = vdwg.mxu0
  %v2024 = vtanh.pop %v1874
  %v2025 = vtanh.pop %v1877
  %v2026 = vtanh.pop %v1882
  %v2027 = vtanh.pop %v1885
  %v2028 = vtanh.pop %v1890
  %v2029 = vtanh.pop %v1893
  %v2030 = vtanh.pop %v1898
  %v2031 = vtanh.pop %v1901
  %v2032 = vtanh.pop %v1906
  %v2033 = vtanh.pop %v1909
  %v2034 = vtanh.pop %v1914
  %v2035 = vtanh.pop %v1917
  %v2036 = vtanh.pop %v1922
  %v2037 = vtanh.pop %v1925
  %v2038 = vtanh.pop %v1930
  %v2039 = vtanh.pop %v1933
  %v2040 = vtanh.pop %v1938
  %v2041 = vtanh.pop %v1941
  %v2042 = vtanh.pop %v1946
  %v2043 = vtanh.pop %v1949
  %v2044 = vtanh.pop %v1954
  %v2045 = vtanh.pop %v1957
  %v2046 = vtanh.pop %v1962
  %v2047 = vtanh.pop %v1965
  %v2048 = vtanh.pop %v1970
  %v2049 = vtanh.pop %v1973
  %v2050 = vtanh.pop %v1978
  %v2051 = vtanh.pop %v1981
  %v2052 = vtanh.pop %v1986
  %v2053 = vtanh.pop %v1989
  %v2054 = vtanh.pop %v1994
  %v2055 = vtanh.pop %v1997
  %v2056 = vtanh.pop %v2002
  %v2057 = vtanh.pop %v2005
  %v2058 = vtanh.pop %v2010
  %v2059 = vtanh.pop %v2013
  %v2060 = vtanh.pop %v2018
  %v2061 = vtanh.pop %v2021
  %v2062 = vpack.c.bf16 %v2025, %v2024
  %v2063 = vpack.c.bf16 %v2027, %v2026
  %v2064 = vpack.c.bf16 %v2029, %v2028
  %v2065 = vpack.c.bf16 %v2031, %v2030
  %v2066 = vpack.c.bf16 %v2033, %v2032
  %v2067 = vpack.c.bf16 %v2035, %v2034
  %v2068 = vpack.c.bf16 %v2037, %v2036
  %v2069 = vpack.c.bf16 %v2039, %v2038
  %v2070 = vpack.c.bf16 %v2041, %v2040
  %v2071 = vpack.c.bf16 %v2043, %v2042
  %v2072 = vpack.c.bf16 %v2045, %v2044
  %v2073 = vpack.c.bf16 %v2047, %v2046
  %v2074 = vpack.c.bf16 %v2049, %v2048
  %v2075 = vpack.c.bf16 %v2051, %v2050
  %v2076 = vpack.c.bf16 %v2053, %v2052
  %v2077 = vpack.c.bf16 %v2055, %v2054
  %v2078 = vpack.c.bf16 %v2057, %v2056
  %v2079 = vpack.c.bf16 %v2059, %v2058
  %v2080 = vpack.c.bf16 %v2061, %v2060
  %v2081 = vld [vmem:[%s5] sm:$0xf]
  %v2082 = vld [vmem:[%s5 + $0x4] sm:$0xf]
  %v2083 = vld [vmem:[%s5 + $0x8] sm:$0xf]
  %v2084 = vld [vmem:[%s5 + $0xc] sm:$0xf]
  %v2085 = vld [vmem:[%s5 + $0x10] sm:$0xf]
  %v2086 = vld [vmem:[%s5 + $0x14] sm:$0xf]
  %v2087 = vld [vmem:[%s5 + $0x18] sm:$0xf]
  %v2088 = vld [vmem:[%s5 + $0x1c] sm:$0xf]
  %v2089 = vld [vmem:[%s5 + $0x20] sm:$0xf]
  %v2090 = vld [vmem:[%s5 + $0x24] sm:$0xf]
  %v2091 = vld [vmem:[%s5 + $0x28] sm:$0xf]
  %v2092 = vld [vmem:[%s5 + $0x2c] sm:$0xf]
  %v2093 = vld [vmem:[%s5 + $0x30] sm:$0xf]
  %v2094 = vld [vmem:[%s5 + $0x34] sm:$0xf]
  %v2095 = vld [vmem:[%s5 + $0x38] sm:$0xf]
  %v2096 = vld [vmem:[%s5 + $0x3c] sm:$0xf]
  %v2097 = vld [vmem:[#allocation2 + $0x10] sm:$0xff]
  %v2098 = vld [vmem:[#allocation2 + $0x40] sm:$0xff]
  %v2099 = vld [vmem:[#allocation2 + $0x70] sm:$0xff]
  %v2100 = vld [vmem:[#allocation2 + $0xa0] sm:$0xff]
  %v2101 = vld [vmem:[#allocation2 + $0xd0] sm:$0xff]
  %v2102 = vld [vmem:[#allocation2 + $0x100] sm:$0xff]
  %v2103 = vld [vmem:[#allocation2 + $0x130] sm:$0xff]
  %v2104 = vld [vmem:[#allocation2 + $0x160] sm:$0xff]
  %v2105 = vld [vmem:[#allocation2 + $0x190] sm:$0xff]
  %v2106 = vld [vmem:[#allocation2 + $0x1c0] sm:$0xff]
  %v2107 = vld [vmem:[#allocation2 + $0x1f0] sm:$0xff]
  %v2108 = vld [vmem:[#allocation2 + $0x220] sm:$0xff]
  %v2109 = vld [vmem:[#allocation2 + $0x250] sm:$0xff]
  %v2110 = vld [vmem:[#allocation2 + $0x280] sm:$0xff]
  %v2111 = vld [vmem:[#allocation2 + $0x2b0] sm:$0xff]
  %v2112 = vld [vmem:[#allocation2 + $0x2e0] sm:$0xff]
  %v2113 = vld [vmem:[#allocation2 + $0x310] sm:$0xff]
  %v2114 = vld [vmem:[#allocation2 + $0x340] sm:$0xff]
  %v2115 = vld [vmem:[#allocation2 + $0x370] sm:$0xff]
  %v2116 = vld [vmem:[#allocation2 + $0x3a0] sm:$0xff]
  %v2117 = vld [vmem:[#allocation2 + $0x3d0] sm:$0xff]
  %v2118 = vld [vmem:[#allocation2 + $0x400] sm:$0xff]
  %v2119 = vld [vmem:[#allocation2 + $0x430] sm:$0xff]
  %v2120 = vld [vmem:[#allocation2 + $0x460] sm:$0xff]
  %v2121 = vld [vmem:[#allocation2 + $0x490] sm:$0xff]
  %v2122 = vld [vmem:[#allocation2 + $0x4c0] sm:$0xff]
  %v2123 = vld [vmem:[#allocation2 + $0x4f0] sm:$0xff]
  %v2124 = vld [vmem:[#allocation2 + $0x520] sm:$0xff]
  %v2125 = vld [vmem:[#allocation2 + $0x550] sm:$0xff]
  %v2126 = vld [vmem:[#allocation2 + $0x580] sm:$0xff]
  %v2127 = vld [vmem:[#allocation2 + $0x5b0] sm:$0xff]
  %v2128 = vld [vmem:[#allocation2 + $0x5e0] sm:$0xff]
  %v2129 = vld [vmem:[#allocation2 + $0x610] sm:$0xff]
  %v2130 = vld [vmem:[#allocation2 + $0x640] sm:$0xff]
  %v2131 = vld [vmem:[#allocation2 + $0x670] sm:$0xff]
  %v2132 = vld [vmem:[#allocation2 + $0x6a0] sm:$0xff]
  %v2133 = vld [vmem:[#allocation2 + $0x6d0] sm:$0xff]
  %v2134 = vld [vmem:[#allocation2 + $0x700] sm:$0xff]
  %v2151 = vunpack.c.l.b16 %v2081
  %v2152 = vunpack.c.l.b16 %v2082
  %v2153 = vunpack.c.l.b16 %v2083
  %v2154 = vunpack.c.l.b16 %v2084
  %v2155 = vunpack.c.l.b16 %v2085
  %v2156 = vunpack.c.l.b16 %v2086
  %v2157 = vunpack.c.l.b16 %v2087
  %v2158 = vunpack.c.l.b16 %v2088
  %v2159 = vunpack.c.l.b16 %v2089
  %v2160 = vunpack.c.l.b16 %v2090
  %v2161 = vunpack.c.l.b16 %v2091
  %v2162 = vunpack.c.l.b16 %v2092
  %v2163 = vunpack.c.l.b16 %v2093
  %v2164 = vunpack.c.l.b16 %v2094
  %v2165 = vunpack.c.l.b16 %v2095
  %v2166 = vunpack.c.l.b16 %v2096
  %v2167 = vpack.c.b16 %v2152, %v2151
  %v2168 = vpack.c.b16 %v2154, %v2153
  %v2169 = vpack.c.b16 %v2156, %v2155
  %v2170 = vpack.c.b16 %v2158, %v2157
  %v2171 = vpack.c.b16 %v2160, %v2159
  %v2172 = vpack.c.b16 %v2162, %v2161
  %v2173 = vpack.c.b16 %v2164, %v2163
  %v2174 = vpack.c.b16 %v2166, %v2165
  %2183 = vmatprep.subr.bf16.mxu0 0
  %2184 = vmatpush1.bf16.msra.mxu0 %v2167
  %2185 = vmatprep.subr.bf16.mxu0 0
  %2186 = vmatpush1.bf16.msra.mxu0 %v2168
  %2187 = vmatprep.subr.bf16.mxu0 0
  %2188 = vmatpush1.bf16.msra.mxu0 %v2169
  %2189 = vmatprep.subr.bf16.mxu0 0
  %2190 = vmatpush1.bf16.msra.mxu0 %v2170
  %2191 = vmatprep.subr.bf16.mxu0 0
  %2192 = vmatpush1.bf16.msra.mxu0 %v2171
  %2193 = vmatprep.subr.bf16.mxu0 0
  %2194 = vmatpush1.bf16.msra.mxu0 %v2172
  %2195 = vmatprep.subr.bf16.mxu0 0
  %2196 = vmatpush1.bf16.msra.mxu0 %v2173
  %2197 = vmatprep.subr.bf16.mxu0 0
  %2198 = vmatpush1.bf16.msra.mxu0 %v2174
  %2199 = vmatprep.subr.bf16.mxu0 0
  %2200 = vmatpush1.bf16.msra.mxu0 0
  %2201 = vmatprep.subr.bf16.mxu0 0
  %2202 = vmatpush1.bf16.msra.mxu0 0
  %2203 = vmatprep.subr.bf16.mxu0 0
  %2204 = vmatpush1.bf16.msra.mxu0 0
  %2205 = vmatprep.subr.bf16.mxu0 0
  %2206 = vmatpush1.bf16.msra.mxu0 0
  %2207 = vmatprep.subr.bf16.mxu0 0
  %2208 = vmatpush1.bf16.msra.mxu0 0
  %2209 = vmatprep.subr.bf16.mxu0 0
  %2210 = vmatpush1.bf16.msra.mxu0 0
  %2211 = vmatprep.subr.bf16.mxu0 0
  %2212 = vmatpush1.bf16.msra.mxu0 0
  %2213 = vmatprep.subr.bf16.mxu0 0
  %2214 = vmatpush1.bf16.msra.mxu0 0
  %2215 = vmatprep.mubr.bf16.mxu0 0
  %2216 = vmatmul.mubr.bf16.gmra.mrb[0].mxu0 %v2062
  %v2217 = vpop.f32.mrb[0].mxu0
  %v2218 = vadd.f32 %v2097, %v2217
  %v2219 = vpop.f32.mrb[0].mxu0
  %v2220 = vpop.f32.mrb[0].mxu0
  %v2221 = vadd.f32 %v2098, %v2220
  %v2222 = vpop.f32.mrb[0].mxu0
  %2223 = vmatprep.mubr.bf16.mxu0 0
  %2224 = vmatmul.mubr.bf16.gmra.mrb[0].mxu0 %v2063
  %v2225 = vpop.f32.mrb[0].mxu0
  %v2226 = vadd.f32 %v2099, %v2225
  %v2227 = vpop.f32.mrb[0].mxu0
  %v2228 = vpop.f32.mrb[0].mxu0
  %v2229 = vadd.f32 %v2100, %v2228
  %v2230 = vpop.f32.mrb[0].mxu0
  %2231 = vmatprep.mubr.bf16.mxu0 0
  %2232 = vmatmul.mubr.bf16.gmra.mrb[0].mxu0 %v2064
  %v2233 = vpop.f32.mrb[0].mxu0
  %v2234 = vadd.f32 %v2101, %v2233
  %v2235 = vpop.f32.mrb[0].mxu0
  %v2236 = vpop.f32.mrb[0].mxu0
  %v2237 = vadd.f32 %v2102, %v2236
  %v2238 = vpop.f32.mrb[0].mxu0
  %2239 = vmatprep.mubr.bf16.mxu0 0
  %2240 = vmatmul.mubr.bf16.gmra.mrb[0].mxu0 %v2065
  %v2241 = vpop.f32.mrb[0].mxu0
  %v2242 = vadd.f32 %v2103, %v2241
  %v2243 = vpop.f32.mrb[0].mxu0
  %v2244 = vpop.f32.mrb[0].mxu0
  %v2245 = vadd.f32 %v2104, %v2244
  %v2246 = vpop.f32.mrb[0].mxu0
  %2247 = vmatprep.mubr.bf16.mxu0 0
  %2248 = vmatmul.mubr.bf16.gmra.mrb[0].mxu0 %v2066
  %v2249 = vpop.f32.mrb[0].mxu0
  %v2250 = vadd.f32 %v2105, %v2249
  %v2251 = vpop.f32.mrb[0].mxu0
  %v2252 = vpop.f32.mrb[0].mxu0
  %v2253 = vadd.f32 %v2106, %v2252
  %v2254 = vpop.f32.mrb[0].mxu0
  %2255 = vmatprep.mubr.bf16.mxu0 0
  %2256 = vmatmul.mubr.bf16.gmra.mrb[0].mxu0 %v2067
  %v2257 = vpop.f32.mrb[0].mxu0
  %v2258 = vadd.f32 %v2107, %v2257
  %v2259 = vpop.f32.mrb[0].mxu0
  %v2260 = vpop.f32.mrb[0].mxu0
  %v2261 = vadd.f32 %v2108, %v2260
  %v2262 = vpop.f32.mrb[0].mxu0
  %2263 = vmatprep.mubr.bf16.mxu0 0
  %2264 = vmatmul.mubr.bf16.gmra.mrb[0].mxu0 %v2068
  %v2265 = vpop.f32.mrb[0].mxu0
  %v2266 = vadd.f32 %v2109, %v2265
  %v2267 = vpop.f32.mrb[0].mxu0
  %v2268 = vpop.f32.mrb[0].mxu0
  %v2269 = vadd.f32 %v2110, %v2268
  %v2270 = vpop.f32.mrb[0].mxu0
  %2271 = vmatprep.mubr.bf16.mxu0 0
  %2272 = vmatmul.mubr.bf16.gmra.mrb[0].mxu0 %v2069
  %v2273 = vpop.f32.mrb[0].mxu0
  %v2274 = vadd.f32 %v2111, %v2273
  %v2275 = vpop.f32.mrb[0].mxu0
  %v2276 = vpop.f32.mrb[0].mxu0
  %v2277 = vadd.f32 %v2112, %v2276
  %v2278 = vpop.f32.mrb[0].mxu0
  %2279 = vmatprep.mubr.bf16.mxu0 0
  %2280 = vmatmul.mubr.bf16.gmra.mrb[0].mxu0 %v2070
  %v2281 = vpop.f32.mrb[0].mxu0
  %v2282 = vadd.f32 %v2113, %v2281
  %v2283 = vpop.f32.mrb[0].mxu0
  %v2284 = vpop.f32.mrb[0].mxu0
  %v2285 = vadd.f32 %v2114, %v2284
  %v2286 = vpop.f32.mrb[0].mxu0
  %2287 = vmatprep.mubr.bf16.mxu0 0
  %2288 = vmatmul.mubr.bf16.gmra.mrb[0].mxu0 %v2071
  %v2289 = vpop.f32.mrb[0].mxu0
  %v2290 = vadd.f32 %v2115, %v2289
  %v2291 = vpop.f32.mrb[0].mxu0
  %v2292 = vpop.f32.mrb[0].mxu0
  %v2293 = vadd.f32 %v2116, %v2292
  %v2294 = vpop.f32.mrb[0].mxu0
  %2295 = vmatprep.mubr.bf16.mxu0 0
  %2296 = vmatmul.mubr.bf16.gmra.mrb[0].mxu0 %v2072
  %v2297 = vpop.f32.mrb[0].mxu0
  %v2298 = vadd.f32 %v2117, %v2297
  %v2299 = vpop.f32.mrb[0].mxu0
  %v2300 = vpop.f32.mrb[0].mxu0
  %v2301 = vadd.f32 %v2118, %v2300
  %v2302 = vpop.f32.mrb[0].mxu0
  %2303 = vmatprep.mubr.bf16.mxu0 0
  %2304 = vmatmul.mubr.bf16.gmra.mrb[0].mxu0 %v2073
  %v2305 = vpop.f32.mrb[0].mxu0
  %v2306 = vadd.f32 %v2119, %v2305
  %v2307 = vpop.f32.mrb[0].mxu0
  %v2308 = vpop.f32.mrb[0].mxu0
  %v2309 = vadd.f32 %v2120, %v2308
  %v2310 = vpop.f32.mrb[0].mxu0
  %2311 = vmatprep.mubr.bf16.mxu0 0
  %2312 = vmatmul.mubr.bf16.gmra.mrb[0].mxu0 %v2074
  %v2313 = vpop.f32.mrb[0].mxu0
  %v2314 = vadd.f32 %v2121, %v2313
  %v2315 = vpop.f32.mrb[0].mxu0
  %v2316 = vpop.f32.mrb[0].mxu0
  %v2317 = vadd.f32 %v2122, %v2316
  %v2318 = vpop.f32.mrb[0].mxu0
  %2319 = vmatprep.mubr.bf16.mxu0 0
  %2320 = vmatmul.mubr.bf16.gmra.mrb[0].mxu0 %v2075
  %v2321 = vpop.f32.mrb[0].mxu0
  %v2322 = vadd.f32 %v2123, %v2321
  %v2323 = vpop.f32.mrb[0].mxu0
  %v2324 = vpop.f32.mrb[0].mxu0
  %v2325 = vadd.f32 %v2124, %v2324
  %v2326 = vpop.f32.mrb[0].mxu0
  %2327 = vmatprep.mubr.bf16.mxu0 0
  %2328 = vmatmul.mubr.bf16.gmra.mrb[0].mxu0 %v2076
  %v2329 = vpop.f32.mrb[0].mxu0
  %v2330 = vadd.f32 %v2125, %v2329
  %v2331 = vpop.f32.mrb[0].mxu0
  %v2332 = vpop.f32.mrb[0].mxu0
  %v2333 = vadd.f32 %v2126, %v2332
  %v2334 = vpop.f32.mrb[0].mxu0
  %2335 = vmatprep.mubr.bf16.mxu0 0
  %2336 = vmatmul.mubr.bf16.gmra.mrb[0].mxu0 %v2077
  %v2337 = vpop.f32.mrb[0].mxu0
  %v2338 = vadd.f32 %v2127, %v2337
  %v2339 = vpop.f32.mrb[0].mxu0
  %v2340 = vpop.f32.mrb[0].mxu0
  %v2341 = vadd.f32 %v2128, %v2340
  %v2342 = vpop.f32.mrb[0].mxu0
  %2343 = vmatprep.mubr.bf16.mxu0 0
  %2344 = vmatmul.mubr.bf16.gmra.mrb[0].mxu0 %v2078
  %v2345 = vpop.f32.mrb[0].mxu0
  %v2346 = vadd.f32 %v2129, %v2345
  %v2347 = vpop.f32.mrb[0].mxu0
  %v2348 = vpop.f32.mrb[0].mxu0
  %v2349 = vadd.f32 %v2130, %v2348
  %v2350 = vpop.f32.mrb[0].mxu0
  %2351 = vmatprep.mubr.bf16.mxu0 0
  %2352 = vmatmul.mubr.bf16.gmra.mrb[0].mxu0 %v2079
  %v2353 = vpop.f32.mrb[0].mxu0
  %v2354 = vadd.f32 %v2131, %v2353
  %v2355 = vpop.f32.mrb[0].mxu0
  %v2356 = vpop.f32.mrb[0].mxu0
  %v2357 = vadd.f32 %v2132, %v2356
  %v2358 = vpop.f32.mrb[0].mxu0
  %2359 = vmatprep.mubr.bf16.mxu0 0
  %2360 = vmatmul.mubr.bf16.gmra.mrb[0].mxu0 %v2080
  %v2361 = vpop.f32.mrb[0].mxu0
  %v2362 = vadd.f32 %v2133, %v2361
  %v2363 = vpop.f32.mrb[0].mxu0
  %v2364 = vpop.f32.mrb[0].mxu0
  %v2365 = vadd.f32 %v2134, %v2364
  %v2366 = vpop.f32.mrb[0].mxu0
  %2367 = vdwg.mxu0
  %v2368 = vtanh.pop %v2218
  %v2369 = vtanh.pop %v2221
  %v2370 = vtanh.pop %v2226
  %v2371 = vtanh.pop %v2229
  %v2372 = vtanh.pop %v2234
  %v2373 = vtanh.pop %v2237
  %v2374 = vtanh.pop %v2242
  %v2375 = vtanh.pop %v2245
  %v2376 = vtanh.pop %v2250
  %v2377 = vtanh.pop %v2253
  %v2378 = vtanh.pop %v2258
  %v2379 = vtanh.pop %v2261
  %v2380 = vtanh.pop %v2266
  %v2381 = vtanh.pop %v2269
  %v2382 = vtanh.pop %v2274
  %v2383 = vtanh.pop %v2277
  %v2384 = vtanh.pop %v2282
  %v2385 = vtanh.pop %v2285
  %v2386 = vtanh.pop %v2290
  %v2387 = vtanh.pop %v2293
  %v2388 = vtanh.pop %v2298
  %v2389 = vtanh.pop %v2301
  %v2390 = vtanh.pop %v2306
  %v2391 = vtanh.pop %v2309
  %v2392 = vtanh.pop %v2314
  %v2393 = vtanh.pop %v2317
  %v2394 = vtanh.pop %v2322
  %v2395 = vtanh.pop %v2325
  %v2396 = vtanh.pop %v2330
  %v2397 = vtanh.pop %v2333
  %v2398 = vtanh.pop %v2338
  %v2399 = vtanh.pop %v2341
  %v2400 = vtanh.pop %v2346
  %v2401 = vtanh.pop %v2349
  %v2402 = vtanh.pop %v2354
  %v2403 = vtanh.pop %v2357
  %v2404 = vtanh.pop %v2362
  %v2405 = vtanh.pop %v2365
  %v2406 = vpack.c.bf16 %v2369, %v2368
  %v2407 = vpack.c.bf16 %v2371, %v2370
  %v2408 = vpack.c.bf16 %v2373, %v2372
  %v2409 = vpack.c.bf16 %v2375, %v2374
  %v2410 = vpack.c.bf16 %v2377, %v2376
  %v2411 = vpack.c.bf16 %v2379, %v2378
  %v2412 = vpack.c.bf16 %v2381, %v2380
  %v2413 = vpack.c.bf16 %v2383, %v2382
  %v2414 = vpack.c.bf16 %v2385, %v2384
  %v2415 = vpack.c.bf16 %v2387, %v2386
  %v2416 = vpack.c.bf16 %v2389, %v2388
  %v2417 = vpack.c.bf16 %v2391, %v2390
  %v2418 = vpack.c.bf16 %v2393, %v2392
  %v2419 = vpack.c.bf16 %v2395, %v2394
  %v2420 = vpack.c.bf16 %v2397, %v2396
  %v2421 = vpack.c.bf16 %v2399, %v2398
  %v2422 = vpack.c.bf16 %v2401, %v2400
  %v2423 = vpack.c.bf16 %v2403, %v2402
  %v2424 = vpack.c.bf16 %v2405, %v2404
  %v2425 = vld [vmem:[%s6] sm:$0xf]
  %v2426 = vld [vmem:[%s6 + $0x4] sm:$0xf]
  %v2427 = vld [vmem:[%s6 + $0x8] sm:$0xf]
  %v2428 = vld [vmem:[%s6 + $0xc] sm:$0xf]
  %v2429 = vld [vmem:[%s6 + $0x10] sm:$0xf]
  %v2430 = vld [vmem:[%s6 + $0x14] sm:$0xf]
  %v2431 = vld [vmem:[%s6 + $0x18] sm:$0xf]
  %v2432 = vld [vmem:[%s6 + $0x1c] sm:$0xf]
  %v2433 = vld [vmem:[%s6 + $0x20] sm:$0xf]
  %v2434 = vld [vmem:[%s6 + $0x24] sm:$0xf]
  %v2435 = vld [vmem:[%s6 + $0x28] sm:$0xf]
  %v2436 = vld [vmem:[%s6 + $0x2c] sm:$0xf]
  %v2437 = vld [vmem:[%s6 + $0x30] sm:$0xf]
  %v2438 = vld [vmem:[%s6 + $0x34] sm:$0xf]
  %v2439 = vld [vmem:[%s6 + $0x38] sm:$0xf]
  %v2440 = vld [vmem:[%s6 + $0x3c] sm:$0xf]
  %v2441 = vld [vmem:[#allocation2 + $0x18] sm:$0xff]
  %v2442 = vld [vmem:[#allocation2 + $0x48] sm:$0xff]
  %v2443 = vld [vmem:[#allocation2 + $0x78] sm:$0xff]
  %v2444 = vld [vmem:[#allocation2 + $0xa8] sm:$0xff]
  %v2445 = vld [vmem:[#allocation2 + $0xd8] sm:$0xff]
  %v2446 = vld [vmem:[#allocation2 + $0x108] sm:$0xff]
  %v2447 = vld [vmem:[#allocation2 + $0x138] sm:$0xff]
  %v2448 = vld [vmem:[#allocation2 + $0x168] sm:$0xff]
  %v2449 = vld [vmem:[#allocation2 + $0x198] sm:$0xff]
  %v2450 = vld [vmem:[#allocation2 + $0x1c8] sm:$0xff]
  %v2451 = vld [vmem:[#allocation2 + $0x1f8] sm:$0xff]
  %v2452 = vld [vmem:[#allocation2 + $0x228] sm:$0xff]
  %v2453 = vld [vmem:[#allocation2 + $0x258] sm:$0xff]
  %v2454 = vld [vmem:[#allocation2 + $0x288] sm:$0xff]
  %v2455 = vld [vmem:[#allocation2 + $0x2b8] sm:$0xff]
  %v2456 = vld [vmem:[#allocation2 + $0x2e8] sm:$0xff]
  %v2457 = vld [vmem:[#allocation2 + $0x318] sm:$0xff]
  %v2458 = vld [vmem:[#allocation2 + $0x348] sm:$0xff]
  %v2459 = vld [vmem:[#allocation2 + $0x378] sm:$0xff]
  %v2460 = vld [vmem:[#allocation2 + $0x3a8] sm:$0xff]
  %v2461 = vld [vmem:[#allocation2 + $0x3d8] sm:$0xff]
  %v2462 = vld [vmem:[#allocation2 + $0x408] sm:$0xff]
  %v2463 = vld [vmem:[#allocation2 + $0x438] sm:$0xff]
  %v2464 = vld [vmem:[#allocation2 + $0x468] sm:$0xff]
  %v2465 = vld [vmem:[#allocation2 + $0x498] sm:$0xff]
  %v2466 = vld [vmem:[#allocation2 + $0x4c8] sm:$0xff]
  %v2467 = vld [vmem:[#allocation2 + $0x4f8] sm:$0xff]
  %v2468 = vld [vmem:[#allocation2 + $0x528] sm:$0xff]
  %v2469 = vld [vmem:[#allocation2 + $0x558] sm:$0xff]
  %v2470 = vld [vmem:[#allocation2 + $0x588] sm:$0xff]
  %v2471 = vld [vmem:[#allocation2 + $0x5b8] sm:$0xff]
  %v2472 = vld [vmem:[#allocation2 + $0x5e8] sm:$0xff]
  %v2473 = vld [vmem:[#allocation2 + $0x618] sm:$0xff]
  %v2474 = vld [vmem:[#allocation2 + $0x648] sm:$0xff]
  %v2475 = vld [vmem:[#allocation2 + $0x678] sm:$0xff]
  %v2476 = vld [vmem:[#allocation2 + $0x6a8] sm:$0xff]
  %v2477 = vld [vmem:[#allocation2 + $0x6d8] sm:$0xff]
  %v2478 = vld [vmem:[#allocation2 + $0x708] sm:$0xff]
  %v2495 = vunpack.c.l.b16 %v2425
  %v2496 = vunpack.c.l.b16 %v2426
  %v2497 = vunpack.c.l.b16 %v2427
  %v2498 = vunpack.c.l.b16 %v2428
  %v2499 = vunpack.c.l.b16 %v2429
  %v2500 = vunpack.c.l.b16 %v2430
  %v2501 = vunpack.c.l.b16 %v2431
  %v2502 = vunpack.c.l.b16 %v2432
  %v2503 = vunpack.c.l.b16 %v2433
  %v2504 = vunpack.c.l.b16 %v2434
  %v2505 = vunpack.c.l.b16 %v2435
  %v2506 = vunpack.c.l.b16 %v2436
  %v2507 = vunpack.c.l.b16 %v2437
  %v2508 = vunpack.c.l.b16 %v2438
  %v2509 = vunpack.c.l.b16 %v2439
  %v2510 = vunpack.c.l.b16 %v2440
  %v2511 = vpack.c.b16 %v2496, %v2495
  %v2512 = vpack.c.b16 %v2498, %v2497
  %v2513 = vpack.c.b16 %v2500, %v2499
  %v2514 = vpack.c.b16 %v2502, %v2501
  %v2515 = vpack.c.b16 %v2504, %v2503
  %v2516 = vpack.c.b16 %v2506, %v2505
  %v2517 = vpack.c.b16 %v2508, %v2507
  %v2518 = vpack.c.b16 %v2510, %v2509
  %2527 = vmatprep.subr.bf16.mxu0 0
  %2528 = vmatpush1.bf16.msra.mxu0 %v2511
  %2529 = vmatprep.subr.bf16.mxu0 0
  %2530 = vmatpush1.bf16.msra.mxu0 %v2512
  %2531 = vmatprep.subr.bf16.mxu0 0
  %2532 = vmatpush1.bf16.msra.mxu0 %v2513
  %2533 = vmatprep.subr.bf16.mxu0 0
  %2534 = vmatpush1.bf16.msra.mxu0 %v2514
  %2535 = vmatprep.subr.bf16.mxu0 0
  %2536 = vmatpush1.bf16.msra.mxu0 %v2515
  %2537 = vmatprep.subr.bf16.mxu0 0
  %2538 = vmatpush1.bf16.msra.mxu0 %v2516
  %2539 = vmatprep.subr.bf16.mxu0 0
  %2540 = vmatpush1.bf16.msra.mxu0 %v2517
  %2541 = vmatprep.subr.bf16.mxu0 0
  %2542 = vmatpush1.bf16.msra.mxu0 %v2518
  %2543 = vmatprep.subr.bf16.mxu0 0
  %2544 = vmatpush1.bf16.msra.mxu0 0
  %2545 = vmatprep.subr.bf16.mxu0 0
  %2546 = vmatpush1.bf16.msra.mxu0 0
  %2547 = vmatprep.subr.bf16.mxu0 0
  %2548 = vmatpush1.bf16.msra.mxu0 0
  %2549 = vmatprep.subr.bf16.mxu0 0
  %2550 = vmatpush1.bf16.msra.mxu0 0
  %2551 = vmatprep.subr.bf16.mxu0 0
  %2552 = vmatpush1.bf16.msra.mxu0 0
  %2553 = vmatprep.subr.bf16.mxu0 0
  %2554 = vmatpush1.bf16.msra.mxu0 0
  %2555 = vmatprep.subr.bf16.mxu0 0
  %2556 = vmatpush1.bf16.msra.mxu0 0
  %2557 = vmatprep.subr.bf16.mxu0 0
  %2558 = vmatpush1.bf16.msra.mxu0 0
  %2559 = vmatprep.mubr.bf16.mxu0 0
  %2560 = vmatmul.mubr.bf16.gmra.mrb[0].mxu0 %v2406
  %v2561 = vpop.f32.mrb[0].mxu0
  %v2562 = vadd.f32 %v2441, %v2561
  %v2563 = vpop.f32.mrb[0].mxu0
  %v2564 = vpop.f32.mrb[0].mxu0
  %v2565 = vadd.f32 %v2442, %v2564
  %v2566 = vpop.f32.mrb[0].mxu0
  %2567 = vmatprep.mubr.bf16.mxu0 0
  %2568 = vmatmul.mubr.bf16.gmra.mrb[0].mxu0 %v2407
  %v2569 = vpop.f32.mrb[0].mxu0
  %v2570 = vadd.f32 %v2443, %v2569
  %v2571 = vpop.f32.mrb[0].mxu0
  %v2572 = vpop.f32.mrb[0].mxu0
  %v2573 = vadd.f32 %v2444, %v2572
  %v2574 = vpop.f32.mrb[0].mxu0
  %2575 = vmatprep.mubr.bf16.mxu0 0
  %2576 = vmatmul.mubr.bf16.gmra.mrb[0].mxu0 %v2408
  %v2577 = vpop.f32.mrb[0].mxu0
  %v2578 = vadd.f32 %v2445, %v2577
  %v2579 = vpop.f32.mrb[0].mxu0
  %v2580 = vpop.f32.mrb[0].mxu0
  %v2581 = vadd.f32 %v2446, %v2580
  %v2582 = vpop.f32.mrb[0].mxu0
  %2583 = vmatprep.mubr.bf16.mxu0 0
  %2584 = vmatmul.mubr.bf16.gmra.mrb[0].mxu0 %v2409
  %v2585 = vpop.f32.mrb[0].mxu0
  %v2586 = vadd.f32 %v2447, %v2585
  %v2587 = vpop.f32.mrb[0].mxu0
  %v2588 = vpop.f32.mrb[0].mxu0
  %v2589 = vadd.f32 %v2448, %v2588
  %v2590 = vpop.f32.mrb[0].mxu0
  %2591 = vmatprep.mubr.bf16.mxu0 0
  %2592 = vmatmul.mubr.bf16.gmra.mrb[0].mxu0 %v2410
  %v2593 = vpop.f32.mrb[0].mxu0
  %v2594 = vadd.f32 %v2449, %v2593
  %v2595 = vpop.f32.mrb[0].mxu0
  %v2596 = vpop.f32.mrb[0].mxu0
  %v2597 = vadd.f32 %v2450, %v2596
  %v2598 = vpop.f32.mrb[0].mxu0
  %2599 = vmatprep.mubr.bf16.mxu0 0
  %2600 = vmatmul.mubr.bf16.gmra.mrb[0].mxu0 %v2411
  %v2601 = vpop.f32.mrb[0].mxu0
  %v2602 = vadd.f32 %v2451, %v2601
  %v2603 = vpop.f32.mrb[0].mxu0
  %v2604 = vpop.f32.mrb[0].mxu0
  %v2605 = vadd.f32 %v2452, %v2604
  %v2606 = vpop.f32.mrb[0].mxu0
  %2607 = vmatprep.mubr.bf16.mxu0 0
  %2608 = vmatmul.mubr.bf16.gmra.mrb[0].mxu0 %v2412
  %v2609 = vpop.f32.mrb[0].mxu0
  %v2610 = vadd.f32 %v2453, %v2609
  %v2611 = vpop.f32.mrb[0].mxu0
  %v2612 = vpop.f32.mrb[0].mxu0
  %v2613 = vadd.f32 %v2454, %v2612
  %v2614 = vpop.f32.mrb[0].mxu0
  %2615 = vmatprep.mubr.bf16.mxu0 0
  %2616 = vmatmul.mubr.bf16.gmra.mrb[0].mxu0 %v2413
  %v2617 = vpop.f32.mrb[0].mxu0
  %v2618 = vadd.f32 %v2455, %v2617
  %v2619 = vpop.f32.mrb[0].mxu0
  %v2620 = vpop.f32.mrb[0].mxu0
  %v2621 = vadd.f32 %v2456, %v2620
  %v2622 = vpop.f32.mrb[0].mxu0
  %2623 = vmatprep.mubr.bf16.mxu0 0
  %2624 = vmatmul.mubr.bf16.gmra.mrb[0].mxu0 %v2414
  %v2625 = vpop.f32.mrb[0].mxu0
  %v2626 = vadd.f32 %v2457, %v2625
  %v2627 = vpop.f32.mrb[0].mxu0
  %v2628 = vpop.f32.mrb[0].mxu0
  %v2629 = vadd.f32 %v2458, %v2628
  %v2630 = vpop.f32.mrb[0].mxu0
  %2631 = vmatprep.mubr.bf16.mxu0 0
  %2632 = vmatmul.mubr.bf16.gmra.mrb[0].mxu0 %v2415
  %v2633 = vpop.f32.mrb[0].mxu0
  %v2634 = vadd.f32 %v2459, %v2633
  %v2635 = vpop.f32.mrb[0].mxu0
  %v2636 = vpop.f32.mrb[0].mxu0
  %v2637 = vadd.f32 %v2460, %v2636
  %v2638 = vpop.f32.mrb[0].mxu0
  %2639 = vmatprep.mubr.bf16.mxu0 0
  %2640 = vmatmul.mubr.bf16.gmra.mrb[0].mxu0 %v2416
  %v2641 = vpop.f32.mrb[0].mxu0
  %v2642 = vadd.f32 %v2461, %v2641
  %v2643 = vpop.f32.mrb[0].mxu0
  %v2644 = vpop.f32.mrb[0].mxu0
  %v2645 = vadd.f32 %v2462, %v2644
  %v2646 = vpop.f32.mrb[0].mxu0
  %2647 = vmatprep.mubr.bf16.mxu0 0
  %2648 = vmatmul.mubr.bf16.gmra.mrb[0].mxu0 %v2417
  %v2649 = vpop.f32.mrb[0].mxu0
  %v2650 = vadd.f32 %v2463, %v2649
  %v2651 = vpop.f32.mrb[0].mxu0
  %v2652 = vpop.f32.mrb[0].mxu0
  %v2653 = vadd.f32 %v2464, %v2652
  %v2654 = vpop.f32.mrb[0].mxu0
  %2655 = vmatprep.mubr.bf16.mxu0 0
  %2656 = vmatmul.mubr.bf16.gmra.mrb[0].mxu0 %v2418
  %v2657 = vpop.f32.mrb[0].mxu0
  %v2658 = vadd.f32 %v2465, %v2657
  %v2659 = vpop.f32.mrb[0].mxu0
  %v2660 = vpop.f32.mrb[0].mxu0
  %v2661 = vadd.f32 %v2466, %v2660
  %v2662 = vpop.f32.mrb[0].mxu0
  %2663 = vmatprep.mubr.bf16.mxu0 0
  %2664 = vmatmul.mubr.bf16.gmra.mrb[0].mxu0 %v2419
  %v2665 = vpop.f32.mrb[0].mxu0
  %v2666 = vadd.f32 %v2467, %v2665
  %v2667 = vpop.f32.mrb[0].mxu0
  %v2668 = vpop.f32.mrb[0].mxu0
  %v2669 = vadd.f32 %v2468, %v2668
  %v2670 = vpop.f32.mrb[0].mxu0
  %2671 = vmatprep.mubr.bf16.mxu0 0
  %2672 = vmatmul.mubr.bf16.gmra.mrb[0].mxu0 %v2420
  %v2673 = vpop.f32.mrb[0].mxu0
  %v2674 = vadd.f32 %v2469, %v2673
  %v2675 = vpop.f32.mrb[0].mxu0
  %v2676 = vpop.f32.mrb[0].mxu0
  %v2677 = vadd.f32 %v2470, %v2676
  %v2678 = vpop.f32.mrb[0].mxu0
  %2679 = vmatprep.mubr.bf16.mxu0 0
  %2680 = vmatmul.mubr.bf16.gmra.mrb[0].mxu0 %v2421
  %v2681 = vpop.f32.mrb[0].mxu0
  %v2682 = vadd.f32 %v2471, %v2681
  %v2683 = vpop.f32.mrb[0].mxu0
  %v2684 = vpop.f32.mrb[0].mxu0
  %v2685 = vadd.f32 %v2472, %v2684
  %v2686 = vpop.f32.mrb[0].mxu0
  %2687 = vmatprep.mubr.bf16.mxu0 0
  %2688 = vmatmul.mubr.bf16.gmra.mrb[0].mxu0 %v2422
  %v2689 = vpop.f32.mrb[0].mxu0
  %v2690 = vadd.f32 %v2473, %v2689
  %v2691 = vpop.f32.mrb[0].mxu0
  %v2692 = vpop.f32.mrb[0].mxu0
  %v2693 = vadd.f32 %v2474, %v2692
  %v2694 = vpop.f32.mrb[0].mxu0
  %2695 = vmatprep.mubr.bf16.mxu0 0
  %2696 = vmatmul.mubr.bf16.gmra.mrb[0].mxu0 %v2423
  %v2697 = vpop.f32.mrb[0].mxu0
  %v2698 = vadd.f32 %v2475, %v2697
  %v2699 = vpop.f32.mrb[0].mxu0
  %v2700 = vpop.f32.mrb[0].mxu0
  %v2701 = vadd.f32 %v2476, %v2700
  %v2702 = vpop.f32.mrb[0].mxu0
  %2703 = vmatprep.mubr.bf16.mxu0 0
  %2704 = vmatmul.mubr.bf16.gmra.mrb[0].mxu0 %v2424
  %v2705 = vpop.f32.mrb[0].mxu0
  %v2706 = vadd.f32 %v2477, %v2705
  %v2707 = vpop.f32.mrb[0].mxu0
  %v2708 = vpop.f32.mrb[0].mxu0
  %v2709 = vadd.f32 %v2478, %v2708
  %v2710 = vpop.f32.mrb[0].mxu0
  %2711 = vdwg.mxu0
  %v2712 = vtanh.pop %v2562
  %v2713 = vtanh.pop %v2565
  %v2714 = vtanh.pop %v2570
  %v2715 = vtanh.pop %v2573
  %v2716 = vtanh.pop %v2578
  %v2717 = vtanh.pop %v2581
  %v2718 = vtanh.pop %v2586
  %v2719 = vtanh.pop %v2589
  %v2720 = vtanh.pop %v2594
  %v2721 = vtanh.pop %v2597
  %v2722 = vtanh.pop %v2602
  %v2723 = vtanh.pop %v2605
  %v2724 = vtanh.pop %v2610
  %v2725 = vtanh.pop %v2613
  %v2726 = vtanh.pop %v2618
  %v2727 = vtanh.pop %v2621
  %v2728 = vtanh.pop %v2626
  %v2729 = vtanh.pop %v2629
  %v2730 = vtanh.pop %v2634
  %v2731 = vtanh.pop %v2637
  %v2732 = vtanh.pop %v2642
  %v2733 = vtanh.pop %v2645
  %v2734 = vtanh.pop %v2650
  %v2735 = vtanh.pop %v2653
  %v2736 = vtanh.pop %v2658
  %v2737 = vtanh.pop %v2661
  %v2738 = vtanh.pop %v2666
  %v2739 = vtanh.pop %v2669
  %v2740 = vtanh.pop %v2674
  %v2741 = vtanh.pop %v2677
  %v2742 = vtanh.pop %v2682
  %v2743 = vtanh.pop %v2685
  %v2744 = vtanh.pop %v2690
  %v2745 = vtanh.pop %v2693
  %v2746 = vtanh.pop %v2698
  %v2747 = vtanh.pop %v2701
  %v2748 = vtanh.pop %v2706
  %v2749 = vtanh.pop %v2709
  %v2750 = vpack.c.bf16 %v2713, %v2712
  %v2751 = vpack.c.bf16 %v2715, %v2714
  %v2752 = vpack.c.bf16 %v2717, %v2716
  %v2753 = vpack.c.bf16 %v2719, %v2718
  %v2754 = vpack.c.bf16 %v2721, %v2720
  %v2755 = vpack.c.bf16 %v2723, %v2722
  %v2756 = vpack.c.bf16 %v2725, %v2724
  %v2757 = vpack.c.bf16 %v2727, %v2726
  %v2758 = vpack.c.bf16 %v2729, %v2728
  %v2759 = vpack.c.bf16 %v2731, %v2730
  %v2760 = vpack.c.bf16 %v2733, %v2732
  %v2761 = vpack.c.bf16 %v2735, %v2734
  %v2762 = vpack.c.bf16 %v2737, %v2736
  %v2763 = vpack.c.bf16 %v2739, %v2738
  %v2764 = vpack.c.bf16 %v2741, %v2740
  %v2765 = vpack.c.bf16 %v2743, %v2742
  %v2766 = vpack.c.bf16 %v2745, %v2744
  %v2767 = vpack.c.bf16 %v2747, %v2746
  %v2768 = vpack.c.bf16 %v2749, %v2748
  %v2769 = vld [vmem:[%s7] sm:$0xf]
  %v2770 = vld [vmem:[%s7 + $0x4] sm:$0xf]
  %v2771 = vld [vmem:[%s7 + $0x8] sm:$0xf]
  %v2772 = vld [vmem:[%s7 + $0xc] sm:$0xf]
  %v2773 = vld [vmem:[%s7 + $0x10] sm:$0xf]
  %v2774 = vld [vmem:[%s7 + $0x14] sm:$0xf]
  %v2775 = vld [vmem:[%s7 + $0x18] sm:$0xf]
  %v2776 = vld [vmem:[%s7 + $0x1c] sm:$0xf]
  %v2777 = vld [vmem:[%s7 + $0x20] sm:$0xf]
  %v2778 = vld [vmem:[%s7 + $0x24] sm:$0xf]
  %v2779 = vld [vmem:[%s7 + $0x28] sm:$0xf]
  %v2780 = vld [vmem:[%s7 + $0x2c] sm:$0xf]
  %v2781 = vld [vmem:[%s7 + $0x30] sm:$0xf]
  %v2782 = vld [vmem:[%s7 + $0x34] sm:$0xf]
  %v2783 = vld [vmem:[%s7 + $0x38] sm:$0xf]
  %v2784 = vld [vmem:[%s7 + $0x3c] sm:$0xf]
  %v2785 = vld [vmem:[#allocation2 + $0x20] sm:$0xff]
  %v2786 = vld [vmem:[#allocation2 + $0x50] sm:$0xff]
  %v2787 = vld [vmem:[#allocation2 + $0x80] sm:$0xff]
  %v2788 = vld [vmem:[#allocation2 + $0xb0] sm:$0xff]
  %v2789 = vld [vmem:[#allocation2 + $0xe0] sm:$0xff]
  %v2790 = vld [vmem:[#allocation2 + $0x110] sm:$0xff]
  %v2791 = vld [vmem:[#allocation2 + $0x140] sm:$0xff]
  %v2792 = vld [vmem:[#allocation2 + $0x170] sm:$0xff]
  %v2793 = vld [vmem:[#allocation2 + $0x1a0] sm:$0xff]
  %v2794 = vld [vmem:[#allocation2 + $0x1d0] sm:$0xff]
  %v2795 = vld [vmem:[#allocation2 + $0x200] sm:$0xff]
  %v2796 = vld [vmem:[#allocation2 + $0x230] sm:$0xff]
  %v2797 = vld [vmem:[#allocation2 + $0x260] sm:$0xff]
  %v2798 = vld [vmem:[#allocation2 + $0x290] sm:$0xff]
  %v2799 = vld [vmem:[#allocation2 + $0x2c0] sm:$0xff]
  %v2800 = vld [vmem:[#allocation2 + $0x2f0] sm:$0xff]
  %v2801 = vld [vmem:[#allocation2 + $0x320] sm:$0xff]
  %v2802 = vld [vmem:[#allocation2 + $0x350] sm:$0xff]
  %v2803 = vld [vmem:[#allocation2 + $0x380] sm:$0xff]
  %v2804 = vld [vmem:[#allocation2 + $0x3b0] sm:$0xff]
  %v2805 = vld [vmem:[#allocation2 + $0x3e0] sm:$0xff]
  %v2806 = vld [vmem:[#allocation2 + $0x410] sm:$0xff]
  %v2807 = vld [vmem:[#allocation2 + $0x440] sm:$0xff]
  %v2808 = vld [vmem:[#allocation2 + $0x470] sm:$0xff]
  %v2809 = vld [vmem:[#allocation2 + $0x4a0] sm:$0xff]
  %v2810 = vld [vmem:[#allocation2 + $0x4d0] sm:$0xff]
  %v2811 = vld [vmem:[#allocation2 + $0x500] sm:$0xff]
  %v2812 = vld [vmem:[#allocation2 + $0x530] sm:$0xff]
  %v2813 = vld [vmem:[#allocation2 + $0x560] sm:$0xff]
  %v2814 = vld [vmem:[#allocation2 + $0x590] sm:$0xff]
  %v2815 = vld [vmem:[#allocation2 + $0x5c0] sm:$0xff]
  %v2816 = vld [vmem:[#allocation2 + $0x5f0] sm:$0xff]
  %v2817 = vld [vmem:[#allocation2 + $0x620] sm:$0xff]
  %v2818 = vld [vmem:[#allocation2 + $0x650] sm:$0xff]
  %v2819 = vld [vmem:[#allocation2 + $0x680] sm:$0xff]
  %v2820 = vld [vmem:[#allocation2 + $0x6b0] sm:$0xff]
  %v2821 = vld [vmem:[#allocation2 + $0x6e0] sm:$0xff]
  %v2822 = vld [vmem:[#allocation2 + $0x710] sm:$0xff]
  %v2839 = vunpack.c.l.b16 %v2769
  %v2840 = vunpack.c.l.b16 %v2770
  %v2841 = vunpack.c.l.b16 %v2771
  %v2842 = vunpack.c.l.b16 %v2772
  %v2843 = vunpack.c.l.b16 %v2773
  %v2844 = vunpack.c.l.b16 %v2774
  %v2845 = vunpack.c.l.b16 %v2775
  %v2846 = vunpack.c.l.b16 %v2776
  %v2847 = vunpack.c.l.b16 %v2777
  %v2848 = vunpack.c.l.b16 %v2778
  %v2849 = vunpack.c.l.b16 %v2779
  %v2850 = vunpack.c.l.b16 %v2780
  %v2851 = vunpack.c.l.b16 %v2781
  %v2852 = vunpack.c.l.b16 %v2782
  %v2853 = vunpack.c.l.b16 %v2783
  %v2854 = vunpack.c.l.b16 %v2784
  %v2855 = vpack.c.b16 %v2840, %v2839
  %v2856 = vpack.c.b16 %v2842, %v2841
  %v2857 = vpack.c.b16 %v2844, %v2843
  %v2858 = vpack.c.b16 %v2846, %v2845
  %v2859 = vpack.c.b16 %v2848, %v2847
  %v2860 = vpack.c.b16 %v2850, %v2849
  %v2861 = vpack.c.b16 %v2852, %v2851
  %v2862 = vpack.c.b16 %v2854, %v2853
  %2871 = vmatprep.subr.bf16.mxu0 0
  %2872 = vmatpush1.bf16.msra.mxu0 %v2855
  %2873 = vmatprep.subr.bf16.mxu0 0
  %2874 = vmatpush1.bf16.msra.mxu0 %v2856
  %2875 = vmatprep.subr.bf16.mxu0 0
  %2876 = vmatpush1.bf16.msra.mxu0 %v2857
  %2877 = vmatprep.subr.bf16.mxu0 0
  %2878 = vmatpush1.bf16.msra.mxu0 %v2858
  %2879 = vmatprep.subr.bf16.mxu0 0
  %2880 = vmatpush1.bf16.msra.mxu0 %v2859
  %2881 = vmatprep.subr.bf16.mxu0 0
  %2882 = vmatpush1.bf16.msra.mxu0 %v2860
  %2883 = vmatprep.subr.bf16.mxu0 0
  %2884 = vmatpush1.bf16.msra.mxu0 %v2861
  %2885 = vmatprep.subr.bf16.mxu0 0
  %2886 = vmatpush1.bf16.msra.mxu0 %v2862
  %2887 = vmatprep.subr.bf16.mxu0 0
  %2888 = vmatpush1.bf16.msra.mxu0 0
  %2889 = vmatprep.subr.bf16.mxu0 0
  %2890 = vmatpush1.bf16.msra.mxu0 0
  %2891 = vmatprep.subr.bf16.mxu0 0
  %2892 = vmatpush1.bf16.msra.mxu0 0
  %2893 = vmatprep.subr.bf16.mxu0 0
  %2894 = vmatpush1.bf16.msra.mxu0 0
  %2895 = vmatprep.subr.bf16.mxu0 0
  %2896 = vmatpush1.bf16.msra.mxu0 0
  %2897 = vmatprep.subr.bf16.mxu0 0
  %2898 = vmatpush1.bf16.msra.mxu0 0
  %2899 = vmatprep.subr.bf16.mxu0 0
  %2900 = vmatpush1.bf16.msra.mxu0 0
  %2901 = vmatprep.subr.bf16.mxu0 0
  %2902 = vmatpush1.bf16.msra.mxu0 0
  %2903 = vmatprep.mubr.bf16.mxu0 0
  %2904 = vmatmul.mubr.bf16.gmra.mrb[0].mxu0 %v2750
  %v2905 = vpop.f32.mrb[0].mxu0
  %v2906 = vadd.f32 %v2785, %v2905
  %v2907 = vpop.f32.mrb[0].mxu0
  %v2908 = vpop.f32.mrb[0].mxu0
  %v2909 = vadd.f32 %v2786, %v2908
  %v2910 = vpop.f32.mrb[0].mxu0
  %2911 = vmatprep.mubr.bf16.mxu0 0
  %2912 = vmatmul.mubr.bf16.gmra.mrb[0].mxu0 %v2751
  %v2913 = vpop.f32.mrb[0].mxu0
  %v2914 = vadd.f32 %v2787, %v2913
  %v2915 = vpop.f32.mrb[0].mxu0
  %v2916 = vpop.f32.mrb[0].mxu0
  %v2917 = vadd.f32 %v2788, %v2916
  %v2918 = vpop.f32.mrb[0].mxu0
  %2919 = vmatprep.mubr.bf16.mxu0 0
  %2920 = vmatmul.mubr.bf16.gmra.mrb[0].mxu0 %v2752
  %v2921 = vpop.f32.mrb[0].mxu0
  %v2922 = vadd.f32 %v2789, %v2921
  %v2923 = vpop.f32.mrb[0].mxu0
  %v2924 = vpop.f32.mrb[0].mxu0
  %v2925 = vadd.f32 %v2790, %v2924
  %v2926 = vpop.f32.mrb[0].mxu0
  %2927 = vmatprep.mubr.bf16.mxu0 0
  %2928 = vmatmul.mubr.bf16.gmra.mrb[0].mxu0 %v2753
  %v2929 = vpop.f32.mrb[0].mxu0
  %v2930 = vadd.f32 %v2791, %v2929
  %v2931 = vpop.f32.mrb[0].mxu0
  %v2932 = vpop.f32.mrb[0].mxu0
  %v2933 = vadd.f32 %v2792, %v2932
  %v2934 = vpop.f32.mrb[0].mxu0
  %2935 = vmatprep.mubr.bf16.mxu0 0
  %2936 = vmatmul.mubr.bf16.gmra.mrb[0].mxu0 %v2754
  %v2937 = vpop.f32.mrb[0].mxu0
  %v2938 = vadd.f32 %v2793, %v2937
  %v2939 = vpop.f32.mrb[0].mxu0
  %v2940 = vpop.f32.mrb[0].mxu0
  %v2941 = vadd.f32 %v2794, %v2940
  %v2942 = vpop.f32.mrb[0].mxu0
  %2943 = vmatprep.mubr.bf16.mxu0 0
  %2944 = vmatmul.mubr.bf16.gmra.mrb[0].mxu0 %v2755
  %v2945 = vpop.f32.mrb[0].mxu0
  %v2946 = vadd.f32 %v2795, %v2945
  %v2947 = vpop.f32.mrb[0].mxu0
  %v2948 = vpop.f32.mrb[0].mxu0
  %v2949 = vadd.f32 %v2796, %v2948
  %v2950 = vpop.f32.mrb[0].mxu0
  %2951 = vmatprep.mubr.bf16.mxu0 0
  %2952 = vmatmul.mubr.bf16.gmra.mrb[0].mxu0 %v2756
  %v2953 = vpop.f32.mrb[0].mxu0
  %v2954 = vadd.f32 %v2797, %v2953
  %v2955 = vpop.f32.mrb[0].mxu0
  %v2956 = vpop.f32.mrb[0].mxu0
  %v2957 = vadd.f32 %v2798, %v2956
  %v2958 = vpop.f32.mrb[0].mxu0
  %2959 = vmatprep.mubr.bf16.mxu0 0
  %2960 = vmatmul.mubr.bf16.gmra.mrb[0].mxu0 %v2757
  %v2961 = vpop.f32.mrb[0].mxu0
  %v2962 = vadd.f32 %v2799, %v2961
  %v2963 = vpop.f32.mrb[0].mxu0
  %v2964 = vpop.f32.mrb[0].mxu0
  %v2965 = vadd.f32 %v2800, %v2964
  %v2966 = vpop.f32.mrb[0].mxu0
  %2967 = vmatprep.mubr.bf16.mxu0 0
  %2968 = vmatmul.mubr.bf16.gmra.mrb[0].mxu0 %v2758
  %v2969 = vpop.f32.mrb[0].mxu0
  %v2970 = vadd.f32 %v2801, %v2969
  %v2971 = vpop.f32.mrb[0].mxu0
  %v2972 = vpop.f32.mrb[0].mxu0
  %v2973 = vadd.f32 %v2802, %v2972
  %v2974 = vpop.f32.mrb[0].mxu0
  %2975 = vmatprep.mubr.bf16.mxu0 0
  %2976 = vmatmul.mubr.bf16.gmra.mrb[0].mxu0 %v2759
  %v2977 = vpop.f32.mrb[0].mxu0
  %v2978 = vadd.f32 %v2803, %v2977
  %v2979 = vpop.f32.mrb[0].mxu0
  %v2980 = vpop.f32.mrb[0].mxu0
  %v2981 = vadd.f32 %v2804, %v2980
  %v2982 = vpop.f32.mrb[0].mxu0
  %2983 = vmatprep.mubr.bf16.mxu0 0
  %2984 = vmatmul.mubr.bf16.gmra.mrb[0].mxu0 %v2760
  %v2985 = vpop.f32.mrb[0].mxu0
  %v2986 = vadd.f32 %v2805, %v2985
  %v2987 = vpop.f32.mrb[0].mxu0
  %v2988 = vpop.f32.mrb[0].mxu0
  %v2989 = vadd.f32 %v2806, %v2988
  %v2990 = vpop.f32.mrb[0].mxu0
  %2991 = vmatprep.mubr.bf16.mxu0 0
  %2992 = vmatmul.mubr.bf16.gmra.mrb[0].mxu0 %v2761
  %v2993 = vpop.f32.mrb[0].mxu0
  %v2994 = vadd.f32 %v2807, %v2993
  %v2995 = vpop.f32.mrb[0].mxu0
  %v2996 = vpop.f32.mrb[0].mxu0
  %v2997 = vadd.f32 %v2808, %v2996
  %v2998 = vpop.f32.mrb[0].mxu0
  %2999 = vmatprep.mubr.bf16.mxu0 0
  %3000 = vmatmul.mubr.bf16.gmra.mrb[0].mxu0 %v2762
  %v3001 = vpop.f32.mrb[0].mxu0
  %v3002 = vadd.f32 %v2809, %v3001
  %v3003 = vpop.f32.mrb[0].mxu0
  %v3004 = vpop.f32.mrb[0].mxu0
  %v3005 = vadd.f32 %v2810, %v3004
  %v3006 = vpop.f32.mrb[0].mxu0
  %3007 = vmatprep.mubr.bf16.mxu0 0
  %3008 = vmatmul.mubr.bf16.gmra.mrb[0].mxu0 %v2763
  %v3009 = vpop.f32.mrb[0].mxu0
  %v3010 = vadd.f32 %v2811, %v3009
  %v3011 = vpop.f32.mrb[0].mxu0
  %v3012 = vpop.f32.mrb[0].mxu0
  %v3013 = vadd.f32 %v2812, %v3012
  %v3014 = vpop.f32.mrb[0].mxu0
  %3015 = vmatprep.mubr.bf16.mxu0 0
  %3016 = vmatmul.mubr.bf16.gmra.mrb[0].mxu0 %v2764
  %v3017 = vpop.f32.mrb[0].mxu0
  %v3018 = vadd.f32 %v2813, %v3017
  %v3019 = vpop.f32.mrb[0].mxu0
  %v3020 = vpop.f32.mrb[0].mxu0
  %v3021 = vadd.f32 %v2814, %v3020
  %v3022 = vpop.f32.mrb[0].mxu0
  %3023 = vmatprep.mubr.bf16.mxu0 0
  %3024 = vmatmul.mubr.bf16.gmra.mrb[0].mxu0 %v2765
  %v3025 = vpop.f32.mrb[0].mxu0
  %v3026 = vadd.f32 %v2815, %v3025
  %v3027 = vpop.f32.mrb[0].mxu0
  %v3028 = vpop.f32.mrb[0].mxu0
  %v3029 = vadd.f32 %v2816, %v3028
  %v3030 = vpop.f32.mrb[0].mxu0
  %3031 = vmatprep.mubr.bf16.mxu0 0
  %3032 = vmatmul.mubr.bf16.gmra.mrb[0].mxu0 %v2766
  %v3033 = vpop.f32.mrb[0].mxu0
  %v3034 = vadd.f32 %v2817, %v3033
  %v3035 = vpop.f32.mrb[0].mxu0
  %v3036 = vpop.f32.mrb[0].mxu0
  %v3037 = vadd.f32 %v2818, %v3036
  %v3038 = vpop.f32.mrb[0].mxu0
  %3039 = vmatprep.mubr.bf16.mxu0 0
  %3040 = vmatmul.mubr.bf16.gmra.mrb[0].mxu0 %v2767
  %v3041 = vpop.f32.mrb[0].mxu0
  %v3042 = vadd.f32 %v2819, %v3041
  %v3043 = vpop.f32.mrb[0].mxu0
  %v3044 = vpop.f32.mrb[0].mxu0
  %v3045 = vadd.f32 %v2820, %v3044
  %v3046 = vpop.f32.mrb[0].mxu0
  %3047 = vmatprep.mubr.bf16.mxu0 0
  %3048 = vmatmul.mubr.bf16.gmra.mrb[0].mxu0 %v2768
  %v3049 = vpop.f32.mrb[0].mxu0
  %v3050 = vadd.f32 %v2821, %v3049
  %v3051 = vpop.f32.mrb[0].mxu0
  %v3052 = vpop.f32.mrb[0].mxu0
  %v3053 = vadd.f32 %v2822, %v3052
  %v3054 = vpop.f32.mrb[0].mxu0
  %3055 = vdwg.mxu0
  %v3056 = vtanh.pop %v2906
  %v3057 = vtanh.pop %v2909
  %v3058 = vtanh.pop %v2914
  %v3059 = vtanh.pop %v2917
  %v3060 = vtanh.pop %v2922
  %v3061 = vtanh.pop %v2925
  %v3062 = vtanh.pop %v2930
  %v3063 = vtanh.pop %v2933
  %v3064 = vtanh.pop %v2938
  %v3065 = vtanh.pop %v2941
  %v3066 = vtanh.pop %v2946
  %v3067 = vtanh.pop %v2949
  %v3068 = vtanh.pop %v2954
  %v3069 = vtanh.pop %v2957
  %v3070 = vtanh.pop %v2962
  %v3071 = vtanh.pop %v2965
  %v3072 = vtanh.pop %v2970
  %v3073 = vtanh.pop %v2973
  %v3074 = vtanh.pop %v2978
  %v3075 = vtanh.pop %v2981
  %v3076 = vtanh.pop %v2986
  %v3077 = vtanh.pop %v2989
  %v3078 = vtanh.pop %v2994
  %v3079 = vtanh.pop %v2997
  %v3080 = vtanh.pop %v3002
  %v3081 = vtanh.pop %v3005
  %v3082 = vtanh.pop %v3010
  %v3083 = vtanh.pop %v3013
  %v3084 = vtanh.pop %v3018
  %v3085 = vtanh.pop %v3021
  %v3086 = vtanh.pop %v3026
  %v3087 = vtanh.pop %v3029
  %v3088 = vtanh.pop %v3034
  %v3089 = vtanh.pop %v3037
  %v3090 = vtanh.pop %v3042
  %v3091 = vtanh.pop %v3045
  %v3092 = vtanh.pop %v3050
  %v3093 = vtanh.pop %v3053
  %v3094 = vpack.c.bf16 %v3057, %v3056
  %v3095 = vpack.c.bf16 %v3059, %v3058
  %v3096 = vpack.c.bf16 %v3061, %v3060
  %v3097 = vpack.c.bf16 %v3063, %v3062
  %v3098 = vpack.c.bf16 %v3065, %v3064
  %v3099 = vpack.c.bf16 %v3067, %v3066
  %v3100 = vpack.c.bf16 %v3069, %v3068
  %v3101 = vpack.c.bf16 %v3071, %v3070
  %v3102 = vpack.c.bf16 %v3073, %v3072
  %v3103 = vpack.c.bf16 %v3075, %v3074
  %v3104 = vpack.c.bf16 %v3077, %v3076
  %v3105 = vpack.c.bf16 %v3079, %v3078
  %v3106 = vpack.c.bf16 %v3081, %v3080
  %v3107 = vpack.c.bf16 %v3083, %v3082
  %v3108 = vpack.c.bf16 %v3085, %v3084
  %v3109 = vpack.c.bf16 %v3087, %v3086
  %v3110 = vpack.c.bf16 %v3089, %v3088
  %v3111 = vpack.c.bf16 %v3091, %v3090
  %v3112 = vpack.c.bf16 %v3093, %v3092
  %v3113 = vld [vmem:[%s8] sm:$0xf]
  %v3114 = vld [vmem:[%s8 + $0x4] sm:$0xf]
  %v3115 = vld [vmem:[%s8 + $0x8] sm:$0xf]
  %v3116 = vld [vmem:[%s8 + $0xc] sm:$0xf]
  %v3117 = vld [vmem:[%s8 + $0x10] sm:$0xf]
  %v3118 = vld [vmem:[%s8 + $0x14] sm:$0xf]
  %v3119 = vld [vmem:[%s8 + $0x18] sm:$0xf]
  %v3120 = vld [vmem:[%s8 + $0x1c] sm:$0xf]
  %v3121 = vld [vmem:[%s8 + $0x20] sm:$0xf]
  %v3122 = vld [vmem:[%s8 + $0x24] sm:$0xf]
  %v3123 = vld [vmem:[%s8 + $0x28] sm:$0xf]
  %v3124 = vld [vmem:[%s8 + $0x2c] sm:$0xf]
  %v3125 = vld [vmem:[%s8 + $0x30] sm:$0xf]
  %v3126 = vld [vmem:[%s8 + $0x34] sm:$0xf]
  %v3127 = vld [vmem:[%s8 + $0x38] sm:$0xf]
  %v3128 = vld [vmem:[%s8 + $0x3c] sm:$0xf]
  %v3129 = vld [vmem:[#allocation2 + $0x28] sm:$0xff]
  %v3130 = vld [vmem:[#allocation2 + $0x58] sm:$0xff]
  %v3131 = vld [vmem:[#allocation2 + $0x88] sm:$0xff]
  %v3132 = vld [vmem:[#allocation2 + $0xb8] sm:$0xff]
  %v3133 = vld [vmem:[#allocation2 + $0xe8] sm:$0xff]
  %v3134 = vld [vmem:[#allocation2 + $0x118] sm:$0xff]
  %v3135 = vld [vmem:[#allocation2 + $0x148] sm:$0xff]
  %v3136 = vld [vmem:[#allocation2 + $0x178] sm:$0xff]
  %v3137 = vld [vmem:[#allocation2 + $0x1a8] sm:$0xff]
  %v3138 = vld [vmem:[#allocation2 + $0x1d8] sm:$0xff]
  %v3139 = vld [vmem:[#allocation2 + $0x208] sm:$0xff]
  %v3140 = vld [vmem:[#allocation2 + $0x238] sm:$0xff]
  %v3141 = vld [vmem:[#allocation2 + $0x268] sm:$0xff]
  %v3142 = vld [vmem:[#allocation2 + $0x298] sm:$0xff]
  %v3143 = vld [vmem:[#allocation2 + $0x2c8] sm:$0xff]
  %v3144 = vld [vmem:[#allocation2 + $0x2f8] sm:$0xff]
  %v3145 = vld [vmem:[#allocation2 + $0x328] sm:$0xff]
  %v3146 = vld [vmem:[#allocation2 + $0x358] sm:$0xff]
  %v3147 = vld [vmem:[#allocation2 + $0x388] sm:$0xff]
  %v3148 = vld [vmem:[#allocation2 + $0x3b8] sm:$0xff]
  %v3149 = vld [vmem:[#allocation2 + $0x3e8] sm:$0xff]
  %v3150 = vld [vmem:[#allocation2 + $0x418] sm:$0xff]
  %v3151 = vld [vmem:[#allocation2 + $0x448] sm:$0xff]
  %v3152 = vld [vmem:[#allocation2 + $0x478] sm:$0xff]
  %v3153 = vld [vmem:[#allocation2 + $0x4a8] sm:$0xff]
  %v3154 = vld [vmem:[#allocation2 + $0x4d8] sm:$0xff]
  %v3155 = vld [vmem:[#allocation2 + $0x508] sm:$0xff]
  %v3156 = vld [vmem:[#allocation2 + $0x538] sm:$0xff]
  %v3157 = vld [vmem:[#allocation2 + $0x568] sm:$0xff]
  %v3158 = vld [vmem:[#allocation2 + $0x598] sm:$0xff]
  %v3159 = vld [vmem:[#allocation2 + $0x5c8] sm:$0xff]
  %v3160 = vld [vmem:[#allocation2 + $0x5f8] sm:$0xff]
  %v3161 = vld [vmem:[#allocation2 + $0x628] sm:$0xff]
  %v3162 = vld [vmem:[#allocation2 + $0x658] sm:$0xff]
  %v3163 = vld [vmem:[#allocation2 + $0x688] sm:$0xff]
  %v3164 = vld [vmem:[#allocation2 + $0x6b8] sm:$0xff]
  %v3165 = vld [vmem:[#allocation2 + $0x6e8] sm:$0xff]
  %v3166 = vld [vmem:[#allocation2 + $0x718] sm:$0xff]
  %v3183 = vunpack.c.l.b16 %v3113
  %v3184 = vunpack.c.l.b16 %v3114
  %v3185 = vunpack.c.l.b16 %v3115
  %v3186 = vunpack.c.l.b16 %v3116
  %v3187 = vunpack.c.l.b16 %v3117
  %v3188 = vunpack.c.l.b16 %v3118
  %v3189 = vunpack.c.l.b16 %v3119
  %v3190 = vunpack.c.l.b16 %v3120
  %v3191 = vunpack.c.l.b16 %v3121
  %v3192 = vunpack.c.l.b16 %v3122
  %v3193 = vunpack.c.l.b16 %v3123
  %v3194 = vunpack.c.l.b16 %v3124
  %v3195 = vunpack.c.l.b16 %v3125
  %v3196 = vunpack.c.l.b16 %v3126
  %v3197 = vunpack.c.l.b16 %v3127
  %v3198 = vunpack.c.l.b16 %v3128
  %v3199 = vpack.c.b16 %v3184, %v3183
  %v3200 = vpack.c.b16 %v3186, %v3185
  %v3201 = vpack.c.b16 %v3188, %v3187
  %v3202 = vpack.c.b16 %v3190, %v3189
  %v3203 = vpack.c.b16 %v3192, %v3191
  %v3204 = vpack.c.b16 %v3194, %v3193
  %v3205 = vpack.c.b16 %v3196, %v3195
  %v3206 = vpack.c.b16 %v3198, %v3197
  %3215 = vmatprep.subr.bf16.mxu0 0
  %3216 = vmatpush1.bf16.msra.mxu0 %v3199
  %3217 = vmatprep.subr.bf16.mxu0 0
  %3218 = vmatpush1.bf16.msra.mxu0 %v3200
  %3219 = vmatprep.subr.bf16.mxu0 0
  %3220 = vmatpush1.bf16.msra.mxu0 %v3201
  %3221 = vmatprep.subr.bf16.mxu0 0
  %3222 = vmatpush1.bf16.msra.mxu0 %v3202
  %3223 = vmatprep.subr.bf16.mxu0 0
  %3224 = vmatpush1.bf16.msra.mxu0 %v3203
  %3225 = vmatprep.subr.bf16.mxu0 0
  %3226 = vmatpush1.bf16.msra.mxu0 %v3204
  %3227 = vmatprep.subr.bf16.mxu0 0
  %3228 = vmatpush1.bf16.msra.mxu0 %v3205
  %3229 = vmatprep.subr.bf16.mxu0 0
  %3230 = vmatpush1.bf16.msra.mxu0 %v3206
  %3231 = vmatprep.subr.bf16.mxu0 0
  %3232 = vmatpush1.bf16.msra.mxu0 0
  %3233 = vmatprep.subr.bf16.mxu0 0
  %3234 = vmatpush1.bf16.msra.mxu0 0
  %3235 = vmatprep.subr.bf16.mxu0 0
  %3236 = vmatpush1.bf16.msra.mxu0 0
  %3237 = vmatprep.subr.bf16.mxu0 0
  %3238 = vmatpush1.bf16.msra.mxu0 0
  %3239 = vmatprep.subr.bf16.mxu0 0
  %3240 = vmatpush1.bf16.msra.mxu0 0
  %3241 = vmatprep.subr.bf16.mxu0 0
  %3242 = vmatpush1.bf16.msra.mxu0 0
  %3243 = vmatprep.subr.bf16.mxu0 0
  %3244 = vmatpush1.bf16.msra.mxu0 0
  %3245 = vmatprep.subr.bf16.mxu0 0
  %3246 = vmatpush1.bf16.msra.mxu0 0
  %3247 = vmatprep.mubr.bf16.mxu0 0
  %3248 = vmatmul.mubr.bf16.gmra.mrb[0].mxu0 %v3094
  %v3249 = vpop.f32.mrb[0].mxu0
  %v3250 = vadd.f32 %v3129, %v3249
  %v3251 = vpop.f32.mrb[0].mxu0
  %v3252 = vpop.f32.mrb[0].mxu0
  %v3253 = vadd.f32 %v3130, %v3252
  %v3254 = vpop.f32.mrb[0].mxu0
  %3255 = vmatprep.mubr.bf16.mxu0 0
  %3256 = vmatmul.mubr.bf16.gmra.mrb[0].mxu0 %v3095
  %v3257 = vpop.f32.mrb[0].mxu0
  %v3258 = vadd.f32 %v3131, %v3257
  %v3259 = vpop.f32.mrb[0].mxu0
  %v3260 = vpop.f32.mrb[0].mxu0
  %v3261 = vadd.f32 %v3132, %v3260
  %v3262 = vpop.f32.mrb[0].mxu0
  %3263 = vmatprep.mubr.bf16.mxu0 0
  %3264 = vmatmul.mubr.bf16.gmra.mrb[0].mxu0 %v3096
  %v3265 = vpop.f32.mrb[0].mxu0
  %v3266 = vadd.f32 %v3133, %v3265
  %v3267 = vpop.f32.mrb[0].mxu0
  %v3268 = vpop.f32.mrb[0].mxu0
  %v3269 = vadd.f32 %v3134, %v3268
  %v3270 = vpop.f32.mrb[0].mxu0
  %3271 = vmatprep.mubr.bf16.mxu0 0
  %3272 = vmatmul.mubr.bf16.gmra.mrb[0].mxu0 %v3097
  %v3273 = vpop.f32.mrb[0].mxu0
  %v3274 = vadd.f32 %v3135, %v3273
  %v3275 = vpop.f32.mrb[0].mxu0
  %v3276 = vpop.f32.mrb[0].mxu0
  %v3277 = vadd.f32 %v3136, %v3276
  %v3278 = vpop.f32.mrb[0].mxu0
  %3279 = vmatprep.mubr.bf16.mxu0 0
  %3280 = vmatmul.mubr.bf16.gmra.mrb[0].mxu0 %v3098
  %v3281 = vpop.f32.mrb[0].mxu0
  %v3282 = vadd.f32 %v3137, %v3281
  %v3283 = vpop.f32.mrb[0].mxu0
  %v3284 = vpop.f32.mrb[0].mxu0
  %v3285 = vadd.f32 %v3138, %v3284
  %v3286 = vpop.f32.mrb[0].mxu0
  %3287 = vmatprep.mubr.bf16.mxu0 0
  %3288 = vmatmul.mubr.bf16.gmra.mrb[0].mxu0 %v3099
  %v3289 = vpop.f32.mrb[0].mxu0
  %v3290 = vadd.f32 %v3139, %v3289
  %v3291 = vpop.f32.mrb[0].mxu0
  %v3292 = vpop.f32.mrb[0].mxu0
  %v3293 = vadd.f32 %v3140, %v3292
  %v3294 = vpop.f32.mrb[0].mxu0
  %3295 = vmatprep.mubr.bf16.mxu0 0
  %3296 = vmatmul.mubr.bf16.gmra.mrb[0].mxu0 %v3100
  %v3297 = vpop.f32.mrb[0].mxu0
  %v3298 = vadd.f32 %v3141, %v3297
  %v3299 = vpop.f32.mrb[0].mxu0
  %v3300 = vpop.f32.mrb[0].mxu0
  %v3301 = vadd.f32 %v3142, %v3300
  %v3302 = vpop.f32.mrb[0].mxu0
  %3303 = vmatprep.mubr.bf16.mxu0 0
  %3304 = vmatmul.mubr.bf16.gmra.mrb[0].mxu0 %v3101
  %v3305 = vpop.f32.mrb[0].mxu0
  %v3306 = vadd.f32 %v3143, %v3305
  %v3307 = vpop.f32.mrb[0].mxu0
  %v3308 = vpop.f32.mrb[0].mxu0
  %v3309 = vadd.f32 %v3144, %v3308
  %v3310 = vpop.f32.mrb[0].mxu0
  %3311 = vmatprep.mubr.bf16.mxu0 0
  %3312 = vmatmul.mubr.bf16.gmra.mrb[0].mxu0 %v3102
  %v3313 = vpop.f32.mrb[0].mxu0
  %v3314 = vadd.f32 %v3145, %v3313
  %v3315 = vpop.f32.mrb[0].mxu0
  %v3316 = vpop.f32.mrb[0].mxu0
  %v3317 = vadd.f32 %v3146, %v3316
  %v3318 = vpop.f32.mrb[0].mxu0
  %3319 = vmatprep.mubr.bf16.mxu0 0
  %3320 = vmatmul.mubr.bf16.gmra.mrb[0].mxu0 %v3103
  %v3321 = vpop.f32.mrb[0].mxu0
  %v3322 = vadd.f32 %v3147, %v3321
  %v3323 = vpop.f32.mrb[0].mxu0
  %v3324 = vpop.f32.mrb[0].mxu0
  %v3325 = vadd.f32 %v3148, %v3324
  %v3326 = vpop.f32.mrb[0].mxu0
  %3327 = vmatprep.mubr.bf16.mxu0 0
  %3328 = vmatmul.mubr.bf16.gmra.mrb[0].mxu0 %v3104
  %v3329 = vpop.f32.mrb[0].mxu0
  %v3330 = vadd.f32 %v3149, %v3329
  %v3331 = vpop.f32.mrb[0].mxu0
  %v3332 = vpop.f32.mrb[0].mxu0
  %v3333 = vadd.f32 %v3150, %v3332
  %v3334 = vpop.f32.mrb[0].mxu0
  %3335 = vmatprep.mubr.bf16.mxu0 0
  %3336 = vmatmul.mubr.bf16.gmra.mrb[0].mxu0 %v3105
  %v3337 = vpop.f32.mrb[0].mxu0
  %v3338 = vadd.f32 %v3151, %v3337
  %v3339 = vpop.f32.mrb[0].mxu0
  %v3340 = vpop.f32.mrb[0].mxu0
  %v3341 = vadd.f32 %v3152, %v3340
  %v3342 = vpop.f32.mrb[0].mxu0
  %3343 = vmatprep.mubr.bf16.mxu0 0
  %3344 = vmatmul.mubr.bf16.gmra.mrb[0].mxu0 %v3106
  %v3345 = vpop.f32.mrb[0].mxu0
  %v3346 = vadd.f32 %v3153, %v3345
  %v3347 = vpop.f32.mrb[0].mxu0
  %v3348 = vpop.f32.mrb[0].mxu0
  %v3349 = vadd.f32 %v3154, %v3348
  %v3350 = vpop.f32.mrb[0].mxu0
  %3351 = vmatprep.mubr.bf16.mxu0 0
  %3352 = vmatmul.mubr.bf16.gmra.mrb[0].mxu0 %v3107
  %v3353 = vpop.f32.mrb[0].mxu0
  %v3354 = vadd.f32 %v3155, %v3353
  %v3355 = vpop.f32.mrb[0].mxu0
  %v3356 = vpop.f32.mrb[0].mxu0
  %v3357 = vadd.f32 %v3156, %v3356
  %v3358 = vpop.f32.mrb[0].mxu0
  %3359 = vmatprep.mubr.bf16.mxu0 0
  %3360 = vmatmul.mubr.bf16.gmra.mrb[0].mxu0 %v3108
  %v3361 = vpop.f32.mrb[0].mxu0
  %v3362 = vadd.f32 %v3157, %v3361
  %v3363 = vpop.f32.mrb[0].mxu0
  %v3364 = vpop.f32.mrb[0].mxu0
  %v3365 = vadd.f32 %v3158, %v3364
  %v3366 = vpop.f32.mrb[0].mxu0
  %3367 = vmatprep.mubr.bf16.mxu0 0
  %3368 = vmatmul.mubr.bf16.gmra.mrb[0].mxu0 %v3109
  %v3369 = vpop.f32.mrb[0].mxu0
  %v3370 = vadd.f32 %v3159, %v3369
  %v3371 = vpop.f32.mrb[0].mxu0
  %v3372 = vpop.f32.mrb[0].mxu0
  %v3373 = vadd.f32 %v3160, %v3372
  %v3374 = vpop.f32.mrb[0].mxu0
  %3375 = vmatprep.mubr.bf16.mxu0 0
  %3376 = vmatmul.mubr.bf16.gmra.mrb[0].mxu0 %v3110
  %v3377 = vpop.f32.mrb[0].mxu0
  %v3378 = vadd.f32 %v3161, %v3377
  %v3379 = vpop.f32.mrb[0].mxu0
  %v3380 = vpop.f32.mrb[0].mxu0
  %v3381 = vadd.f32 %v3162, %v3380
  %v3382 = vpop.f32.mrb[0].mxu0
  %3383 = vmatprep.mubr.bf16.mxu0 0
  %3384 = vmatmul.mubr.bf16.gmra.mrb[0].mxu0 %v3111
  %v3385 = vpop.f32.mrb[0].mxu0
  %v3386 = vadd.f32 %v3163, %v3385
  %v3387 = vpop.f32.mrb[0].mxu0
  %v3388 = vpop.f32.mrb[0].mxu0
  %v3389 = vadd.f32 %v3164, %v3388
  %v3390 = vpop.f32.mrb[0].mxu0
  %3391 = vmatprep.mubr.bf16.mxu0 0
  %3392 = vmatmul.mubr.bf16.gmra.mrb[0].mxu0 %v3112
  %v3393 = vpop.f32.mrb[0].mxu0
  %v3394 = vadd.f32 %v3165, %v3393
  %v3395 = vpop.f32.mrb[0].mxu0
  %v3396 = vpop.f32.mrb[0].mxu0
  %v3397 = vadd.f32 %v3166, %v3396
  %v3398 = vpop.f32.mrb[0].mxu0
  %3399 = vdwg.mxu0
  %v3400 = vmax.f32 %v3250, 0.0
  %v3401 = vmax.f32 %v3253, 0.0
  %v3402 = vmax.f32 %v3258, 0.0
  %v3403 = vmax.f32 %v3261, 0.0
  %v3404 = vmax.f32 %v3266, 0.0
  %v3405 = vmax.f32 %v3269, 0.0
  %v3406 = vmax.f32 %v3274, 0.0
  %v3407 = vmax.f32 %v3277, 0.0
  %v3408 = vmax.f32 %v3282, 0.0
  %v3409 = vmax.f32 %v3285, 0.0
  %v3410 = vmax.f32 %v3290, 0.0
  %v3411 = vmax.f32 %v3293, 0.0
  %v3412 = vmax.f32 %v3298, 0.0
  %v3413 = vmax.f32 %v3301, 0.0
  %v3414 = vmax.f32 %v3306, 0.0
  %v3415 = vmax.f32 %v3309, 0.0
  %v3416 = vmax.f32 %v3314, 0.0
  %v3417 = vmax.f32 %v3317, 0.0
  %v3418 = vmax.f32 %v3322, 0.0
  %v3419 = vmax.f32 %v3325, 0.0
  %v3420 = vmax.f32 %v3330, 0.0
  %v3421 = vmax.f32 %v3333, 0.0
  %v3422 = vmax.f32 %v3338, 0.0
  %v3423 = vmax.f32 %v3341, 0.0
  %v3424 = vmax.f32 %v3346, 0.0
  %v3425 = vmax.f32 %v3349, 0.0
  %v3426 = vmax.f32 %v3354, 0.0
  %v3427 = vmax.f32 %v3357, 0.0
  %v3428 = vmax.f32 %v3362, 0.0
  %v3429 = vmax.f32 %v3365, 0.0
  %v3430 = vmax.f32 %v3370, 0.0
  %v3431 = vmax.f32 %v3373, 0.0
  %v3432 = vmax.f32 %v3378, 0.0
  %v3433 = vmax.f32 %v3381, 0.0
  %v3434 = vmax.f32 %v3386, 0.0
  %v3435 = vmax.f32 %v3389, 0.0
  %v3436 = vmax.f32 %v3394, 0.0
  %v3437 = vmax.f32 %v3397, 0.0
  %v3438 = vsub.f32 0.0, %v3400
  %v3439 = vsub.f32 0.0, %v3401
  %v3440 = vsub.f32 0.0, %v3402
  %v3441 = vsub.f32 0.0, %v3403
  %v3442 = vsub.f32 0.0, %v3404
  %v3443 = vsub.f32 0.0, %v3405
  %v3444 = vsub.f32 0.0, %v3406
  %v3445 = vsub.f32 0.0, %v3407
  %v3446 = vsub.f32 0.0, %v3408
  %v3447 = vsub.f32 0.0, %v3409
  %v3448 = vsub.f32 0.0, %v3410
  %v3449 = vsub.f32 0.0, %v3411
  %v3450 = vsub.f32 0.0, %v3412
  %v3451 = vsub.f32 0.0, %v3413
  %v3452 = vsub.f32 0.0, %v3414
  %v3453 = vsub.f32 0.0, %v3415
  %v3454 = vsub.f32 0.0, %v3416
  %v3455 = vsub.f32 0.0, %v3417
  %v3456 = vsub.f32 0.0, %v3418
  %v3457 = vsub.f32 0.0, %v3419
  %v3458 = vsub.f32 0.0, %v3420
  %v3459 = vsub.f32 0.0, %v3421
  %v3460 = vsub.f32 0.0, %v3422
  %v3461 = vsub.f32 0.0, %v3423
  %v3462 = vsub.f32 0.0, %v3424
  %v3463 = vsub.f32 0.0, %v3425
  %v3464 = vsub.f32 0.0, %v3426
  %v3465 = vsub.f32 0.0, %v3427
  %v3466 = vsub.f32 0.0, %v3428
  %v3467 = vsub.f32 0.0, %v3429
  %v3468 = vsub.f32 0.0, %v3430
  %v3469 = vsub.f32 0.0, %v3431
  %v3470 = vsub.f32 0.0, %v3432
  %v3471 = vsub.f32 0.0, %v3433
  %v3472 = vsub.f32 0.0, %v3434
  %v3473 = vsub.f32 0.0, %v3435
  %v3474 = vsub.f32 0.0, %v3436
  %v3475 = vsub.f32 0.0, %v3437
  %3476 = vst [vmem:[%s9] sm:$0xff] %v3438
  %3477 = vst [vmem:[%s9 + $0x8] sm:$0xff] %v3439
  %3478 = vst [vmem:[%s9 + $0x10] sm:$0xff] %v3440
  %3479 = vst [vmem:[%s9 + $0x18] sm:$0xff] %v3441
  %3480 = vst [vmem:[%s9 + $0x20] sm:$0xff] %v3442
  %3481 = vst [vmem:[%s9 + $0x28] sm:$0xff] %v3443
  %3482 = vst [vmem:[%s9 + $0x30] sm:$0xff] %v3444
  %3483 = vst [vmem:[%s9 + $0x38] sm:$0xff] %v3445
  %3484 = vst [vmem:[%s9 + $0x40] sm:$0xff] %v3446
  %3485 = vst [vmem:[%s9 + $0x48] sm:$0xff] %v3447
  %3486 = vst [vmem:[%s9 + $0x50] sm:$0xff] %v3448
  %3487 = vst [vmem:[%s9 + $0x58] sm:$0xff] %v3449
  %3488 = vst [vmem:[%s9 + $0x60] sm:$0xff] %v3450
  %3489 = vst [vmem:[%s9 + $0x68] sm:$0xff] %v3451
  %3490 = vst [vmem:[%s9 + $0x70] sm:$0xff] %v3452
  %3491 = vst [vmem:[%s9 + $0x78] sm:$0xff] %v3453
  %3492 = vst [vmem:[%s9 + $0x80] sm:$0xff] %v3454
  %3493 = vst [vmem:[%s9 + $0x88] sm:$0xff] %v3455
  %3494 = vst [vmem:[%s9 + $0x90] sm:$0xff] %v3456
  %3495 = vst [vmem:[%s9 + $0x98] sm:$0xff] %v3457
  %3496 = vst [vmem:[%s9 + $0xa0] sm:$0xff] %v3458
  %3497 = vst [vmem:[%s9 + $0xa8] sm:$0xff] %v3459
  %3498 = vst [vmem:[%s9 + $0xb0] sm:$0xff] %v3460
  %3499 = vst [vmem:[%s9 + $0xb8] sm:$0xff] %v3461
  %3500 = vst [vmem:[%s9 + $0xc0] sm:$0xff] %v3462
  %3501 = vst [vmem:[%s9 + $0xc8] sm:$0xff] %v3463
  %3502 = vst [vmem:[%s9 + $0xd0] sm:$0xff] %v3464
  %3503 = vst [vmem:[%s9 + $0xd8] sm:$0xff] %v3465
  %3504 = vst [vmem:[%s9 + $0xe0] sm:$0xff] %v3466
  %3505 = vst [vmem:[%s9 + $0xe8] sm:$0xff] %v3467
  %3506 = vst [vmem:[%s9 + $0xf0] sm:$0xff] %v3468
  %3507 = vst [vmem:[%s9 + $0xf8] sm:$0xff] %v3469
  %3508 = vst [vmem:[%s9 + $0x100] sm:$0xff] %v3470
  %3509 = vst [vmem:[%s9 + $0x108] sm:$0xff] %v3471
  %3510 = vst [vmem:[%s9 + $0x110] sm:$0xff] %v3472
  %3511 = vst [vmem:[%s9 + $0x118] sm:$0xff] %v3473
  %3512 = vst [vmem:[%s9 + $0x120] sm:$0xff] %v3474
  %3513 = vst [vmem:[%s9 + $0x128] sm:$0xff] %v3475
  // Predicated region
  $region38: #{forward.1} parent=0 // pred_check
    _
  $region39: #{forward.1} parent=0 // pred_check_branch
    %3515 = sbr.rel (0) target = $region41
  $region40: #{forward.1} parent=0 // pred_region
    _
  $region41: #{forward.1} parent=0 // pred_fallthru
    _
  // Predicated region
  $region42: #{forward.1} parent=0 // pred_check
    _
  $region43: #{forward.1} parent=0 // pred_check_branch
    %3517 = sbr.rel (0) target = $region45
  $region44: #{forward.1} parent=0 // pred_region
    _
  $region45: #{forward.1} parent=0 // pred_fallthru
    _

</llo_original>
